<compile_context>
chip_gen: v7x
topology: tpu7x:2x2x1
jax: 0.10.0
libtpu: 0.0.40
codegen_flags: <defaults>
</compile_context>

<pallas_src>
import functools

import jax
import jax.numpy as jnp
from jax.experimental import pallas as pl
from jax.experimental.pallas import tpu as pltpu

# ----------------------- small-model configuration -----------------------
B = 2                # batch
T_IN = 32            # raw feature frames T' (frontend pools 4x -> T = 8)
F_IN = 8             # log-mel feature dim
D_MODEL = 128        # conformer model dim (512 in the real model); lane-dense
FF_DIM = 256         # feed-forward dim (4*D in the real model)
NUM_HEADS = 4
NUM_LAYERS = 4       # 12 in the real model
CONV_KERNEL = 7      # depthwise conv kernel (odd, "same" padding)
TARGET_SIZE = 128    # CTC vocab (kept a multiple of 128 -> lane-dense head)
AUX_LOSSES = {"2": 0.5, "4": 1.0}   # aux heads after blocks 2 and 4
RECOG_NUM_LAYER = 4
C1, C2, C3 = 16, 16, 16  # frontend conv channels (F_IN * C = 128, lane dense)
LN_EPS = 1e-5
BN_EPS = 1e-5

# Row layout of the packed per-block (N_VEC, D) parameter array.
_R_FF1_G, _R_FF1_B, _R_FF1_B2 = 0, 1, 2
_R_CV_G, _R_CV_B = 3, 4
_R_PW1_BL, _R_PW1_BR = 5, 6
_R_DW_B, _R_BN_S, _R_BN_SH, _R_PW2_B = 7, 8, 9, 10
_R_MH_G, _R_MH_B, _R_BQ, _R_BK, _R_BV, _R_BO = 11, 12, 13, 14, 15, 16
_R_FF2_G, _R_FF2_B, _R_FF2_B2 = 17, 18, 19
_R_FLN_G, _R_FLN_B = 20, 21
_R_DW_W0 = 22                       # CONV_KERNEL depthwise-tap rows follow
N_VEC = _R_DW_W0 + CONV_KERNEL


# ----------------------- helpers -----------------------

def _rep_spec(shape):
    """Replicated-parameter BlockSpec for grid=(B,) pallas_calls (no prefetch)."""
    nd = len(shape)
    return pl.BlockSpec(tuple(shape), lambda b, _nd=nd: (0,) * _nd)


def _rep_spec_sp(shape):
    """Replicated-parameter BlockSpec when 1 scalar-prefetch ref feeds index_maps."""
    nd = len(shape)
    return pl.BlockSpec(tuple(shape), lambda b, lens_ref, _nd=nd: (0,) * _nd)


def _ln(x, g, b, eps=LN_EPS):
    mean = jnp.mean(x, axis=-1, keepdims=True)
    var = jnp.mean(jnp.square(x - mean), axis=-1, keepdims=True)
    return (x - mean) * jax.lax.rsqrt(var + eps) * g + b


# ----------------------- fused conformer block kernel -----------------------

def _conformer_block_kernel(
        lens_ref,                                   # (B,) int32, SMEM (prefetched)
        x_ref, vec_ref, ffb_ref,
        ff1_w1, ff1_w2, pw1_w, pw2_w, wqkv, wo, ff2_w1, ff2_w2,
        o_ref, *, T, D, H, K):
    bf = jnp.bfloat16
    Dh = D // H
    pad = (K - 1) // 2
    scale = 1.0 / (Dh ** 0.5)

    def row(i):                                     # (1, D) fp32 packed vector row
        return vec_ref[i:i + 1, :]

    x = x_ref[0]                                    # (T, D), resident for the block

    # ---- FF1: LN -> W1 -> SiLU -> W2, 0.5 * residual ----
    y = _ln(x, row(_R_FF1_G), row(_R_FF1_B))
    h = jnp.dot(y.astype(bf), ff1_w1[...], preferred_element_type=jnp.float32)
    h = h + ffb_ref[0:1, :]
    h = h * jax.nn.sigmoid(h)
    y = jnp.dot(h.astype(bf), ff1_w2[...], preferred_element_type=jnp.float32)
    y = y + row(_R_FF1_B2)
    x = 0.5 * y + x

    # ---- Conv module: LN -> PW1 -> GLU -> DWConv -> BN(eval) -> SiLU -> PW2 ----
    y = _ln(x, row(_R_CV_G), row(_R_CV_B))
    yd = jnp.dot(y.astype(bf), pw1_w[...], preferred_element_type=jnp.float32)  # (T, 2D)
    y = (yd[:, :D] + row(_R_PW1_BL)) * jax.nn.sigmoid(yd[:, D:] + row(_R_PW1_BR))
    # Depthwise conv over time: XLU rolls + edge masks, no VMEM scratch round trip.
    # (Padded frames are not masked before the conv, matching ConformerConvolutionV1.)
    t_idx = jax.lax.broadcasted_iota(jnp.int32, (T, 1), 0)
    acc = jnp.zeros((T, D), jnp.float32)
    for k in range(K):                              # static unroll, K = 7
        d = k - pad
        wk = row(_R_DW_W0 + k)
        if d == 0:
            acc = acc + y * wk
        else:
            shifted = pltpu.roll(y, (-d) % T, 0)    # shifted[t] = y[(t + d) mod T]
            valid = jnp.logical_and(t_idx + d >= 0, t_idx + d < T)
            acc = acc + jnp.where(valid, shifted, 0.0) * wk
    acc = acc + row(_R_DW_B)
    yb = acc * row(_R_BN_S) + row(_R_BN_SH)         # folded eval-mode BatchNorm1d
    y = yb * jax.nn.sigmoid(yb)                     # SiLU
    y = jnp.dot(y.astype(bf), pw2_w[...], preferred_element_type=jnp.float32)
    y = y + row(_R_PW2_B)
    x = y + x

    # ---- MHSA: LN -> fused QKV matmul -> per-head softmax attn -> fused Wo ----
    y = _ln(x, row(_R_MH_G), row(_R_MH_B))
    qkv = jnp.dot(y.astype(bf), wqkv[...], preferred_element_type=jnp.float32)  # (T, 3D)
    q_all = qkv[:, :D] + row(_R_BQ)
    k_all = qkv[:, D:2 * D] + row(_R_BK)
    v_all = qkv[:, 2 * D:] + row(_R_BV)
    # key padding bias built in-kernel from the prefetched sequence length
    keyp = jax.lax.broadcasted_iota(jnp.int32, (1, T), 1)
    key_bias = jnp.where(keyp < lens_ref[pl.program_id(0)], 0.0, -1e30
                         ).astype(jnp.float32)
    att = jnp.zeros((T, D), jnp.float32) + row(_R_BO)
    # TODO(synk): production T/H -> flash-style online softmax over key tiles and a
    # fori_loop / head-batched dot_general; at T=8, H=4 the static unroll is cheapest.
    for hi in range(H):
        lo = hi * Dh
        qh = (q_all[:, lo:lo + Dh] * scale).astype(bf)
        kh = k_all[:, lo:lo + Dh].astype(bf)
        vh = v_all[:, lo:lo + Dh].astype(bf)
        s = jax.lax.dot_general(qh, kh, (((1,), (1,)), ((), ())),
                                preferred_element_type=jnp.float32)
        s = s + key_bias                            # mask in fp32, after the MXU
        m = jnp.max(s, axis=-1, keepdims=True)
        p = jnp.exp(s - m)
        p = p * pl.reciprocal(jnp.sum(p, axis=-1, keepdims=True), approx=True)
        ctx = jnp.dot(p.astype(bf), vh, preferred_element_type=jnp.float32)
        att = att + jnp.dot(ctx.astype(bf), wo[lo:lo + Dh, :],
                            preferred_element_type=jnp.float32)
    x = att + x

    # ---- FF2 ----
    y = _ln(x, row(_R_FF2_G), row(_R_FF2_B))
    h = jnp.dot(y.astype(bf), ff2_w1[...], preferred_element_type=jnp.float32)
    h = h + ffb_ref[1:2, :]
    h = h * jax.nn.sigmoid(h)
    y = jnp.dot(h.astype(bf), ff2_w2[...], preferred_element_type=jnp.float32)
    y = y + row(_R_FF2_B2)
    x = 0.5 * y + x

    # ---- final LayerNorm ----
    o_ref[0] = _ln(x, row(_R_FLN_G), row(_R_FLN_B))


def prep_block_params(bp):
    """Pack torch-style block params into the fused-kernel layout (bf16 weights,
    one packed fp32 vector array, folded eval BatchNorm)."""
    c, m = bp["conv"], bp["mhsa"]
    bn_s = c["bn_g"] / jnp.sqrt(c["bn_var"] + BN_EPS)
    bn_sh = c["bn_b"] - c["bn_mean"] * bn_s
    vec = jnp.concatenate([
        bp["ff1"]["ln_g"], bp["ff1"]["ln_b"], bp["ff1"]["b2"],
        c["ln_g"], c["ln_b"],
        c["pw1_b"][:, :D_MODEL], c["pw1_b"][:, D_MODEL:],
        c["dw_b"], bn_s, bn_sh, c["pw2_b"],
        m["ln_g"], m["ln_b"], m["bq"], m["bk"], m["bv"], m["bo"],
        bp["ff2"]["ln_g"], bp["ff2"]["ln_b"], bp["ff2"]["b2"],
        bp["final_ln"]["g"], bp["final_ln"]["b"],
        c["dw_w"].reshape(CONV_KERNEL, D_MODEL),
    ], axis=0).astype(jnp.float32)                               # (N_VEC, D)
    ffb = jnp.concatenate([bp["ff1"]["b1"], bp["ff2"]["b1"]],
                          axis=0).astype(jnp.float32)            # (2, FF_DIM)
    bf = jnp.bfloat16
    mats = [bp["ff1"]["w1"], bp["ff1"]["w2"], c["pw1_w"], c["pw2_w"],
            jnp.concatenate([m["wq"], m["wk"], m["wv"]], axis=1), m["wo"],
            bp["ff2"]["w1"], bp["ff2"]["w2"]]
    return [vec, ffb] + [w.astype(bf) for w in mats]


def conformer_block(x, lens, block_args):
    Bv, T, D = x.shape
    in_specs = ([pl.BlockSpec((1, T, D), lambda b, lens_ref: (b, 0, 0))]
                + [_rep_spec_sp(a.shape) for a in block_args])
    out_spec = pl.BlockSpec((1, T, D), lambda b, lens_ref: (b, 0, 0))
    param_bytes = sum(int(a.size) * a.dtype.itemsize for a in block_args)
    cost = pl.CostEstimate(
        flops=int(Bv * (8 * T * D * FF_DIM + 14 * T * D * D + 4 * T * T * D)),
        transcendentals=int(Bv * T * (2 * FF_DIM + 3 * D + NUM_HEADS * T)),
        bytes_accessed=int(2 * Bv * T * D * 4 + param_bytes),
    )
    return pl.pallas_call(
        functools.partial(_conformer_block_kernel,
                          T=T, D=D, H=NUM_HEADS, K=CONV_KERNEL),
        out_shape=jax.ShapeDtypeStruct((Bv, T, D), jnp.float32),
        grid_spec=pltpu.PrefetchScalarGridSpec(
            num_scalar_prefetch=1, grid=(Bv,),
            in_specs=in_specs, out_specs=out_spec),
        compiler_params=pltpu.CompilerParams(
            dimension_semantics=("parallel",),
            # Toy shapes need <2 MiB; for production tiles raise toward ~100 MiB on
            # v5e/v6e and keep under ~60 MiB on v7x (TODO(synk): also single-buffer
            # the replicated weight specs with pipeline_mode=pl.Buffered(1) there).
            vmem_limit_bytes=32 * 1024 * 1024),
        cost_estimate=cost,
    )(lens, x, *block_args)


# ----------------------- frontend (VGG-style) kernels -----------------------
# Activations use a flattened [B, T, F*C] layout with column index f*C + c.
# The kw (frequency) tap shift is folded into the weight (off-diagonal kron
# blocks), so each 3x3 conv is 3 kh-shifted MXU matmuls and needs no freq pad.

def _conv3x3_kernel(x_ref, w_ref, b_ref, o_ref, *, T, FCout):
    acc = jnp.zeros((T, FCout), jnp.float32)
    for kh in range(3):
        xs = x_ref[0, kh:kh + T, :].astype(jnp.bfloat16)
        acc = acc + jnp.dot(xs, w_ref[kh], preferred_element_type=jnp.float32)
    o_ref[0] = jnp.maximum(acc + b_ref[...], 0.0)


def _conv3x3_linear_kernel(x_ref, w_ref, b_ref, lw_ref, lb_ref, o_ref, *, T, FCout):
    acc = jnp.zeros((T, FCout), jnp.float32)
    for kh in range(3):
        xs = x_ref[0, kh:kh + T, :].astype(jnp.bfloat16)
        acc = acc + jnp.dot(xs, w_ref[kh], preferred_element_type=jnp.float32)
    acc = jnp.maximum(acc + b_ref[...], 0.0)
    o_ref[0] = (jnp.dot(acc.astype(jnp.bfloat16), lw_ref[...],
                        preferred_element_type=jnp.float32) + lb_ref[...])


def _folded_conv_weight(w, Fw):
    # (3, 3, Cin, Cout) -> (3, Fw*Cin, Fw*Cout), frequency shift folded in.
    KH, KW, _, _ = w.shape
    mats = []
    for kh in range(KH):
        acc = jnp.zeros((Fw * w.shape[2], Fw * w.shape[3]), jnp.float32)
        for kw in range(KW):
            sel = jnp.eye(Fw, k=1 - kw, dtype=jnp.float32)
            acc = acc + jnp.kron(sel, w[kh, kw])
        mats.append(acc)
    # TODO(synk): at realistic F (~80) use dense per-tap (Cin, Cout) matmuls on a
    # (T*F, Cin) view instead of these (F*Cin, F*Cout) mostly-zero weights.
    return jnp.stack(mats).astype(jnp.bfloat16)


def conv2d_3x3_relu(x_flat, w, b, Fw):
    Bv, T, _ = x_flat.shape
    Cin, Cout = w.shape[2], w.shape[3]
    xp = jnp.pad(x_flat, ((0, 0), (1, 1), (0, 0)))          # time pad only
    wf = _folded_conv_weight(w, Fw)
    bt = jnp.tile(b, (1, Fw)).astype(jnp.float32)
    return pl.pallas_call(
        functools.partial(_conv3x3_kernel, T=T, FCout=Fw * Cout),
        out_shape=jax.ShapeDtypeStruct((Bv, T, Fw * Cout), jnp.float32),
        grid=(Bv,),
        in_specs=[pl.BlockSpec((1, T + 2, Fw * Cin), lambda bi: (bi, 0, 0)),
                  _rep_spec(wf.shape), _rep_spec(bt.shape)],
        out_specs=pl.BlockSpec((1, T, Fw * Cout), lambda bi: (bi, 0, 0)),
        compiler_params=pltpu.CompilerParams(dimension_semantics=("parallel",)),
    )(xp, wf, bt)


def conv2d_3x3_relu_linear(x_flat, w, b, lw, lb, Fw):
    Bv, T, _ = x_flat.shape
    Cin, Cout = w.shape[2], w.shape[3]
    D = lw.shape[1]
    xp = jnp.pad(x_flat, ((0, 0), (1, 1), (0, 0)))
    wf = _folded_conv_weight(w, Fw)
    bt = jnp.tile(b, (1, Fw)).astype(jnp.float32)
    lwb = lw.astype(jnp.bfloat16)
    return pl.pallas_call(
        functools.partial(_conv3x3_linear_kernel, T=T, FCout=Fw * Cout),
        out_shape=jax.ShapeDtypeStruct((Bv, T, D), jnp.float32),
        grid=(Bv,),
        in_specs=[pl.BlockSpec((1, T + 2, Fw * Cin), lambda bi: (bi, 0, 0)),
                  _rep_spec(wf.shape), _rep_spec(bt.shape),
                  _rep_spec(lwb.shape), _rep_spec(lb.shape)],
        out_specs=pl.BlockSpec((1, T, D), lambda bi: (bi, 0, 0)),
        compiler_params=pltpu.CompilerParams(dimension_semantics=("parallel",)),
    )(xp, wf, bt, lwb, lb)


def max_pool_time2(x_flat):
    Bv, T, N = x_flat.shape
    T2 = (T // 2) * 2
    return jnp.max(x_flat[:, :T2].reshape(Bv, T // 2, 2, N), axis=2)


def frontend(x_btf, lens, p):
    # TODO(synk): exact frontend config isn't in the given source; a VGG4LayerAct-style
    # frontend (4x conv3x3+ReLU, 2x time max-pool, linear to d_model) is assumed.
    Fw = x_btf.shape[2]
    x = x_btf                                                   # Cin = 1, layout (f, c)
    x = conv2d_3x3_relu(x, p["conv1_w"], p["conv1_b"], Fw)
    x = max_pool_time2(x)
    lens = jnp.minimum((lens + 1) // 2, x.shape[1])
    x = conv2d_3x3_relu(x, p["conv2_w"], p["conv2_b"], Fw)
    x = conv2d_3x3_relu(x, p["conv3_w"], p["conv3_b"], Fw)
    x = max_pool_time2(x)
    lens = jnp.minimum((lens + 1) // 2, x.shape[1])
    # TODO(synk): fuse the stride-2 time pools into the preceding conv kernels
    # (even/odd strided ref loads) to remove the XLA pad/pool HBM round trips.
    x = conv2d_3x3_relu_linear(x, p["conv4_w"], p["conv4_b"],
                               p["lin_w"], p["lin_b"], Fw)      # fused conv4 + linear
    return x, lens


# ----------------------- fused final linear + log_softmax -----------------------

def _head_kernel(x_ref, w_ref, b_ref, o_ref):
    logits = (jnp.dot(x_ref[0].astype(jnp.bfloat16), w_ref[...],
                      preferred_element_type=jnp.float32) + b_ref[...])
    m = jnp.max(logits, axis=-1, keepdims=True)
    lse = jnp.log(jnp.sum(jnp.exp(logits - m), axis=-1, keepdims=True)) + m
    o_ref[0] = logits - lse


def final_head(x, w, b):
    Bv, T, D = x.shape
    V = w.shape[1]
    wb = w.astype(jnp.bfloat16)
    return pl.pallas_call(
        _head_kernel,
        out_shape=jax.ShapeDtypeStruct((Bv, T, V), jnp.float32),
        grid=(Bv,),
        in_specs=[pl.BlockSpec((1, T, D), lambda bi: (bi, 0, 0)),
                  _rep_spec(wb.shape), _rep_spec(b.shape)],
        out_specs=pl.BlockSpec((1, T, V), lambda bi: (bi, 0, 0)),
        compiler_params=pltpu.CompilerParams(dimension_semantics=("parallel",)),
    )(x, wb, b)


# ----------------------- full model forward -----------------------

def conformer_ctc_forward(params, audio_features, audio_features_len,
                          training=False):
    # SpecAugment is identity in eval mode.
    # TODO(synk): training-time SpecaugmentByLength random time/freq masking not implemented.
    lens = audio_features_len.astype(jnp.int32)
    x, lens = frontend(audio_features, lens, params["frontend"])
    # Padded query rows still attend to valid keys and the conv module sees padded
    # frames unmasked — matching the torch reference (key_padding_mask only).
    loss_layer_indices = [int(i) - 1 for i in AUX_LOSSES.keys()]
    outputs = []
    for i, bp in enumerate(params["blocks"]):
        x = conformer_block(x, lens, prep_block_params(bp))
        if i in loss_layer_indices:
            outputs.append(x)

    log_probs_list = [final_head(outputs[i], lp["w"], lp["b"])
                      for i, lp in enumerate(params["final_linears"])]

    if training:
        seq_mask = jnp.arange(x.shape[1])[None, :] < lens[:, None]
        return log_probs_list, seq_mask
    loss_layers = [int(i) for i in AUX_LOSSES.keys()]
    output_index = loss_layers.index(RECOG_NUM_LAYER)
    return log_probs_list[output_index], audio_features_len


# ----------------------- deterministic parameter init -----------------------

def init_params(key):
    kit = iter(jax.random.split(key, 256))

    def w(*shape, scale=0.02):
        return (scale * jax.random.normal(next(kit), shape)).astype(jnp.float32)

    zeros = lambda *s: jnp.zeros(s, jnp.float32)
    ones = lambda *s: jnp.ones(s, jnp.float32)

    frontend_p = dict(
        conv1_w=w(3, 3, 1, C1), conv1_b=zeros(1, C1),
        conv2_w=w(3, 3, C1, C2), conv2_b=zeros(1, C2),
        conv3_w=w(3, 3, C2, C2), conv3_b=zeros(1, C2),
        conv4_w=w(3, 3, C2, C3), conv4_b=zeros(1, C3),
        # NOTE: rows ordered (f, c); a torch checkpoint (flattening [B,T,C,F] as
        # (c, f)) would need a one-time row permutation of lin_w.
        lin_w=w(F_IN * C3, D_MODEL), lin_b=zeros(1, D_MODEL),
    )

    def ff_params():
        return dict(ln_g=ones(1, D_MODEL), ln_b=zeros(1, D_MODEL),
                    w1=w(D_MODEL, FF_DIM), b1=zeros(1, FF_DIM),
                    w2=w(FF_DIM, D_MODEL), b2=zeros(1, D_MODEL))

    def block():
        return dict(
            ff1=ff_params(),
            conv=dict(ln_g=ones(1, D_MODEL), ln_b=zeros(1, D_MODEL),
                      pw1_w=w(D_MODEL, 2 * D_MODEL), pw1_b=zeros(1, 2 * D_MODEL),
                      dw_w=w(CONV_KERNEL, 1, D_MODEL), dw_b=zeros(1, D_MODEL),
                      bn_g=ones(1, D_MODEL), bn_b=zeros(1, D_MODEL),
                      bn_mean=zeros(1, D_MODEL), bn_var=ones(1, D_MODEL),
                      pw2_w=w(D_MODEL, D_MODEL), pw2_b=zeros(1, D_MODEL)),
            mhsa=dict(ln_g=ones(1, D_MODEL), ln_b=zeros(1, D_MODEL),
                      wq=w(D_MODEL, D_MODEL), bq=zeros(1, D_MODEL),
                      wk=w(D_MODEL, D_MODEL), bk=zeros(1, D_MODEL),
                      wv=w(D_MODEL, D_MODEL), bv=zeros(1, D_MODEL),
                      wo=w(D_MODEL, D_MODEL), bo=zeros(1, D_MODEL)),
            ff2=ff_params(),
            final_ln=dict(g=ones(1, D_MODEL), b=zeros(1, D_MODEL)),
        )

    return dict(
        frontend=frontend_p,
        blocks=[block() for _ in range(NUM_LAYERS)],
        final_linears=[dict(w=w(D_MODEL, TARGET_SIZE), b=zeros(1, TARGET_SIZE))
                       for _ in range(len(AUX_LOSSES))],
    )


# ----------------------- main -----------------------

if __name__ == "__main__":
    root = jax.random.PRNGKey(0)
    pkey, dkey = jax.random.split(root)
    params = init_params(pkey)

    audio_features = jax.random.normal(dkey, (B, T_IN, F_IN), jnp.float32)
    audio_features_len = jnp.array([32, 24], dtype=jnp.int32)

    @jax.jit
    def fwd(p, feats, lens):
        return conformer_ctc_forward(p, feats, lens, training=False)

    log_probs, out_len = fwd(params, audio_features, audio_features_len)
    jax.block_until_ready(log_probs)

    assert log_probs.shape == (B, T_IN // 4, TARGET_SIZE), log_probs.shape
    assert out_len.shape == (B,)
    # log_softmax sanity: probabilities sum to 1 per frame (normalized in fp32)
    assert jnp.allclose(jnp.sum(jnp.exp(log_probs), axis=-1), 1.0, atol=2e-3)
    assert bool(jnp.all(jnp.isfinite(log_probs)))

    print("KERNEL_OK")
</pallas_src>

<mosaic_0001>
module attributes {stable_mosaic.version = 11 : i64} {
  func.func @_conv3x3_kernel(%arg0: i32, %arg1: memref<1x34x8xf32, #tpu.memory_space<vmem>>, %arg2: memref<3x8x128xbf16, #tpu.memory_space<vmem>>, %arg3: memref<1x128xf32, #tpu.memory_space<vmem>>, %arg4: memref<1x32x128xf32, #tpu.memory_space<vmem>>) attributes {dimension_semantics = [#tpu.dimension_semantics<parallel>], iteration_bounds = array<i64: 2>, scalar_prefetch = 0 : i64, scratch_operands = 0 : i64, tpu.core_type = #tpu.core_type<tc>, window_params = [{transform_indices = @transform_0, window_bounds = array<i64: 1, 34, 8>}, {pipeline_mode = #tpu.pipeline_mode<synchronous>, transform_indices = @transform_1, window_bounds = array<i64: 3, 8, 128>}, {pipeline_mode = #tpu.pipeline_mode<synchronous>, transform_indices = @transform_2, window_bounds = array<i64: 1, 128>}, {transform_indices = @transform_3, window_bounds = array<i64: 1, 32, 128>}]} {
    %cst = arith.constant 0.000000e+00 : f32
    %0 = vector.broadcast %cst : f32 to vector<32x128xf32>
    %c0 = arith.constant 0 : index
    %c0_0 = arith.constant 0 : index
    %c0_1 = arith.constant 0 : index
    %1 = vector.load %arg1[%c0, %c0_0, %c0_1] : memref<1x34x8xf32, #tpu.memory_space<vmem>>, vector<1x32x8xf32>
    %2 = vector.shape_cast %1 : vector<1x32x8xf32> to vector<32x8xf32>
    %3 = arith.truncf %2 : vector<32x8xf32> to vector<32x8xbf16>
    %c0_2 = arith.constant 0 : index
    %c0_3 = arith.constant 0 : index
    %c0_4 = arith.constant 0 : index
    %4 = vector.load %arg2[%c0_2, %c0_3, %c0_4] : memref<3x8x128xbf16, #tpu.memory_space<vmem>>, vector<1x8x128xbf16>
    %5 = vector.shape_cast %4 : vector<1x8x128xbf16> to vector<8x128xbf16>
    %cst_5 = arith.constant dense<0.000000e+00> : vector<32x128xf32>
    %6 = tpu.matmul %3, %5, %cst_5 {dimension_numbers = #tpu.dot_dimension_numbers<[1], [0], [0], [1], [0, 0, 1, 1], [], []>} : vector<32x8xbf16>, vector<8x128xbf16>, vector<32x128xf32> -> vector<32x128xf32>
    %7 = arith.addf %0, %6 : vector<32x128xf32>
    %c0_6 = arith.constant 0 : index
    %c1 = arith.constant 1 : index
    %c0_7 = arith.constant 0 : index
    %8 = vector.load %arg1[%c0_6, %c1, %c0_7] : memref<1x34x8xf32, #tpu.memory_space<vmem>>, vector<1x32x8xf32>
    %9 = vector.shape_cast %8 : vector<1x32x8xf32> to vector<32x8xf32>
    %10 = arith.truncf %9 : vector<32x8xf32> to vector<32x8xbf16>
    %c1_8 = arith.constant 1 : index
    %c0_9 = arith.constant 0 : index
    %c0_10 = arith.constant 0 : index
    %11 = vector.load %arg2[%c1_8, %c0_9, %c0_10] : memref<3x8x128xbf16, #tpu.memory_space<vmem>>, vector<1x8x128xbf16>
    %12 = vector.shape_cast %11 : vector<1x8x128xbf16> to vector<8x128xbf16>
    %cst_11 = arith.constant dense<0.000000e+00> : vector<32x128xf32>
    %13 = tpu.matmul %10, %12, %cst_11 {dimension_numbers = #tpu.dot_dimension_numbers<[1], [0], [0], [1], [0, 0, 1, 1], [], []>} : vector<32x8xbf16>, vector<8x128xbf16>, vector<32x128xf32> -> vector<32x128xf32>
    %14 = arith.addf %7, %13 : vector<32x128xf32>
    %c0_12 = arith.constant 0 : index
    %c2 = arith.constant 2 : index
    %c0_13 = arith.constant 0 : index
    %15 = vector.load %arg1[%c0_12, %c2, %c0_13] : memref<1x34x8xf32, #tpu.memory_space<vmem>>, vector<1x32x8xf32>
    %16 = vector.shape_cast %15 : vector<1x32x8xf32> to vector<32x8xf32>
    %17 = arith.truncf %16 : vector<32x8xf32> to vector<32x8xbf16>
    %c2_14 = arith.constant 2 : index
    %c0_15 = arith.constant 0 : index
    %c0_16 = arith.constant 0 : index
    %18 = vector.load %arg2[%c2_14, %c0_15, %c0_16] : memref<3x8x128xbf16, #tpu.memory_space<vmem>>, vector<1x8x128xbf16>
    %19 = vector.shape_cast %18 : vector<1x8x128xbf16> to vector<8x128xbf16>
    %cst_17 = arith.constant dense<0.000000e+00> : vector<32x128xf32>
    %20 = tpu.matmul %17, %19, %cst_17 {dimension_numbers = #tpu.dot_dimension_numbers<[1], [0], [0], [1], [0, 0, 1, 1], [], []>} : vector<32x8xbf16>, vector<8x128xbf16>, vector<32x128xf32> -> vector<32x128xf32>
    %21 = arith.addf %14, %20 : vector<32x128xf32>
    %c0_18 = arith.constant 0 : index
    %c0_19 = arith.constant 0 : index
    %22 = vector.load %arg3[%c0_18, %c0_19] : memref<1x128xf32, #tpu.memory_space<vmem>>, vector<1x128xf32>
    %23 = vector.broadcast %22 : vector<1x128xf32> to vector<32x128xf32>
    %24 = arith.addf %21, %23 : vector<32x128xf32>
    %cst_20 = arith.constant 0.000000e+00 : f32
    %25 = vector.broadcast %cst_20 : f32 to vector<32x128xf32>
    %26 = arith.maximumf %24, %25 : vector<32x128xf32>
    %c0_21 = arith.constant 0 : index
    %c0_22 = arith.constant 0 : index
    %c0_23 = arith.constant 0 : index
    %27 = vector.load %arg4[%c0_21, %c0_22, %c0_23] : memref<1x32x128xf32, #tpu.memory_space<vmem>>, vector<1x32x128xf32>
    %28 = vector.shape_cast %27 : vector<1x32x128xf32> to vector<32x128xf32>
    %29 = vector.shape_cast %26 : vector<32x128xf32> to vector<1x32x128xf32>
    tpu.vector_store %arg4[%c0_21, %c0_22, %c0_23], %29 {strides = array<i32>} : memref<1x32x128xf32, #tpu.memory_space<vmem>>, vector<1x32x128xf32>,
    return
  }
  func.func @transform_0(%arg0: i32) -> (i32, i32, i32) {
    %c0_i32 = arith.constant 0 : i32
    %c0_i32_0 = arith.constant 0 : i32
    %c0_i32_1 = arith.constant 0 : i32
    return %arg0, %c0_i32, %c0_i32_0 : i32, i32, i32
  }
  func.func @transform_1(%arg0: i32) -> (i32, i32, i32) {
    %c0_i32 = arith.constant 0 : i32
    %c0_i32_0 = arith.constant 0 : i32
    %c0_i32_1 = arith.constant 0 : i32
    %c0_i32_2 = arith.constant 0 : i32
    return %c0_i32, %c0_i32_0, %c0_i32_1 : i32, i32, i32
  }
  func.func @transform_2(%arg0: i32) -> (i32, i32) {
    %c0_i32 = arith.constant 0 : i32
    %c0_i32_0 = arith.constant 0 : i32
    %c0_i32_1 = arith.constant 0 : i32
    return %c0_i32, %c0_i32_0 : i32, i32
  }
  func.func @transform_3(%arg0: i32) -> (i32, i32, i32) {
    %c0_i32 = arith.constant 0 : i32
    %c0_i32_0 = arith.constant 0 : i32
    %c0_i32_1 = arith.constant 0 : i32
    return %arg0, %c0_i32, %c0_i32_0 : i32, i32, i32
  }
}

module attributes {stable_mosaic.version = 11 : i64} {
  func.func @_conv3x3_kernel(%arg0: i32, %arg1: memref<1x18x128xf32, #tpu.memory_space<vmem>>, %arg2: memref<3x128x128xbf16, #tpu.memory_space<vmem>>, %arg3: memref<1x128xf32, #tpu.memory_space<vmem>>, %arg4: memref<1x16x128xf32, #tpu.memory_space<vmem>>) attributes {dimension_semantics = [#tpu.dimension_semantics<parallel>], iteration_bounds = array<i64: 2>, scalar_prefetch = 0 : i64, scratch_operands = 0 : i64, tpu.core_type = #tpu.core_type<tc>, window_params = [{transform_indices = @transform_0, window_bounds = array<i64: 1, 18, 128>}, {pipeline_mode = #tpu.pipeline_mode<synchronous>, transform_indices = @transform_1, window_bounds = array<i64: 3, 128, 128>}, {pipeline_mode = #tpu.pipeline_mode<synchronous>, transform_indices = @transform_2, window_bounds = array<i64: 1, 128>}, {transform_indices = @transform_3, window_bounds = array<i64: 1, 16, 128>}]} {
    %cst = arith.constant 0.000000e+00 : f32
    %0 = vector.broadcast %cst : f32 to vector<16x128xf32>
    %c0 = arith.constant 0 : index
    %c0_0 = arith.constant 0 : index
    %c0_1 = arith.constant 0 : index
    %1 = vector.load %arg1[%c0, %c0_0, %c0_1] : memref<1x18x128xf32, #tpu.memory_space<vmem>>, vector<1x16x128xf32>
    %2 = vector.shape_cast %1 : vector<1x16x128xf32> to vector<16x128xf32>
    %3 = arith.truncf %2 : vector<16x128xf32> to vector<16x128xbf16>
    %c0_2 = arith.constant 0 : index
    %c0_3 = arith.constant 0 : index
    %c0_4 = arith.constant 0 : index
    %4 = vector.load %arg2[%c0_2, %c0_3, %c0_4] : memref<3x128x128xbf16, #tpu.memory_space<vmem>>, vector<1x128x128xbf16>
    %5 = vector.shape_cast %4 : vector<1x128x128xbf16> to vector<128x128xbf16>
    %cst_5 = arith.constant dense<0.000000e+00> : vector<16x128xf32>
    %6 = tpu.matmul %3, %5, %cst_5 {dimension_numbers = #tpu.dot_dimension_numbers<[1], [0], [0], [1], [0, 0, 1, 1], [], []>} : vector<16x128xbf16>, vector<128x128xbf16>, vector<16x128xf32> -> vector<16x128xf32>
    %7 = arith.addf %0, %6 : vector<16x128xf32>
    %c0_6 = arith.constant 0 : index
    %c1 = arith.constant 1 : index
    %c0_7 = arith.constant 0 : index
    %8 = vector.load %arg1[%c0_6, %c1, %c0_7] : memref<1x18x128xf32, #tpu.memory_space<vmem>>, vector<1x16x128xf32>
    %9 = vector.shape_cast %8 : vector<1x16x128xf32> to vector<16x128xf32>
    %10 = arith.truncf %9 : vector<16x128xf32> to vector<16x128xbf16>
    %c1_8 = arith.constant 1 : index
    %c0_9 = arith.constant 0 : index
    %c0_10 = arith.constant 0 : index
    %11 = vector.load %arg2[%c1_8, %c0_9, %c0_10] : memref<3x128x128xbf16, #tpu.memory_space<vmem>>, vector<1x128x128xbf16>
    %12 = vector.shape_cast %11 : vector<1x128x128xbf16> to vector<128x128xbf16>
    %cst_11 = arith.constant dense<0.000000e+00> : vector<16x128xf32>
    %13 = tpu.matmul %10, %12, %cst_11 {dimension_numbers = #tpu.dot_dimension_numbers<[1], [0], [0], [1], [0, 0, 1, 1], [], []>} : vector<16x128xbf16>, vector<128x128xbf16>, vector<16x128xf32> -> vector<16x128xf32>
    %14 = arith.addf %7, %13 : vector<16x128xf32>
    %c0_12 = arith.constant 0 : index
    %c2 = arith.constant 2 : index
    %c0_13 = arith.constant 0 : index
    %15 = vector.load %arg1[%c0_12, %c2, %c0_13] : memref<1x18x128xf32, #tpu.memory_space<vmem>>, vector<1x16x128xf32>
    %16 = vector.shape_cast %15 : vector<1x16x128xf32> to vector<16x128xf32>
    %17 = arith.truncf %16 : vector<16x128xf32> to vector<16x128xbf16>
    %c2_14 = arith.constant 2 : index
    %c0_15 = arith.constant 0 : index
    %c0_16 = arith.constant 0 : index
    %18 = vector.load %arg2[%c2_14, %c0_15, %c0_16] : memref<3x128x128xbf16, #tpu.memory_space<vmem>>, vector<1x128x128xbf16>
    %19 = vector.shape_cast %18 : vector<1x128x128xbf16> to vector<128x128xbf16>
    %cst_17 = arith.constant dense<0.000000e+00> : vector<16x128xf32>
    %20 = tpu.matmul %17, %19, %cst_17 {dimension_numbers = #tpu.dot_dimension_numbers<[1], [0], [0], [1], [0, 0, 1, 1], [], []>} : vector<16x128xbf16>, vector<128x128xbf16>, vector<16x128xf32> -> vector<16x128xf32>
    %21 = arith.addf %14, %20 : vector<16x128xf32>
    %c0_18 = arith.constant 0 : index
    %c0_19 = arith.constant 0 : index
    %22 = vector.load %arg3[%c0_18, %c0_19] : memref<1x128xf32, #tpu.memory_space<vmem>>, vector<1x128xf32>
    %23 = vector.broadcast %22 : vector<1x128xf32> to vector<16x128xf32>
    %24 = arith.addf %21, %23 : vector<16x128xf32>
    %cst_20 = arith.constant 0.000000e+00 : f32
    %25 = vector.broadcast %cst_20 : f32 to vector<16x128xf32>
    %26 = arith.maximumf %24, %25 : vector<16x128xf32>
    %c0_21 = arith.constant 0 : index
    %c0_22 = arith.constant 0 : index
    %c0_23 = arith.constant 0 : index
    %27 = vector.load %arg4[%c0_21, %c0_22, %c0_23] : memref<1x16x128xf32, #tpu.memory_space<vmem>>, vector<1x16x128xf32>
    %28 = vector.shape_cast %27 : vector<1x16x128xf32> to vector<16x128xf32>
    %29 = vector.shape_cast %26 : vector<16x128xf32> to vector<1x16x128xf32>
    tpu.vector_store %arg4[%c0_21, %c0_22, %c0_23], %29 {strides = array<i32>} : memref<1x16x128xf32, #tpu.memory_space<vmem>>, vector<1x16x128xf32>,
    return
  }
  func.func @transform_0(%arg0: i32) -> (i32, i32, i32) {
    %c0_i32 = arith.constant 0 : i32
    %c0_i32_0 = arith.constant 0 : i32
    %c0_i32_1 = arith.constant 0 : i32
    return %arg0, %c0_i32, %c0_i32_0 : i32, i32, i32
  }
  func.func @transform_1(%arg0: i32) -> (i32, i32, i32) {
    %c0_i32 = arith.constant 0 : i32
    %c0_i32_0 = arith.constant 0 : i32
    %c0_i32_1 = arith.constant 0 : i32
    %c0_i32_2 = arith.constant 0 : i32
    return %c0_i32, %c0_i32_0, %c0_i32_1 : i32, i32, i32
  }
  func.func @transform_2(%arg0: i32) -> (i32, i32) {
    %c0_i32 = arith.constant 0 : i32
    %c0_i32_0 = arith.constant 0 : i32
    %c0_i32_1 = arith.constant 0 : i32
    return %c0_i32, %c0_i32_0 : i32, i32
  }
  func.func @transform_3(%arg0: i32) -> (i32, i32, i32) {
    %c0_i32 = arith.constant 0 : i32
    %c0_i32_0 = arith.constant 0 : i32
    %c0_i32_1 = arith.constant 0 : i32
    return %arg0, %c0_i32, %c0_i32_0 : i32, i32, i32
  }
}

module attributes {stable_mosaic.version = 11 : i64} {
  func.func @_conv3x3_linear_kernel(%arg0: i32, %arg1: memref<1x10x128xf32, #tpu.memory_space<vmem>>, %arg2: memref<3x128x128xbf16, #tpu.memory_space<vmem>>, %arg3: memref<1x128xf32, #tpu.memory_space<vmem>>, %arg4: memref<128x128xbf16, #tpu.memory_space<vmem>>, %arg5: memref<1x128xf32, #tpu.memory_space<vmem>>, %arg6: memref<1x8x128xf32, #tpu.memory_space<vmem>>) attributes {dimension_semantics = [#tpu.dimension_semantics<parallel>], iteration_bounds = array<i64: 2>, scalar_prefetch = 0 : i64, scratch_operands = 0 : i64, tpu.core_type = #tpu.core_type<tc>, window_params = [{transform_indices = @transform_0, window_bounds = array<i64: 1, 10, 128>}, {pipeline_mode = #tpu.pipeline_mode<synchronous>, transform_indices = @transform_1, window_bounds = array<i64: 3, 128, 128>}, {pipeline_mode = #tpu.pipeline_mode<synchronous>, transform_indices = @transform_2, window_bounds = array<i64: 1, 128>}, {pipeline_mode = #tpu.pipeline_mode<synchronous>, transform_indices = @transform_3, window_bounds = array<i64: 128, 128>}, {pipeline_mode = #tpu.pipeline_mode<synchronous>, transform_indices = @transform_4, window_bounds = array<i64: 1, 128>}, {transform_indices = @transform_5, window_bounds = array<i64: 1, 8, 128>}]} {
    %cst = arith.constant 0.000000e+00 : f32
    %0 = vector.broadcast %cst : f32 to vector<8x128xf32>
    %c0 = arith.constant 0 : index
    %c0_0 = arith.constant 0 : index
    %c0_1 = arith.constant 0 : index
    %1 = vector.load %arg1[%c0, %c0_0, %c0_1] : memref<1x10x128xf32, #tpu.memory_space<vmem>>, vector<1x8x128xf32>
    %2 = vector.shape_cast %1 : vector<1x8x128xf32> to vector<8x128xf32>
    %3 = arith.truncf %2 : vector<8x128xf32> to vector<8x128xbf16>
    %c0_2 = arith.constant 0 : index
    %c0_3 = arith.constant 0 : index
    %c0_4 = arith.constant 0 : index
    %4 = vector.load %arg2[%c0_2, %c0_3, %c0_4] : memref<3x128x128xbf16, #tpu.memory_space<vmem>>, vector<1x128x128xbf16>
    %5 = vector.shape_cast %4 : vector<1x128x128xbf16> to vector<128x128xbf16>
    %cst_5 = arith.constant dense<0.000000e+00> : vector<8x128xf32>
    %6 = tpu.matmul %3, %5, %cst_5 {dimension_numbers = #tpu.dot_dimension_numbers<[1], [0], [0], [1], [0, 0, 1, 1], [], []>} : vector<8x128xbf16>, vector<128x128xbf16>, vector<8x128xf32> -> vector<8x128xf32>
    %7 = arith.addf %0, %6 : vector<8x128xf32>
    %c0_6 = arith.constant 0 : index
    %c1 = arith.constant 1 : index
    %c0_7 = arith.constant 0 : index
    %8 = vector.load %arg1[%c0_6, %c1, %c0_7] : memref<1x10x128xf32, #tpu.memory_space<vmem>>, vector<1x8x128xf32>
    %9 = vector.shape_cast %8 : vector<1x8x128xf32> to vector<8x128xf32>
    %10 = arith.truncf %9 : vector<8x128xf32> to vector<8x128xbf16>
    %c1_8 = arith.constant 1 : index
    %c0_9 = arith.constant 0 : index
    %c0_10 = arith.constant 0 : index
    %11 = vector.load %arg2[%c1_8, %c0_9, %c0_10] : memref<3x128x128xbf16, #tpu.memory_space<vmem>>, vector<1x128x128xbf16>
    %12 = vector.shape_cast %11 : vector<1x128x128xbf16> to vector<128x128xbf16>
    %cst_11 = arith.constant dense<0.000000e+00> : vector<8x128xf32>
    %13 = tpu.matmul %10, %12, %cst_11 {dimension_numbers = #tpu.dot_dimension_numbers<[1], [0], [0], [1], [0, 0, 1, 1], [], []>} : vector<8x128xbf16>, vector<128x128xbf16>, vector<8x128xf32> -> vector<8x128xf32>
    %14 = arith.addf %7, %13 : vector<8x128xf32>
    %c0_12 = arith.constant 0 : index
    %c2 = arith.constant 2 : index
    %c0_13 = arith.constant 0 : index
    %15 = vector.load %arg1[%c0_12, %c2, %c0_13] : memref<1x10x128xf32, #tpu.memory_space<vmem>>, vector<1x8x128xf32>
    %16 = vector.shape_cast %15 : vector<1x8x128xf32> to vector<8x128xf32>
    %17 = arith.truncf %16 : vector<8x128xf32> to vector<8x128xbf16>
    %c2_14 = arith.constant 2 : index
    %c0_15 = arith.constant 0 : index
    %c0_16 = arith.constant 0 : index
    %18 = vector.load %arg2[%c2_14, %c0_15, %c0_16] : memref<3x128x128xbf16, #tpu.memory_space<vmem>>, vector<1x128x128xbf16>
    %19 = vector.shape_cast %18 : vector<1x128x128xbf16> to vector<128x128xbf16>
    %cst_17 = arith.constant dense<0.000000e+00> : vector<8x128xf32>
    %20 = tpu.matmul %17, %19, %cst_17 {dimension_numbers = #tpu.dot_dimension_numbers<[1], [0], [0], [1], [0, 0, 1, 1], [], []>} : vector<8x128xbf16>, vector<128x128xbf16>, vector<8x128xf32> -> vector<8x128xf32>
    %21 = arith.addf %14, %20 : vector<8x128xf32>
    %c0_18 = arith.constant 0 : index
    %c0_19 = arith.constant 0 : index
    %22 = vector.load %arg3[%c0_18, %c0_19] : memref<1x128xf32, #tpu.memory_space<vmem>>, vector<1x128xf32>
    %23 = vector.broadcast %22 : vector<1x128xf32> to vector<8x128xf32>
    %24 = arith.addf %21, %23 : vector<8x128xf32>
    %cst_20 = arith.constant 0.000000e+00 : f32
    %25 = vector.broadcast %cst_20 : f32 to vector<8x128xf32>
    %26 = arith.maximumf %24, %25 : vector<8x128xf32>
    %27 = arith.truncf %26 : vector<8x128xf32> to vector<8x128xbf16>
    %c0_21 = arith.constant 0 : index
    %c0_22 = arith.constant 0 : index
    %28 = vector.load %arg4[%c0_21, %c0_22] : memref<128x128xbf16, #tpu.memory_space<vmem>>, vector<128x128xbf16>
    %cst_23 = arith.constant dense<0.000000e+00> : vector<8x128xf32>
    %29 = tpu.matmul %27, %28, %cst_23 {dimension_numbers = #tpu.dot_dimension_numbers<[1], [0], [0], [1], [0, 0, 1, 1], [], []>} : vector<8x128xbf16>, vector<128x128xbf16>, vector<8x128xf32> -> vector<8x128xf32>
    %c0_24 = arith.constant 0 : index
    %c0_25 = arith.constant 0 : index
    %30 = vector.load %arg5[%c0_24, %c0_25] : memref<1x128xf32, #tpu.memory_space<vmem>>, vector<1x128xf32>
    %31 = vector.broadcast %30 : vector<1x128xf32> to vector<8x128xf32>
    %32 = arith.addf %29, %31 : vector<8x128xf32>
    %c0_26 = arith.constant 0 : index
    %c0_27 = arith.constant 0 : index
    %c0_28 = arith.constant 0 : index
    %33 = vector.load %arg6[%c0_26, %c0_27, %c0_28] : memref<1x8x128xf32, #tpu.memory_space<vmem>>, vector<1x8x128xf32>
    %34 = vector.shape_cast %33 : vector<1x8x128xf32> to vector<8x128xf32>
    %35 = vector.shape_cast %32 : vector<8x128xf32> to vector<1x8x128xf32>
    tpu.vector_store %arg6[%c0_26, %c0_27, %c0_28], %35 {strides = array<i32>} : memref<1x8x128xf32, #tpu.memory_space<vmem>>, vector<1x8x128xf32>,
    return
  }
  func.func @transform_0(%arg0: i32) -> (i32, i32, i32) {
    %c0_i32 = arith.constant 0 : i32
    %c0_i32_0 = arith.constant 0 : i32
    %c0_i32_1 = arith.constant 0 : i32
    return %arg0, %c0_i32, %c0_i32_0 : i32, i32, i32
  }
  func.func @transform_1(%arg0: i32) -> (i32, i32, i32) {
    %c0_i32 = arith.constant 0 : i32
    %c0_i32_0 = arith.constant 0 : i32
    %c0_i32_1 = arith.constant 0 : i32
    %c0_i32_2 = arith.constant 0 : i32
    return %c0_i32, %c0_i32_0, %c0_i32_1 : i32, i32, i32
  }
  func.func @transform_2(%arg0: i32) -> (i32, i32) {
    %c0_i32 = arith.constant 0 : i32
    %c0_i32_0 = arith.constant 0 : i32
    %c0_i32_1 = arith.constant 0 : i32
    return %c0_i32, %c0_i32_0 : i32, i32
  }
  func.func @transform_3(%arg0: i32) -> (i32, i32) {
    %c0_i32 = arith.constant 0 : i32
    %c0_i32_0 = arith.constant 0 : i32
    %c0_i32_1 = arith.constant 0 : i32
    return %c0_i32, %c0_i32_0 : i32, i32
  }
  func.func @transform_4(%arg0: i32) -> (i32, i32) {
    %c0_i32 = arith.constant 0 : i32
    %c0_i32_0 = arith.constant 0 : i32
    %c0_i32_1 = arith.constant 0 : i32
    return %c0_i32, %c0_i32_0 : i32, i32
  }
  func.func @transform_5(%arg0: i32) -> (i32, i32, i32) {
    %c0_i32 = arith.constant 0 : i32
    %c0_i32_0 = arith.constant 0 : i32
    %c0_i32_1 = arith.constant 0 : i32
    return %arg0, %c0_i32, %c0_i32_0 : i32, i32, i32
  }
}

module attributes {stable_mosaic.version = 11 : i64} {
  func.func @_conformer_block_kernel(%arg0: i32, %arg1: memref<2xi32, #tpu.memory_space<smem>>, %arg2: memref<1x8x128xf32, #tpu.memory_space<vmem>>, %arg3: memref<29x128xf32, #tpu.memory_space<vmem>>, %arg4: memref<2x256xf32, #tpu.memory_space<vmem>>, %arg5: memref<128x256xbf16, #tpu.memory_space<vmem>>, %arg6: memref<256x128xbf16, #tpu.memory_space<vmem>>, %arg7: memref<128x256xbf16, #tpu.memory_space<vmem>>, %arg8: memref<128x128xbf16, #tpu.memory_space<vmem>>, %arg9: memref<128x384xbf16, #tpu.memory_space<vmem>>, %arg10: memref<128x128xbf16, #tpu.memory_space<vmem>>, %arg11: memref<128x256xbf16, #tpu.memory_space<vmem>>, %arg12: memref<256x128xbf16, #tpu.memory_space<vmem>>, %arg13: memref<1x8x128xf32, #tpu.memory_space<vmem>>) attributes {dimension_semantics = [#tpu.dimension_semantics<parallel>], iteration_bounds = array<i64: 2>, scalar_prefetch = 1 : i64, scratch_operands = 0 : i64, tpu.core_type = #tpu.core_type<tc>, window_params = [{transform_indices = @transform_0, window_bounds = array<i64: 1, 8, 128>}, {pipeline_mode = #tpu.pipeline_mode<synchronous>, transform_indices = @transform_1, window_bounds = array<i64: 29, 128>}, {pipeline_mode = #tpu.pipeline_mode<synchronous>, transform_indices = @transform_2, window_bounds = array<i64: 2, 256>}, {pipeline_mode = #tpu.pipeline_mode<synchronous>, transform_indices = @transform_3, window_bounds = array<i64: 128, 256>}, {pipeline_mode = #tpu.pipeline_mode<synchronous>, transform_indices = @transform_4, window_bounds = array<i64: 256, 128>}, {pipeline_mode = #tpu.pipeline_mode<synchronous>, transform_indices = @transform_5, window_bounds = array<i64: 128, 256>}, {pipeline_mode = #tpu.pipeline_mode<synchronous>, transform_indices = @transform_6, window_bounds = array<i64: 128, 128>}, {pipeline_mode = #tpu.pipeline_mode<synchronous>, transform_indices = @transform_7, window_bounds = array<i64: 128, 384>}, {pipeline_mode = #tpu.pipeline_mode<synchronous>, transform_indices = @transform_8, window_bounds = array<i64: 128, 128>}, {pipeline_mode = #tpu.pipeline_mode<synchronous>, transform_indices = @transform_9, window_bounds = array<i64: 128, 256>}, {pipeline_mode = #tpu.pipeline_mode<synchronous>, transform_indices = @transform_10, window_bounds = array<i64: 256, 128>}, {transform_indices = @transform_11, window_bounds = array<i64: 1, 8, 128>}]} {
    %c0 = arith.constant 0 : index
    %c0_0 = arith.constant 0 : index
    %c0_1 = arith.constant 0 : index
    %0 = vector.load %arg2[%c0, %c0_0, %c0_1] : memref<1x8x128xf32, #tpu.memory_space<vmem>>, vector<1x8x128xf32>
    %1 = vector.shape_cast %0 : vector<1x8x128xf32> to vector<8x128xf32>
    %c0_2 = arith.constant 0 : index
    %c0_3 = arith.constant 0 : index
    %2 = vector.load %arg3[%c0_2, %c0_3] : memref<29x128xf32, #tpu.memory_space<vmem>>, vector<1x128xf32>
    %c1 = arith.constant 1 : index
    %c0_4 = arith.constant 0 : index
    %3 = vector.load %arg3[%c1, %c0_4] : memref<29x128xf32, #tpu.memory_space<vmem>>, vector<1x128xf32>
    %cst = arith.constant dense<0.000000e+00> : vector<8xf32>
    %4 = vector.multi_reduction <add>, %1, %cst [1] : vector<8x128xf32> to vector<8xf32>
    %5 = vector.shape_cast %4 : vector<8xf32> to vector<8x1xf32>
    %cst_5 = arith.constant 1.280000e+02 : f32
    %6 = vector.broadcast %cst_5 : f32 to vector<8x1xf32>
    %7 = arith.divf %5, %6 : vector<8x1xf32>
    %8 = vector.broadcast %7 : vector<8x1xf32> to vector<8x128xf32>
    %9 = arith.subf %1, %8 : vector<8x128xf32>
    %10 = arith.mulf %9, %9 : vector<8x128xf32>
    %cst_6 = arith.constant dense<0.000000e+00> : vector<8xf32>
    %11 = vector.multi_reduction <add>, %10, %cst_6 [1] : vector<8x128xf32> to vector<8xf32>
    %12 = vector.shape_cast %11 : vector<8xf32> to vector<8x1xf32>
    %cst_7 = arith.constant 1.280000e+02 : f32
    %13 = vector.broadcast %cst_7 : f32 to vector<8x1xf32>
    %14 = arith.divf %12, %13 : vector<8x1xf32>
    %15 = vector.broadcast %7 : vector<8x1xf32> to vector<8x128xf32>
    %16 = arith.subf %1, %15 : vector<8x128xf32>
    %cst_8 = arith.constant 9.99999974E-6 : f32
    %17 = vector.broadcast %cst_8 : f32 to vector<8x1xf32>
    %18 = arith.addf %14, %17 : vector<8x1xf32>
    %19 = math.rsqrt %18 : vector<8x1xf32>
    %20 = vector.broadcast %19 : vector<8x1xf32> to vector<8x128xf32>
    %21 = arith.mulf %16, %20 : vector<8x128xf32>
    %22 = vector.broadcast %2 : vector<1x128xf32> to vector<8x128xf32>
    %23 = arith.mulf %21, %22 : vector<8x128xf32>
    %24 = vector.broadcast %3 : vector<1x128xf32> to vector<8x128xf32>
    %25 = arith.addf %23, %24 : vector<8x128xf32>
    %26 = arith.truncf %25 : vector<8x128xf32> to vector<8x128xbf16>
    %c0_9 = arith.constant 0 : index
    %c0_10 = arith.constant 0 : index
    %27 = vector.load %arg5[%c0_9, %c0_10] : memref<128x256xbf16, #tpu.memory_space<vmem>>, vector<128x256xbf16>
    %cst_11 = arith.constant dense<0.000000e+00> : vector<8x256xf32>
    %28 = tpu.matmul %26, %27, %cst_11 {dimension_numbers = #tpu.dot_dimension_numbers<[1], [0], [0], [1], [0, 0, 1, 1], [], []>} : vector<8x128xbf16>, vector<128x256xbf16>, vector<8x256xf32> -> vector<8x256xf32>
    %c0_12 = arith.constant 0 : index
    %c0_13 = arith.constant 0 : index
    %29 = vector.load %arg4[%c0_12, %c0_13] : memref<2x256xf32, #tpu.memory_space<vmem>>, vector<1x256xf32>
    %30 = vector.broadcast %29 : vector<1x256xf32> to vector<8x256xf32>
    %31 = arith.addf %28, %30 : vector<8x256xf32>
    %32 = arith.negf %31 : vector<8x256xf32>
    %33 = math.exp %32 : vector<8x256xf32>
    %cst_14 = arith.constant 1.000000e+00 : f32
    %34 = vector.broadcast %cst_14 : f32 to vector<8x256xf32>
    %35 = arith.addf %34, %33 : vector<8x256xf32>
    %36 = arith.divf %34, %35 : vector<8x256xf32>
    %37 = arith.mulf %31, %36 : vector<8x256xf32>
    %38 = arith.truncf %37 : vector<8x256xf32> to vector<8x256xbf16>
    %c0_15 = arith.constant 0 : index
    %c0_16 = arith.constant 0 : index
    %39 = vector.load %arg6[%c0_15, %c0_16] : memref<256x128xbf16, #tpu.memory_space<vmem>>, vector<256x128xbf16>
    %cst_17 = arith.constant dense<0.000000e+00> : vector<8x128xf32>
    %40 = tpu.matmul %38, %39, %cst_17 {dimension_numbers = #tpu.dot_dimension_numbers<[1], [0], [0], [1], [0, 0, 1, 1], [], []>} : vector<8x256xbf16>, vector<256x128xbf16>, vector<8x128xf32> -> vector<8x128xf32>
    %c2 = arith.constant 2 : index
    %c0_18 = arith.constant 0 : index
    %41 = vector.load %arg3[%c2, %c0_18] : memref<29x128xf32, #tpu.memory_space<vmem>>, vector<1x128xf32>
    %42 = vector.broadcast %41 : vector<1x128xf32> to vector<8x128xf32>
    %43 = arith.addf %40, %42 : vector<8x128xf32>
    %cst_19 = arith.constant 5.000000e-01 : f32
    %44 = vector.broadcast %cst_19 : f32 to vector<8x128xf32>
    %45 = arith.mulf %44, %43 : vector<8x128xf32>
    %46 = arith.addf %45, %1 : vector<8x128xf32>
    %c3 = arith.constant 3 : index
    %c0_20 = arith.constant 0 : index
    %47 = vector.load %arg3[%c3, %c0_20] : memref<29x128xf32, #tpu.memory_space<vmem>>, vector<1x128xf32>
    %c4 = arith.constant 4 : index
    %c0_21 = arith.constant 0 : index
    %48 = vector.load %arg3[%c4, %c0_21] : memref<29x128xf32, #tpu.memory_space<vmem>>, vector<1x128xf32>
    %cst_22 = arith.constant dense<0.000000e+00> : vector<8xf32>
    %49 = vector.multi_reduction <add>, %46, %cst_22 [1] : vector<8x128xf32> to vector<8xf32>
    %50 = vector.shape_cast %49 : vector<8xf32> to vector<8x1xf32>
    %cst_23 = arith.constant 1.280000e+02 : f32
    %51 = vector.broadcast %cst_23 : f32 to vector<8x1xf32>
    %52 = arith.divf %50, %51 : vector<8x1xf32>
    %53 = vector.broadcast %52 : vector<8x1xf32> to vector<8x128xf32>
    %54 = arith.subf %46, %53 : vector<8x128xf32>
    %55 = arith.mulf %54, %54 : vector<8x128xf32>
    %cst_24 = arith.constant dense<0.000000e+00> : vector<8xf32>
    %56 = vector.multi_reduction <add>, %55, %cst_24 [1] : vector<8x128xf32> to vector<8xf32>
    %57 = vector.shape_cast %56 : vector<8xf32> to vector<8x1xf32>
    %cst_25 = arith.constant 1.280000e+02 : f32
    %58 = vector.broadcast %cst_25 : f32 to vector<8x1xf32>
    %59 = arith.divf %57, %58 : vector<8x1xf32>
    %60 = vector.broadcast %52 : vector<8x1xf32> to vector<8x128xf32>
    %61 = arith.subf %46, %60 : vector<8x128xf32>
    %cst_26 = arith.constant 9.99999974E-6 : f32
    %62 = vector.broadcast %cst_26 : f32 to vector<8x1xf32>
    %63 = arith.addf %59, %62 : vector<8x1xf32>
    %64 = math.rsqrt %63 : vector<8x1xf32>
    %65 = vector.broadcast %64 : vector<8x1xf32> to vector<8x128xf32>
    %66 = arith.mulf %61, %65 : vector<8x128xf32>
    %67 = vector.broadcast %47 : vector<1x128xf32> to vector<8x128xf32>
    %68 = arith.mulf %66, %67 : vector<8x128xf32>
    %69 = vector.broadcast %48 : vector<1x128xf32> to vector<8x128xf32>
    %70 = arith.addf %68, %69 : vector<8x128xf32>
    %71 = arith.truncf %70 : vector<8x128xf32> to vector<8x128xbf16>
    %c0_27 = arith.constant 0 : index
    %c0_28 = arith.constant 0 : index
    %72 = vector.load %arg7[%c0_27, %c0_28] : memref<128x256xbf16, #tpu.memory_space<vmem>>, vector<128x256xbf16>
    %cst_29 = arith.constant dense<0.000000e+00> : vector<8x256xf32>
    %73 = tpu.matmul %71, %72, %cst_29 {dimension_numbers = #tpu.dot_dimension_numbers<[1], [0], [0], [1], [0, 0, 1, 1], [], []>} : vector<8x128xbf16>, vector<128x256xbf16>, vector<8x256xf32> -> vector<8x256xf32>
    %74 = vector.extract_strided_slice %73 {offsets = [0, 0], sizes = [8, 128], strides = [1, 1]} : vector<8x256xf32> to vector<8x128xf32>
    %c5 = arith.constant 5 : index
    %c0_30 = arith.constant 0 : index
    %75 = vector.load %arg3[%c5, %c0_30] : memref<29x128xf32, #tpu.memory_space<vmem>>, vector<1x128xf32>
    %76 = vector.broadcast %75 : vector<1x128xf32> to vector<8x128xf32>
    %77 = arith.addf %74, %76 : vector<8x128xf32>
    %78 = vector.extract_strided_slice %73 {offsets = [0, 128], sizes = [8, 128], strides = [1, 1]} : vector<8x256xf32> to vector<8x128xf32>
    %c6 = arith.constant 6 : index
    %c0_31 = arith.constant 0 : index
    %79 = vector.load %arg3[%c6, %c0_31] : memref<29x128xf32, #tpu.memory_space<vmem>>, vector<1x128xf32>
    %80 = vector.broadcast %79 : vector<1x128xf32> to vector<8x128xf32>
    %81 = arith.addf %78, %80 : vector<8x128xf32>
    %82 = arith.negf %81 : vector<8x128xf32>
    %83 = math.exp %82 : vector<8x128xf32>
    %cst_32 = arith.constant 1.000000e+00 : f32
    %84 = vector.broadcast %cst_32 : f32 to vector<8x128xf32>
    %85 = arith.addf %84, %83 : vector<8x128xf32>
    %86 = arith.divf %84, %85 : vector<8x128xf32>
    %87 = arith.mulf %77, %86 : vector<8x128xf32>
    %88 = tpu.iota {dimensions = array<i32: 0>} : vector<8x1xi32>
    %cst_33 = arith.constant 0.000000e+00 : f32
    %89 = vector.broadcast %cst_33 : f32 to vector<8x128xf32>
    %c22 = arith.constant 22 : index
    %c0_34 = arith.constant 0 : index
    %90 = vector.load %arg3[%c22, %c0_34] : memref<29x128xf32, #tpu.memory_space<vmem>>, vector<1x128xf32>
    %c3_i32 = arith.constant 3 : i32
    %91 = tpu.dynamic_rotate %87 by %c3_i32 dim 0 : vector<8x128xf32>, i32 -> vector<8x128xf32>
    %c-3_i32 = arith.constant -3 : i32
    %92 = vector.broadcast %c-3_i32 : i32 to vector<8x1xi32>
    %93 = arith.addi %88, %92 : vector<8x1xi32>
    %c0_i32 = arith.constant 0 : i32
    %94 = vector.broadcast %c0_i32 : i32 to vector<8x1xi32>
    %95 = arith.cmpi sge, %93, %94 : vector<8x1xi32>
    %c-3_i32_35 = arith.constant -3 : i32
    %96 = vector.broadcast %c-3_i32_35 : i32 to vector<8x1xi32>
    %97 = arith.addi %88, %96 : vector<8x1xi32>
    %c8_i32 = arith.constant 8 : i32
    %98 = vector.broadcast %c8_i32 : i32 to vector<8x1xi32>
    %99 = arith.cmpi slt, %97, %98 : vector<8x1xi32>
    %100 = arith.andi %95, %99 : vector<8x1xi1>
    %cst_36 = arith.constant 0.000000e+00 : f32
    %101 = vector.shape_cast %100 : vector<8x1xi1> to vector<8x1xi1>
    %102 = vector.broadcast %101 : vector<8x1xi1> to vector<8x128xi1>
    %103 = vector.broadcast %cst_36 : f32 to vector<8x128xf32>
    %104 = arith.select %102, %91, %103 : vector<8x128xi1>, vector<8x128xf32>
    %105 = vector.broadcast %90 : vector<1x128xf32> to vector<8x128xf32>
    %106 = arith.mulf %104, %105 : vector<8x128xf32>
    %107 = arith.addf %89, %106 : vector<8x128xf32>
    %c23 = arith.constant 23 : index
    %c0_37 = arith.constant 0 : index
    %108 = vector.load %arg3[%c23, %c0_37] : memref<29x128xf32, #tpu.memory_space<vmem>>, vector<1x128xf32>
    %c2_i32 = arith.constant 2 : i32
    %109 = tpu.dynamic_rotate %87 by %c2_i32 dim 0 : vector<8x128xf32>, i32 -> vector<8x128xf32>
    %c-2_i32 = arith.constant -2 : i32
    %110 = vector.broadcast %c-2_i32 : i32 to vector<8x1xi32>
    %111 = arith.addi %88, %110 : vector<8x1xi32>
    %c0_i32_38 = arith.constant 0 : i32
    %112 = vector.broadcast %c0_i32_38 : i32 to vector<8x1xi32>
    %113 = arith.cmpi sge, %111, %112 : vector<8x1xi32>
    %c-2_i32_39 = arith.constant -2 : i32
    %114 = vector.broadcast %c-2_i32_39 : i32 to vector<8x1xi32>
    %115 = arith.addi %88, %114 : vector<8x1xi32>
    %c8_i32_40 = arith.constant 8 : i32
    %116 = vector.broadcast %c8_i32_40 : i32 to vector<8x1xi32>
    %117 = arith.cmpi slt, %115, %116 : vector<8x1xi32>
    %118 = arith.andi %113, %117 : vector<8x1xi1>
    %cst_41 = arith.constant 0.000000e+00 : f32
    %119 = vector.shape_cast %118 : vector<8x1xi1> to vector<8x1xi1>
    %120 = vector.broadcast %119 : vector<8x1xi1> to vector<8x128xi1>
    %121 = vector.broadcast %cst_41 : f32 to vector<8x128xf32>
    %122 = arith.select %120, %109, %121 : vector<8x128xi1>, vector<8x128xf32>
    %123 = vector.broadcast %108 : vector<1x128xf32> to vector<8x128xf32>
    %124 = arith.mulf %122, %123 : vector<8x128xf32>
    %125 = arith.addf %107, %124 : vector<8x128xf32>
    %c24 = arith.constant 24 : index
    %c0_42 = arith.constant 0 : index
    %126 = vector.load %arg3[%c24, %c0_42] : memref<29x128xf32, #tpu.memory_space<vmem>>, vector<1x128xf32>
    %c1_i32 = arith.constant 1 : i32
    %127 = tpu.dynamic_rotate %87 by %c1_i32 dim 0 : vector<8x128xf32>, i32 -> vector<8x128xf32>
    %c-1_i32 = arith.constant -1 : i32
    %128 = vector.broadcast %c-1_i32 : i32 to vector<8x1xi32>
    %129 = arith.addi %88, %128 : vector<8x1xi32>
    %c0_i32_43 = arith.constant 0 : i32
    %130 = vector.broadcast %c0_i32_43 : i32 to vector<8x1xi32>
    %131 = arith.cmpi sge, %129, %130 : vector<8x1xi32>
    %c-1_i32_44 = arith.constant -1 : i32
    %132 = vector.broadcast %c-1_i32_44 : i32 to vector<8x1xi32>
    %133 = arith.addi %88, %132 : vector<8x1xi32>
    %c8_i32_45 = arith.constant 8 : i32
    %134 = vector.broadcast %c8_i32_45 : i32 to vector<8x1xi32>
    %135 = arith.cmpi slt, %133, %134 : vector<8x1xi32>
    %136 = arith.andi %131, %135 : vector<8x1xi1>
    %cst_46 = arith.constant 0.000000e+00 : f32
    %137 = vector.shape_cast %136 : vector<8x1xi1> to vector<8x1xi1>
    %138 = vector.broadcast %137 : vector<8x1xi1> to vector<8x128xi1>
    %139 = vector.broadcast %cst_46 : f32 to vector<8x128xf32>
    %140 = arith.select %138, %127, %139 : vector<8x128xi1>, vector<8x128xf32>
    %141 = vector.broadcast %126 : vector<1x128xf32> to vector<8x128xf32>
    %142 = arith.mulf %140, %141 : vector<8x128xf32>
    %143 = arith.addf %125, %142 : vector<8x128xf32>
    %c25 = arith.constant 25 : index
    %c0_47 = arith.constant 0 : index
    %144 = vector.load %arg3[%c25, %c0_47] : memref<29x128xf32, #tpu.memory_space<vmem>>, vector<1x128xf32>
    %145 = vector.broadcast %144 : vector<1x128xf32> to vector<8x128xf32>
    %146 = arith.mulf %87, %145 : vector<8x128xf32>
    %147 = arith.addf %143, %146 : vector<8x128xf32>
    %c26 = arith.constant 26 : index
    %c0_48 = arith.constant 0 : index
    %148 = vector.load %arg3[%c26, %c0_48] : memref<29x128xf32, #tpu.memory_space<vmem>>, vector<1x128xf32>
    %c7_i32 = arith.constant 7 : i32
    %149 = tpu.dynamic_rotate %87 by %c7_i32 dim 0 : vector<8x128xf32>, i32 -> vector<8x128xf32>
    %c1_i32_49 = arith.constant 1 : i32
    %150 = vector.broadcast %c1_i32_49 : i32 to vector<8x1xi32>
    %151 = arith.addi %88, %150 : vector<8x1xi32>
    %c0_i32_50 = arith.constant 0 : i32
    %152 = vector.broadcast %c0_i32_50 : i32 to vector<8x1xi32>
    %153 = arith.cmpi sge, %151, %152 : vector<8x1xi32>
    %c1_i32_51 = arith.constant 1 : i32
    %154 = vector.broadcast %c1_i32_51 : i32 to vector<8x1xi32>
    %155 = arith.addi %88, %154 : vector<8x1xi32>
    %c8_i32_52 = arith.constant 8 : i32
    %156 = vector.broadcast %c8_i32_52 : i32 to vector<8x1xi32>
    %157 = arith.cmpi slt, %155, %156 : vector<8x1xi32>
    %158 = arith.andi %153, %157 : vector<8x1xi1>
    %cst_53 = arith.constant 0.000000e+00 : f32
    %159 = vector.shape_cast %158 : vector<8x1xi1> to vector<8x1xi1>
    %160 = vector.broadcast %159 : vector<8x1xi1> to vector<8x128xi1>
    %161 = vector.broadcast %cst_53 : f32 to vector<8x128xf32>
    %162 = arith.select %160, %149, %161 : vector<8x128xi1>, vector<8x128xf32>
    %163 = vector.broadcast %148 : vector<1x128xf32> to vector<8x128xf32>
    %164 = arith.mulf %162, %163 : vector<8x128xf32>
    %165 = arith.addf %147, %164 : vector<8x128xf32>
    %c27 = arith.constant 27 : index
    %c0_54 = arith.constant 0 : index
    %166 = vector.load %arg3[%c27, %c0_54] : memref<29x128xf32, #tpu.memory_space<vmem>>, vector<1x128xf32>
    %c6_i32 = arith.constant 6 : i32
    %167 = tpu.dynamic_rotate %87 by %c6_i32 dim 0 : vector<8x128xf32>, i32 -> vector<8x128xf32>
    %c2_i32_55 = arith.constant 2 : i32
    %168 = vector.broadcast %c2_i32_55 : i32 to vector<8x1xi32>
    %169 = arith.addi %88, %168 : vector<8x1xi32>
    %c0_i32_56 = arith.constant 0 : i32
    %170 = vector.broadcast %c0_i32_56 : i32 to vector<8x1xi32>
    %171 = arith.cmpi sge, %169, %170 : vector<8x1xi32>
    %c2_i32_57 = arith.constant 2 : i32
    %172 = vector.broadcast %c2_i32_57 : i32 to vector<8x1xi32>
    %173 = arith.addi %88, %172 : vector<8x1xi32>
    %c8_i32_58 = arith.constant 8 : i32
    %174 = vector.broadcast %c8_i32_58 : i32 to vector<8x1xi32>
    %175 = arith.cmpi slt, %173, %174 : vector<8x1xi32>
    %176 = arith.andi %171, %175 : vector<8x1xi1>
    %cst_59 = arith.constant 0.000000e+00 : f32
    %177 = vector.shape_cast %176 : vector<8x1xi1> to vector<8x1xi1>
    %178 = vector.broadcast %177 : vector<8x1xi1> to vector<8x128xi1>
    %179 = vector.broadcast %cst_59 : f32 to vector<8x128xf32>
    %180 = arith.select %178, %167, %179 : vector<8x128xi1>, vector<8x128xf32>
    %181 = vector.broadcast %166 : vector<1x128xf32> to vector<8x128xf32>
    %182 = arith.mulf %180, %181 : vector<8x128xf32>
    %183 = arith.addf %165, %182 : vector<8x128xf32>
    %c28 = arith.constant 28 : index
    %c0_60 = arith.constant 0 : index
    %184 = vector.load %arg3[%c28, %c0_60] : memref<29x128xf32, #tpu.memory_space<vmem>>, vector<1x128xf32>
    %c5_i32 = arith.constant 5 : i32
    %185 = tpu.dynamic_rotate %87 by %c5_i32 dim 0 : vector<8x128xf32>, i32 -> vector<8x128xf32>
    %c3_i32_61 = arith.constant 3 : i32
    %186 = vector.broadcast %c3_i32_61 : i32 to vector<8x1xi32>
    %187 = arith.addi %88, %186 : vector<8x1xi32>
    %c0_i32_62 = arith.constant 0 : i32
    %188 = vector.broadcast %c0_i32_62 : i32 to vector<8x1xi32>
    %189 = arith.cmpi sge, %187, %188 : vector<8x1xi32>
    %c3_i32_63 = arith.constant 3 : i32
    %190 = vector.broadcast %c3_i32_63 : i32 to vector<8x1xi32>
    %191 = arith.addi %88, %190 : vector<8x1xi32>
    %c8_i32_64 = arith.constant 8 : i32
    %192 = vector.broadcast %c8_i32_64 : i32 to vector<8x1xi32>
    %193 = arith.cmpi slt, %191, %192 : vector<8x1xi32>
    %194 = arith.andi %189, %193 : vector<8x1xi1>
    %cst_65 = arith.constant 0.000000e+00 : f32
    %195 = vector.shape_cast %194 : vector<8x1xi1> to vector<8x1xi1>
    %196 = vector.broadcast %195 : vector<8x1xi1> to vector<8x128xi1>
    %197 = vector.broadcast %cst_65 : f32 to vector<8x128xf32>
    %198 = arith.select %196, %185, %197 : vector<8x128xi1>, vector<8x128xf32>
    %199 = vector.broadcast %184 : vector<1x128xf32> to vector<8x128xf32>
    %200 = arith.mulf %198, %199 : vector<8x128xf32>
    %201 = arith.addf %183, %200 : vector<8x128xf32>
    %c7 = arith.constant 7 : index
    %c0_66 = arith.constant 0 : index
    %202 = vector.load %arg3[%c7, %c0_66] : memref<29x128xf32, #tpu.memory_space<vmem>>, vector<1x128xf32>
    %203 = vector.broadcast %202 : vector<1x128xf32> to vector<8x128xf32>
    %204 = arith.addf %201, %203 : vector<8x128xf32>
    %c8 = arith.constant 8 : index
    %c0_67 = arith.constant 0 : index
    %205 = vector.load %arg3[%c8, %c0_67] : memref<29x128xf32, #tpu.memory_space<vmem>>, vector<1x128xf32>
    %206 = vector.broadcast %205 : vector<1x128xf32> to vector<8x128xf32>
    %207 = arith.mulf %204, %206 : vector<8x128xf32>
    %c9 = arith.constant 9 : index
    %c0_68 = arith.constant 0 : index
    %208 = vector.load %arg3[%c9, %c0_68] : memref<29x128xf32, #tpu.memory_space<vmem>>, vector<1x128xf32>
    %209 = vector.broadcast %208 : vector<1x128xf32> to vector<8x128xf32>
    %210 = arith.addf %207, %209 : vector<8x128xf32>
    %211 = arith.negf %210 : vector<8x128xf32>
    %212 = math.exp %211 : vector<8x128xf32>
    %cst_69 = arith.constant 1.000000e+00 : f32
    %213 = vector.broadcast %cst_69 : f32 to vector<8x128xf32>
    %214 = arith.addf %213, %212 : vector<8x128xf32>
    %215 = arith.divf %213, %214 : vector<8x128xf32>
    %216 = arith.mulf %210, %215 : vector<8x128xf32>
    %217 = arith.truncf %216 : vector<8x128xf32> to vector<8x128xbf16>
    %c0_70 = arith.constant 0 : index
    %c0_71 = arith.constant 0 : index
    %218 = vector.load %arg8[%c0_70, %c0_71] : memref<128x128xbf16, #tpu.memory_space<vmem>>, vector<128x128xbf16>
    %cst_72 = arith.constant dense<0.000000e+00> : vector<8x128xf32>
    %219 = tpu.matmul %217, %218, %cst_72 {dimension_numbers = #tpu.dot_dimension_numbers<[1], [0], [0], [1], [0, 0, 1, 1], [], []>} : vector<8x128xbf16>, vector<128x128xbf16>, vector<8x128xf32> -> vector<8x128xf32>
    %c10 = arith.constant 10 : index
    %c0_73 = arith.constant 0 : index
    %220 = vector.load %arg3[%c10, %c0_73] : memref<29x128xf32, #tpu.memory_space<vmem>>, vector<1x128xf32>
    %221 = vector.broadcast %220 : vector<1x128xf32> to vector<8x128xf32>
    %222 = arith.addf %219, %221 : vector<8x128xf32>
    %223 = arith.addf %222, %46 : vector<8x128xf32>
    %c11 = arith.constant 11 : index
    %c0_74 = arith.constant 0 : index
    %224 = vector.load %arg3[%c11, %c0_74] : memref<29x128xf32, #tpu.memory_space<vmem>>, vector<1x128xf32>
    %c12 = arith.constant 12 : index
    %c0_75 = arith.constant 0 : index
    %225 = vector.load %arg3[%c12, %c0_75] : memref<29x128xf32, #tpu.memory_space<vmem>>, vector<1x128xf32>
    %cst_76 = arith.constant dense<0.000000e+00> : vector<8xf32>
    %226 = vector.multi_reduction <add>, %223, %cst_76 [1] : vector<8x128xf32> to vector<8xf32>
    %227 = vector.shape_cast %226 : vector<8xf32> to vector<8x1xf32>
    %cst_77 = arith.constant 1.280000e+02 : f32
    %228 = vector.broadcast %cst_77 : f32 to vector<8x1xf32>
    %229 = arith.divf %227, %228 : vector<8x1xf32>
    %230 = vector.broadcast %229 : vector<8x1xf32> to vector<8x128xf32>
    %231 = arith.subf %223, %230 : vector<8x128xf32>
    %232 = arith.mulf %231, %231 : vector<8x128xf32>
    %cst_78 = arith.constant dense<0.000000e+00> : vector<8xf32>
    %233 = vector.multi_reduction <add>, %232, %cst_78 [1] : vector<8x128xf32> to vector<8xf32>
    %234 = vector.shape_cast %233 : vector<8xf32> to vector<8x1xf32>
    %cst_79 = arith.constant 1.280000e+02 : f32
    %235 = vector.broadcast %cst_79 : f32 to vector<8x1xf32>
    %236 = arith.divf %234, %235 : vector<8x1xf32>
    %237 = vector.broadcast %229 : vector<8x1xf32> to vector<8x128xf32>
    %238 = arith.subf %223, %237 : vector<8x128xf32>
    %cst_80 = arith.constant 9.99999974E-6 : f32
    %239 = vector.broadcast %cst_80 : f32 to vector<8x1xf32>
    %240 = arith.addf %236, %239 : vector<8x1xf32>
    %241 = math.rsqrt %240 : vector<8x1xf32>
    %242 = vector.broadcast %241 : vector<8x1xf32> to vector<8x128xf32>
    %243 = arith.mulf %238, %242 : vector<8x128xf32>
    %244 = vector.broadcast %224 : vector<1x128xf32> to vector<8x128xf32>
    %245 = arith.mulf %243, %244 : vector<8x128xf32>
    %246 = vector.broadcast %225 : vector<1x128xf32> to vector<8x128xf32>
    %247 = arith.addf %245, %246 : vector<8x128xf32>
    %248 = arith.truncf %247 : vector<8x128xf32> to vector<8x128xbf16>
    %c0_81 = arith.constant 0 : index
    %c0_82 = arith.constant 0 : index
    %249 = vector.load %arg9[%c0_81, %c0_82] : memref<128x384xbf16, #tpu.memory_space<vmem>>, vector<128x384xbf16>
    %cst_83 = arith.constant dense<0.000000e+00> : vector<8x384xf32>
    %250 = tpu.matmul %248, %249, %cst_83 {dimension_numbers = #tpu.dot_dimension_numbers<[1], [0], [0], [1], [0, 0, 1, 1], [], []>} : vector<8x128xbf16>, vector<128x384xbf16>, vector<8x384xf32> -> vector<8x384xf32>
    %251 = vector.extract_strided_slice %250 {offsets = [0, 0], sizes = [8, 128], strides = [1, 1]} : vector<8x384xf32> to vector<8x128xf32>
    %c13 = arith.constant 13 : index
    %c0_84 = arith.constant 0 : index
    %252 = vector.load %arg3[%c13, %c0_84] : memref<29x128xf32, #tpu.memory_space<vmem>>, vector<1x128xf32>
    %253 = vector.broadcast %252 : vector<1x128xf32> to vector<8x128xf32>
    %254 = arith.addf %251, %253 : vector<8x128xf32>
    %255 = vector.extract_strided_slice %250 {offsets = [0, 128], sizes = [8, 128], strides = [1, 1]} : vector<8x384xf32> to vector<8x128xf32>
    %c14 = arith.constant 14 : index
    %c0_85 = arith.constant 0 : index
    %256 = vector.load %arg3[%c14, %c0_85] : memref<29x128xf32, #tpu.memory_space<vmem>>, vector<1x128xf32>
    %257 = vector.broadcast %256 : vector<1x128xf32> to vector<8x128xf32>
    %258 = arith.addf %255, %257 : vector<8x128xf32>
    %259 = vector.extract_strided_slice %250 {offsets = [0, 256], sizes = [8, 128], strides = [1, 1]} : vector<8x384xf32> to vector<8x128xf32>
    %c15 = arith.constant 15 : index
    %c0_86 = arith.constant 0 : index
    %260 = vector.load %arg3[%c15, %c0_86] : memref<29x128xf32, #tpu.memory_space<vmem>>, vector<1x128xf32>
    %261 = vector.broadcast %260 : vector<1x128xf32> to vector<8x128xf32>
    %262 = arith.addf %259, %261 : vector<8x128xf32>
    %263 = tpu.iota {dimensions = array<i32: 1>} : vector<1x8xi32>
    %264 = arith.index_cast %arg0 : i32 to index
    %265 = memref.load %arg1[%264] : memref<2xi32, #tpu.memory_space<smem>>
    %266 = vector.broadcast %265 : i32 to vector<1x8xi32>
    %267 = arith.cmpi slt, %263, %266 : vector<1x8xi32>
    %cst_87 = arith.constant 0.000000e+00 : f32
    %cst_88 = arith.constant -1.000000e+30 : f32
    %268 = vector.broadcast %cst_87 : f32 to vector<1x8xf32>
    %269 = vector.broadcast %cst_88 : f32 to vector<1x8xf32>
    %270 = arith.select %267, %268, %269 : vector<1x8xi1>, vector<1x8xf32>
    %cst_89 = arith.constant 0.000000e+00 : f32
    %271 = vector.broadcast %cst_89 : f32 to vector<8x128xf32>
    %c16 = arith.constant 16 : index
    %c0_90 = arith.constant 0 : index
    %272 = vector.load %arg3[%c16, %c0_90] : memref<29x128xf32, #tpu.memory_space<vmem>>, vector<1x128xf32>
    %273 = vector.broadcast %272 : vector<1x128xf32> to vector<8x128xf32>
    %274 = arith.addf %271, %273 : vector<8x128xf32>
    %275 = vector.extract_strided_slice %254 {offsets = [0, 0], sizes = [8, 32], strides = [1, 1]} : vector<8x128xf32> to vector<8x32xf32>
    %cst_91 = arith.constant 0.176776692 : f32
    %276 = vector.broadcast %cst_91 : f32 to vector<8x32xf32>
    %277 = arith.mulf %275, %276 : vector<8x32xf32>
    %278 = arith.truncf %277 : vector<8x32xf32> to vector<8x32xbf16>
    %279 = vector.extract_strided_slice %258 {offsets = [0, 0], sizes = [8, 32], strides = [1, 1]} : vector<8x128xf32> to vector<8x32xf32>
    %280 = arith.truncf %279 : vector<8x32xf32> to vector<8x32xbf16>
    %281 = vector.extract_strided_slice %262 {offsets = [0, 0], sizes = [8, 32], strides = [1, 1]} : vector<8x128xf32> to vector<8x32xf32>
    %282 = arith.truncf %281 : vector<8x32xf32> to vector<8x32xbf16>
    %cst_92 = arith.constant dense<0.000000e+00> : vector<8x8xf32>
    %283 = tpu.matmul %278, %280, %cst_92 {dimension_numbers = #tpu.dot_dimension_numbers<[1], [1], [0], [0], [0, 0, 1, 0], [], []>} : vector<8x32xbf16>, vector<8x32xbf16>, vector<8x8xf32> -> vector<8x8xf32>
    %284 = vector.broadcast %270 : vector<1x8xf32> to vector<8x8xf32>
    %285 = arith.addf %283, %284 : vector<8x8xf32>
    %cst_93 = arith.constant dense<0xFF800000> : vector<8xf32>
    %286 = vector.multi_reduction <maximumf>, %285, %cst_93 [1] : vector<8x8xf32> to vector<8xf32>
    %287 = vector.shape_cast %286 : vector<8xf32> to vector<8x1xf32>
    %288 = vector.broadcast %287 : vector<8x1xf32> to vector<8x8xf32>
    %289 = arith.subf %285, %288 : vector<8x8xf32>
    %290 = math.exp %289 : vector<8x8xf32>
    %cst_94 = arith.constant dense<0.000000e+00> : vector<8xf32>
    %291 = vector.multi_reduction <add>, %290, %cst_94 [1] : vector<8x8xf32> to vector<8xf32>
    %292 = vector.shape_cast %291 : vector<8xf32> to vector<8x1xf32>
    %293 = tpu.reciprocal %292 {approx = true} : vector<8x1xf32> -> vector<8x1xf32>
    %294 = vector.broadcast %293 : vector<8x1xf32> to vector<8x8xf32>
    %295 = arith.mulf %290, %294 : vector<8x8xf32>
    %296 = arith.truncf %295 : vector<8x8xf32> to vector<8x8xbf16>
    %cst_95 = arith.constant dense<0.000000e+00> : vector<8x32xf32>
    %297 = tpu.matmul %296, %282, %cst_95 {dimension_numbers = #tpu.dot_dimension_numbers<[1], [0], [0], [1], [0, 0, 1, 1], [], []>} : vector<8x8xbf16>, vector<8x32xbf16>, vector<8x32xf32> -> vector<8x32xf32>
    %298 = arith.truncf %297 : vector<8x32xf32> to vector<8x32xbf16>
    %c0_96 = arith.constant 0 : index
    %c0_97 = arith.constant 0 : index
    %299 = vector.load %arg10[%c0_96, %c0_97] : memref<128x128xbf16, #tpu.memory_space<vmem>>, vector<32x128xbf16>
    %cst_98 = arith.constant dense<0.000000e+00> : vector<8x128xf32>
    %300 = tpu.matmul %298, %299, %cst_98 {dimension_numbers = #tpu.dot_dimension_numbers<[1], [0], [0], [1], [0, 0, 1, 1], [], []>} : vector<8x32xbf16>, vector<32x128xbf16>, vector<8x128xf32> -> vector<8x128xf32>
    %301 = arith.addf %274, %300 : vector<8x128xf32>
    %302 = vector.extract_strided_slice %254 {offsets = [0, 32], sizes = [8, 32], strides = [1, 1]} : vector<8x128xf32> to vector<8x32xf32>
    %cst_99 = arith.constant 0.176776692 : f32
    %303 = vector.broadcast %cst_99 : f32 to vector<8x32xf32>
    %304 = arith.mulf %302, %303 : vector<8x32xf32>
    %305 = arith.truncf %304 : vector<8x32xf32> to vector<8x32xbf16>
    %306 = vector.extract_strided_slice %258 {offsets = [0, 32], sizes = [8, 32], strides = [1, 1]} : vector<8x128xf32> to vector<8x32xf32>
    %307 = arith.truncf %306 : vector<8x32xf32> to vector<8x32xbf16>
    %308 = vector.extract_strided_slice %262 {offsets = [0, 32], sizes = [8, 32], strides = [1, 1]} : vector<8x128xf32> to vector<8x32xf32>
    %309 = arith.truncf %308 : vector<8x32xf32> to vector<8x32xbf16>
    %cst_100 = arith.constant dense<0.000000e+00> : vector<8x8xf32>
    %310 = tpu.matmul %305, %307, %cst_100 {dimension_numbers = #tpu.dot_dimension_numbers<[1], [1], [0], [0], [0, 0, 1, 0], [], []>} : vector<8x32xbf16>, vector<8x32xbf16>, vector<8x8xf32> -> vector<8x8xf32>
    %311 = vector.broadcast %270 : vector<1x8xf32> to vector<8x8xf32>
    %312 = arith.addf %310, %311 : vector<8x8xf32>
    %cst_101 = arith.constant dense<0xFF800000> : vector<8xf32>
    %313 = vector.multi_reduction <maximumf>, %312, %cst_101 [1] : vector<8x8xf32> to vector<8xf32>
    %314 = vector.shape_cast %313 : vector<8xf32> to vector<8x1xf32>
    %315 = vector.broadcast %314 : vector<8x1xf32> to vector<8x8xf32>
    %316 = arith.subf %312, %315 : vector<8x8xf32>
    %317 = math.exp %316 : vector<8x8xf32>
    %cst_102 = arith.constant dense<0.000000e+00> : vector<8xf32>
    %318 = vector.multi_reduction <add>, %317, %cst_102 [1] : vector<8x8xf32> to vector<8xf32>
    %319 = vector.shape_cast %318 : vector<8xf32> to vector<8x1xf32>
    %320 = tpu.reciprocal %319 {approx = true} : vector<8x1xf32> -> vector<8x1xf32>
    %321 = vector.broadcast %320 : vector<8x1xf32> to vector<8x8xf32>
    %322 = arith.mulf %317, %321 : vector<8x8xf32>
    %323 = arith.truncf %322 : vector<8x8xf32> to vector<8x8xbf16>
    %cst_103 = arith.constant dense<0.000000e+00> : vector<8x32xf32>
    %324 = tpu.matmul %323, %309, %cst_103 {dimension_numbers = #tpu.dot_dimension_numbers<[1], [0], [0], [1], [0, 0, 1, 1], [], []>} : vector<8x8xbf16>, vector<8x32xbf16>, vector<8x32xf32> -> vector<8x32xf32>
    %325 = arith.truncf %324 : vector<8x32xf32> to vector<8x32xbf16>
    %c32 = arith.constant 32 : index
    %c0_104 = arith.constant 0 : index
    %326 = vector.load %arg10[%c32, %c0_104] : memref<128x128xbf16, #tpu.memory_space<vmem>>, vector<32x128xbf16>
    %cst_105 = arith.constant dense<0.000000e+00> : vector<8x128xf32>
    %327 = tpu.matmul %325, %326, %cst_105 {dimension_numbers = #tpu.dot_dimension_numbers<[1], [0], [0], [1], [0, 0, 1, 1], [], []>} : vector<8x32xbf16>, vector<32x128xbf16>, vector<8x128xf32> -> vector<8x128xf32>
    %328 = arith.addf %301, %327 : vector<8x128xf32>
    %329 = vector.extract_strided_slice %254 {offsets = [0, 64], sizes = [8, 32], strides = [1, 1]} : vector<8x128xf32> to vector<8x32xf32>
    %cst_106 = arith.constant 0.176776692 : f32
    %330 = vector.broadcast %cst_106 : f32 to vector<8x32xf32>
    %331 = arith.mulf %329, %330 : vector<8x32xf32>
    %332 = arith.truncf %331 : vector<8x32xf32> to vector<8x32xbf16>
    %333 = vector.extract_strided_slice %258 {offsets = [0, 64], sizes = [8, 32], strides = [1, 1]} : vector<8x128xf32> to vector<8x32xf32>
    %334 = arith.truncf %333 : vector<8x32xf32> to vector<8x32xbf16>
    %335 = vector.extract_strided_slice %262 {offsets = [0, 64], sizes = [8, 32], strides = [1, 1]} : vector<8x128xf32> to vector<8x32xf32>
    %336 = arith.truncf %335 : vector<8x32xf32> to vector<8x32xbf16>
    %cst_107 = arith.constant dense<0.000000e+00> : vector<8x8xf32>
    %337 = tpu.matmul %332, %334, %cst_107 {dimension_numbers = #tpu.dot_dimension_numbers<[1], [1], [0], [0], [0, 0, 1, 0], [], []>} : vector<8x32xbf16>, vector<8x32xbf16>, vector<8x8xf32> -> vector<8x8xf32>
    %338 = vector.broadcast %270 : vector<1x8xf32> to vector<8x8xf32>
    %339 = arith.addf %337, %338 : vector<8x8xf32>
    %cst_108 = arith.constant dense<0xFF800000> : vector<8xf32>
    %340 = vector.multi_reduction <maximumf>, %339, %cst_108 [1] : vector<8x8xf32> to vector<8xf32>
    %341 = vector.shape_cast %340 : vector<8xf32> to vector<8x1xf32>
    %342 = vector.broadcast %341 : vector<8x1xf32> to vector<8x8xf32>
    %343 = arith.subf %339, %342 : vector<8x8xf32>
    %344 = math.exp %343 : vector<8x8xf32>
    %cst_109 = arith.constant dense<0.000000e+00> : vector<8xf32>
    %345 = vector.multi_reduction <add>, %344, %cst_109 [1] : vector<8x8xf32> to vector<8xf32>
    %346 = vector.shape_cast %345 : vector<8xf32> to vector<8x1xf32>
    %347 = tpu.reciprocal %346 {approx = true} : vector<8x1xf32> -> vector<8x1xf32>
    %348 = vector.broadcast %347 : vector<8x1xf32> to vector<8x8xf32>
    %349 = arith.mulf %344, %348 : vector<8x8xf32>
    %350 = arith.truncf %349 : vector<8x8xf32> to vector<8x8xbf16>
    %cst_110 = arith.constant dense<0.000000e+00> : vector<8x32xf32>
    %351 = tpu.matmul %350, %336, %cst_110 {dimension_numbers = #tpu.dot_dimension_numbers<[1], [0], [0], [1], [0, 0, 1, 1], [], []>} : vector<8x8xbf16>, vector<8x32xbf16>, vector<8x32xf32> -> vector<8x32xf32>
    %352 = arith.truncf %351 : vector<8x32xf32> to vector<8x32xbf16>
    %c64 = arith.constant 64 : index
    %c0_111 = arith.constant 0 : index
    %353 = vector.load %arg10[%c64, %c0_111] : memref<128x128xbf16, #tpu.memory_space<vmem>>, vector<32x128xbf16>
    %cst_112 = arith.constant dense<0.000000e+00> : vector<8x128xf32>
    %354 = tpu.matmul %352, %353, %cst_112 {dimension_numbers = #tpu.dot_dimension_numbers<[1], [0], [0], [1], [0, 0, 1, 1], [], []>} : vector<8x32xbf16>, vector<32x128xbf16>, vector<8x128xf32> -> vector<8x128xf32>
    %355 = arith.addf %328, %354 : vector<8x128xf32>
    %356 = vector.extract_strided_slice %254 {offsets = [0, 96], sizes = [8, 32], strides = [1, 1]} : vector<8x128xf32> to vector<8x32xf32>
    %cst_113 = arith.constant 0.176776692 : f32
    %357 = vector.broadcast %cst_113 : f32 to vector<8x32xf32>
    %358 = arith.mulf %356, %357 : vector<8x32xf32>
    %359 = arith.truncf %358 : vector<8x32xf32> to vector<8x32xbf16>
    %360 = vector.extract_strided_slice %258 {offsets = [0, 96], sizes = [8, 32], strides = [1, 1]} : vector<8x128xf32> to vector<8x32xf32>
    %361 = arith.truncf %360 : vector<8x32xf32> to vector<8x32xbf16>
    %362 = vector.extract_strided_slice %262 {offsets = [0, 96], sizes = [8, 32], strides = [1, 1]} : vector<8x128xf32> to vector<8x32xf32>
    %363 = arith.truncf %362 : vector<8x32xf32> to vector<8x32xbf16>
    %cst_114 = arith.constant dense<0.000000e+00> : vector<8x8xf32>
    %364 = tpu.matmul %359, %361, %cst_114 {dimension_numbers = #tpu.dot_dimension_numbers<[1], [1], [0], [0], [0, 0, 1, 0], [], []>} : vector<8x32xbf16>, vector<8x32xbf16>, vector<8x8xf32> -> vector<8x8xf32>
    %365 = vector.broadcast %270 : vector<1x8xf32> to vector<8x8xf32>
    %366 = arith.addf %364, %365 : vector<8x8xf32>
    %cst_115 = arith.constant dense<0xFF800000> : vector<8xf32>
    %367 = vector.multi_reduction <maximumf>, %366, %cst_115 [1] : vector<8x8xf32> to vector<8xf32>
    %368 = vector.shape_cast %367 : vector<8xf32> to vector<8x1xf32>
    %369 = vector.broadcast %368 : vector<8x1xf32> to vector<8x8xf32>
    %370 = arith.subf %366, %369 : vector<8x8xf32>
    %371 = math.exp %370 : vector<8x8xf32>
    %cst_116 = arith.constant dense<0.000000e+00> : vector<8xf32>
    %372 = vector.multi_reduction <add>, %371, %cst_116 [1] : vector<8x8xf32> to vector<8xf32>
    %373 = vector.shape_cast %372 : vector<8xf32> to vector<8x1xf32>
    %374 = tpu.reciprocal %373 {approx = true} : vector<8x1xf32> -> vector<8x1xf32>
    %375 = vector.broadcast %374 : vector<8x1xf32> to vector<8x8xf32>
    %376 = arith.mulf %371, %375 : vector<8x8xf32>
    %377 = arith.truncf %376 : vector<8x8xf32> to vector<8x8xbf16>
    %cst_117 = arith.constant dense<0.000000e+00> : vector<8x32xf32>
    %378 = tpu.matmul %377, %363, %cst_117 {dimension_numbers = #tpu.dot_dimension_numbers<[1], [0], [0], [1], [0, 0, 1, 1], [], []>} : vector<8x8xbf16>, vector<8x32xbf16>, vector<8x32xf32> -> vector<8x32xf32>
    %379 = arith.truncf %378 : vector<8x32xf32> to vector<8x32xbf16>
    %c96 = arith.constant 96 : index
    %c0_118 = arith.constant 0 : index
    %380 = vector.load %arg10[%c96, %c0_118] : memref<128x128xbf16, #tpu.memory_space<vmem>>, vector<32x128xbf16>
    %cst_119 = arith.constant dense<0.000000e+00> : vector<8x128xf32>
    %381 = tpu.matmul %379, %380, %cst_119 {dimension_numbers = #tpu.dot_dimension_numbers<[1], [0], [0], [1], [0, 0, 1, 1], [], []>} : vector<8x32xbf16>, vector<32x128xbf16>, vector<8x128xf32> -> vector<8x128xf32>
    %382 = arith.addf %355, %381 : vector<8x128xf32>
    %383 = arith.addf %382, %223 : vector<8x128xf32>
    %c17 = arith.constant 17 : index
    %c0_120 = arith.constant 0 : index
    %384 = vector.load %arg3[%c17, %c0_120] : memref<29x128xf32, #tpu.memory_space<vmem>>, vector<1x128xf32>
    %c18 = arith.constant 18 : index
    %c0_121 = arith.constant 0 : index
    %385 = vector.load %arg3[%c18, %c0_121] : memref<29x128xf32, #tpu.memory_space<vmem>>, vector<1x128xf32>
    %cst_122 = arith.constant dense<0.000000e+00> : vector<8xf32>
    %386 = vector.multi_reduction <add>, %383, %cst_122 [1] : vector<8x128xf32> to vector<8xf32>
    %387 = vector.shape_cast %386 : vector<8xf32> to vector<8x1xf32>
    %cst_123 = arith.constant 1.280000e+02 : f32
    %388 = vector.broadcast %cst_123 : f32 to vector<8x1xf32>
    %389 = arith.divf %387, %388 : vector<8x1xf32>
    %390 = vector.broadcast %389 : vector<8x1xf32> to vector<8x128xf32>
    %391 = arith.subf %383, %390 : vector<8x128xf32>
    %392 = arith.mulf %391, %391 : vector<8x128xf32>
    %cst_124 = arith.constant dense<0.000000e+00> : vector<8xf32>
    %393 = vector.multi_reduction <add>, %392, %cst_124 [1] : vector<8x128xf32> to vector<8xf32>
    %394 = vector.shape_cast %393 : vector<8xf32> to vector<8x1xf32>
    %cst_125 = arith.constant 1.280000e+02 : f32
    %395 = vector.broadcast %cst_125 : f32 to vector<8x1xf32>
    %396 = arith.divf %394, %395 : vector<8x1xf32>
    %397 = vector.broadcast %389 : vector<8x1xf32> to vector<8x128xf32>
    %398 = arith.subf %383, %397 : vector<8x128xf32>
    %cst_126 = arith.constant 9.99999974E-6 : f32
    %399 = vector.broadcast %cst_126 : f32 to vector<8x1xf32>
    %400 = arith.addf %396, %399 : vector<8x1xf32>
    %401 = math.rsqrt %400 : vector<8x1xf32>
    %402 = vector.broadcast %401 : vector<8x1xf32> to vector<8x128xf32>
    %403 = arith.mulf %398, %402 : vector<8x128xf32>
    %404 = vector.broadcast %384 : vector<1x128xf32> to vector<8x128xf32>
    %405 = arith.mulf %403, %404 : vector<8x128xf32>
    %406 = vector.broadcast %385 : vector<1x128xf32> to vector<8x128xf32>
    %407 = arith.addf %405, %406 : vector<8x128xf32>
    %408 = arith.truncf %407 : vector<8x128xf32> to vector<8x128xbf16>
    %c0_127 = arith.constant 0 : index
    %c0_128 = arith.constant 0 : index
    %409 = vector.load %arg11[%c0_127, %c0_128] : memref<128x256xbf16, #tpu.memory_space<vmem>>, vector<128x256xbf16>
    %cst_129 = arith.constant dense<0.000000e+00> : vector<8x256xf32>
    %410 = tpu.matmul %408, %409, %cst_129 {dimension_numbers = #tpu.dot_dimension_numbers<[1], [0], [0], [1], [0, 0, 1, 1], [], []>} : vector<8x128xbf16>, vector<128x256xbf16>, vector<8x256xf32> -> vector<8x256xf32>
    %c1_130 = arith.constant 1 : index
    %c0_131 = arith.constant 0 : index
    %411 = vector.load %arg4[%c1_130, %c0_131] : memref<2x256xf32, #tpu.memory_space<vmem>>, vector<1x256xf32>
    %412 = vector.broadcast %411 : vector<1x256xf32> to vector<8x256xf32>
    %413 = arith.addf %410, %412 : vector<8x256xf32>
    %414 = arith.negf %413 : vector<8x256xf32>
    %415 = math.exp %414 : vector<8x256xf32>
    %cst_132 = arith.constant 1.000000e+00 : f32
    %416 = vector.broadcast %cst_132 : f32 to vector<8x256xf32>
    %417 = arith.addf %416, %415 : vector<8x256xf32>
    %418 = arith.divf %416, %417 : vector<8x256xf32>
    %419 = arith.mulf %413, %418 : vector<8x256xf32>
    %420 = arith.truncf %419 : vector<8x256xf32> to vector<8x256xbf16>
    %c0_133 = arith.constant 0 : index
    %c0_134 = arith.constant 0 : index
    %421 = vector.load %arg12[%c0_133, %c0_134] : memref<256x128xbf16, #tpu.memory_space<vmem>>, vector<256x128xbf16>
    %cst_135 = arith.constant dense<0.000000e+00> : vector<8x128xf32>
    %422 = tpu.matmul %420, %421, %cst_135 {dimension_numbers = #tpu.dot_dimension_numbers<[1], [0], [0], [1], [0, 0, 1, 1], [], []>} : vector<8x256xbf16>, vector<256x128xbf16>, vector<8x128xf32> -> vector<8x128xf32>
    %c19 = arith.constant 19 : index
    %c0_136 = arith.constant 0 : index
    %423 = vector.load %arg3[%c19, %c0_136] : memref<29x128xf32, #tpu.memory_space<vmem>>, vector<1x128xf32>
    %424 = vector.broadcast %423 : vector<1x128xf32> to vector<8x128xf32>
    %425 = arith.addf %422, %424 : vector<8x128xf32>
    %cst_137 = arith.constant 5.000000e-01 : f32
    %426 = vector.broadcast %cst_137 : f32 to vector<8x128xf32>
    %427 = arith.mulf %426, %425 : vector<8x128xf32>
    %428 = arith.addf %427, %383 : vector<8x128xf32>
    %c20 = arith.constant 20 : index
    %c0_138 = arith.constant 0 : index
    %429 = vector.load %arg3[%c20, %c0_138] : memref<29x128xf32, #tpu.memory_space<vmem>>, vector<1x128xf32>
    %c21 = arith.constant 21 : index
    %c0_139 = arith.constant 0 : index
    %430 = vector.load %arg3[%c21, %c0_139] : memref<29x128xf32, #tpu.memory_space<vmem>>, vector<1x128xf32>
    %cst_140 = arith.constant dense<0.000000e+00> : vector<8xf32>
    %431 = vector.multi_reduction <add>, %428, %cst_140 [1] : vector<8x128xf32> to vector<8xf32>
    %432 = vector.shape_cast %431 : vector<8xf32> to vector<8x1xf32>
    %cst_141 = arith.constant 1.280000e+02 : f32
    %433 = vector.broadcast %cst_141 : f32 to vector<8x1xf32>
    %434 = arith.divf %432, %433 : vector<8x1xf32>
    %435 = vector.broadcast %434 : vector<8x1xf32> to vector<8x128xf32>
    %436 = arith.subf %428, %435 : vector<8x128xf32>
    %437 = arith.mulf %436, %436 : vector<8x128xf32>
    %cst_142 = arith.constant dense<0.000000e+00> : vector<8xf32>
    %438 = vector.multi_reduction <add>, %437, %cst_142 [1] : vector<8x128xf32> to vector<8xf32>
    %439 = vector.shape_cast %438 : vector<8xf32> to vector<8x1xf32>
    %cst_143 = arith.constant 1.280000e+02 : f32
    %440 = vector.broadcast %cst_143 : f32 to vector<8x1xf32>
    %441 = arith.divf %439, %440 : vector<8x1xf32>
    %442 = vector.broadcast %434 : vector<8x1xf32> to vector<8x128xf32>
    %443 = arith.subf %428, %442 : vector<8x128xf32>
    %cst_144 = arith.constant 9.99999974E-6 : f32
    %444 = vector.broadcast %cst_144 : f32 to vector<8x1xf32>
    %445 = arith.addf %441, %444 : vector<8x1xf32>
    %446 = math.rsqrt %445 : vector<8x1xf32>
    %447 = vector.broadcast %446 : vector<8x1xf32> to vector<8x128xf32>
    %448 = arith.mulf %443, %447 : vector<8x128xf32>
    %449 = vector.broadcast %429 : vector<1x128xf32> to vector<8x128xf32>
    %450 = arith.mulf %448, %449 : vector<8x128xf32>
    %451 = vector.broadcast %430 : vector<1x128xf32> to vector<8x128xf32>
    %452 = arith.addf %450, %451 : vector<8x128xf32>
    %c0_145 = arith.constant 0 : index
    %c0_146 = arith.constant 0 : index
    %c0_147 = arith.constant 0 : index
    %453 = vector.load %arg13[%c0_145, %c0_146, %c0_147] : memref<1x8x128xf32, #tpu.memory_space<vmem>>, vector<1x8x128xf32>
    %454 = vector.shape_cast %453 : vector<1x8x128xf32> to vector<8x128xf32>
    %455 = vector.shape_cast %452 : vector<8x128xf32> to vector<1x8x128xf32>
    tpu.vector_store %arg13[%c0_145, %c0_146, %c0_147], %455 {strides = array<i32>} : memref<1x8x128xf32, #tpu.memory_space<vmem>>, vector<1x8x128xf32>,
    return
  }
  func.func @transform_0(%arg0: i32, %arg1: memref<2xi32, #tpu.memory_space<smem>>) -> (i32, i32, i32) {
    %c0_i32 = arith.constant 0 : i32
    %c0_i32_0 = arith.constant 0 : i32
    %c0_i32_1 = arith.constant 0 : i32
    return %arg0, %c0_i32, %c0_i32_0 : i32, i32, i32
  }
  func.func @transform_1(%arg0: i32, %arg1: memref<2xi32, #tpu.memory_space<smem>>) -> (i32, i32) {
    %c0_i32 = arith.constant 0 : i32
    %c0_i32_0 = arith.constant 0 : i32
    %c0_i32_1 = arith.constant 0 : i32
    return %c0_i32, %c0_i32_0 : i32, i32
  }
  func.func @transform_2(%arg0: i32, %arg1: memref<2xi32, #tpu.memory_space<smem>>) -> (i32, i32) {
    %c0_i32 = arith.constant 0 : i32
    %c0_i32_0 = arith.constant 0 : i32
    %c0_i32_1 = arith.constant 0 : i32
    return %c0_i32, %c0_i32_0 : i32, i32
  }
  func.func @transform_3(%arg0: i32, %arg1: memref<2xi32, #tpu.memory_space<smem>>) -> (i32, i32) {
    %c0_i32 = arith.constant 0 : i32
    %c0_i32_0 = arith.constant 0 : i32
    %c0_i32_1 = arith.constant 0 : i32
    return %c0_i32, %c0_i32_0 : i32, i32
  }
  func.func @transform_4(%arg0: i32, %arg1: memref<2xi32, #tpu.memory_space<smem>>) -> (i32, i32) {
    %c0_i32 = arith.constant 0 : i32
    %c0_i32_0 = arith.constant 0 : i32
    %c0_i32_1 = arith.constant 0 : i32
    return %c0_i32, %c0_i32_0 : i32, i32
  }
  func.func @transform_5(%arg0: i32, %arg1: memref<2xi32, #tpu.memory_space<smem>>) -> (i32, i32) {
    %c0_i32 = arith.constant 0 : i32
    %c0_i32_0 = arith.constant 0 : i32
    %c0_i32_1 = arith.constant 0 : i32
    return %c0_i32, %c0_i32_0 : i32, i32
  }
  func.func @transform_6(%arg0: i32, %arg1: memref<2xi32, #tpu.memory_space<smem>>) -> (i32, i32) {
    %c0_i32 = arith.constant 0 : i32
    %c0_i32_0 = arith.constant 0 : i32
    %c0_i32_1 = arith.constant 0 : i32
    return %c0_i32, %c0_i32_0 : i32, i32
  }
  func.func @transform_7(%arg0: i32, %arg1: memref<2xi32, #tpu.memory_space<smem>>) -> (i32, i32) {
    %c0_i32 = arith.constant 0 : i32
    %c0_i32_0 = arith.constant 0 : i32
    %c0_i32_1 = arith.constant 0 : i32
    return %c0_i32, %c0_i32_0 : i32, i32
  }
  func.func @transform_8(%arg0: i32, %arg1: memref<2xi32, #tpu.memory_space<smem>>) -> (i32, i32) {
    %c0_i32 = arith.constant 0 : i32
    %c0_i32_0 = arith.constant 0 : i32
    %c0_i32_1 = arith.constant 0 : i32
    return %c0_i32, %c0_i32_0 : i32, i32
  }
  func.func @transform_9(%arg0: i32, %arg1: memref<2xi32, #tpu.memory_space<smem>>) -> (i32, i32) {
    %c0_i32 = arith.constant 0 : i32
    %c0_i32_0 = arith.constant 0 : i32
    %c0_i32_1 = arith.constant 0 : i32
    return %c0_i32, %c0_i32_0 : i32, i32
  }
  func.func @transform_10(%arg0: i32, %arg1: memref<2xi32, #tpu.memory_space<smem>>) -> (i32, i32) {
    %c0_i32 = arith.constant 0 : i32
    %c0_i32_0 = arith.constant 0 : i32
    %c0_i32_1 = arith.constant 0 : i32
    return %c0_i32, %c0_i32_0 : i32, i32
  }
  func.func @transform_11(%arg0: i32, %arg1: memref<2xi32, #tpu.memory_space<smem>>) -> (i32, i32, i32) {
    %c0_i32 = arith.constant 0 : i32
    %c0_i32_0 = arith.constant 0 : i32
    %c0_i32_1 = arith.constant 0 : i32
    return %arg0, %c0_i32, %c0_i32_0 : i32, i32, i32
  }
}

module attributes {stable_mosaic.version = 11 : i64} {
  func.func @_head_kernel(%arg0: i32, %arg1: memref<1x8x128xf32, #tpu.memory_space<vmem>>, %arg2: memref<128x128xbf16, #tpu.memory_space<vmem>>, %arg3: memref<1x128xf32, #tpu.memory_space<vmem>>, %arg4: memref<1x8x128xf32, #tpu.memory_space<vmem>>) attributes {dimension_semantics = [#tpu.dimension_semantics<parallel>], iteration_bounds = array<i64: 2>, scalar_prefetch = 0 : i64, scratch_operands = 0 : i64, tpu.core_type = #tpu.core_type<tc>, window_params = [{transform_indices = @transform_0, window_bounds = array<i64: 1, 8, 128>}, {pipeline_mode = #tpu.pipeline_mode<synchronous>, transform_indices = @transform_1, window_bounds = array<i64: 128, 128>}, {pipeline_mode = #tpu.pipeline_mode<synchronous>, transform_indices = @transform_2, window_bounds = array<i64: 1, 128>}, {transform_indices = @transform_3, window_bounds = array<i64: 1, 8, 128>}]} {
    %c0 = arith.constant 0 : index
    %c0_0 = arith.constant 0 : index
    %c0_1 = arith.constant 0 : index
    %0 = vector.load %arg1[%c0, %c0_0, %c0_1] : memref<1x8x128xf32, #tpu.memory_space<vmem>>, vector<1x8x128xf32>
    %1 = vector.shape_cast %0 : vector<1x8x128xf32> to vector<8x128xf32>
    %2 = arith.truncf %1 : vector<8x128xf32> to vector<8x128xbf16>
    %c0_2 = arith.constant 0 : index
    %c0_3 = arith.constant 0 : index
    %3 = vector.load %arg2[%c0_2, %c0_3] : memref<128x128xbf16, #tpu.memory_space<vmem>>, vector<128x128xbf16>
    %cst = arith.constant dense<0.000000e+00> : vector<8x128xf32>
    %4 = tpu.matmul %2, %3, %cst {dimension_numbers = #tpu.dot_dimension_numbers<[1], [0], [0], [1], [0, 0, 1, 1], [], []>} : vector<8x128xbf16>, vector<128x128xbf16>, vector<8x128xf32> -> vector<8x128xf32>
    %c0_4 = arith.constant 0 : index
    %c0_5 = arith.constant 0 : index
    %5 = vector.load %arg3[%c0_4, %c0_5] : memref<1x128xf32, #tpu.memory_space<vmem>>, vector<1x128xf32>
    %6 = vector.broadcast %5 : vector<1x128xf32> to vector<8x128xf32>
    %7 = arith.addf %4, %6 : vector<8x128xf32>
    %cst_6 = arith.constant dense<0xFF800000> : vector<8xf32>
    %8 = vector.multi_reduction <maximumf>, %7, %cst_6 [1] : vector<8x128xf32> to vector<8xf32>
    %9 = vector.shape_cast %8 : vector<8xf32> to vector<8x1xf32>
    %10 = vector.broadcast %9 : vector<8x1xf32> to vector<8x128xf32>
    %11 = arith.subf %7, %10 : vector<8x128xf32>
    %12 = math.exp %11 : vector<8x128xf32>
    %cst_7 = arith.constant dense<0.000000e+00> : vector<8xf32>
    %13 = vector.multi_reduction <add>, %12, %cst_7 [1] : vector<8x128xf32> to vector<8xf32>
    %14 = vector.shape_cast %13 : vector<8xf32> to vector<8x1xf32>
    %15 = math.log %14 : vector<8x1xf32>
    %16 = arith.addf %15, %9 : vector<8x1xf32>
    %17 = vector.broadcast %16 : vector<8x1xf32> to vector<8x128xf32>
    %18 = arith.subf %7, %17 : vector<8x128xf32>
    %c0_8 = arith.constant 0 : index
    %c0_9 = arith.constant 0 : index
    %c0_10 = arith.constant 0 : index
    %19 = vector.load %arg4[%c0_8, %c0_9, %c0_10] : memref<1x8x128xf32, #tpu.memory_space<vmem>>, vector<1x8x128xf32>
    %20 = vector.shape_cast %19 : vector<1x8x128xf32> to vector<8x128xf32>
    %21 = vector.shape_cast %18 : vector<8x128xf32> to vector<1x8x128xf32>
    tpu.vector_store %arg4[%c0_8, %c0_9, %c0_10], %21 {strides = array<i32>} : memref<1x8x128xf32, #tpu.memory_space<vmem>>, vector<1x8x128xf32>,
    return
  }
  func.func @transform_0(%arg0: i32) -> (i32, i32, i32) {
    %c0_i32 = arith.constant 0 : i32
    %c0_i32_0 = arith.constant 0 : i32
    %c0_i32_1 = arith.constant 0 : i32
    return %arg0, %c0_i32, %c0_i32_0 : i32, i32, i32
  }
  func.func @transform_1(%arg0: i32) -> (i32, i32) {
    %c0_i32 = arith.constant 0 : i32
    %c0_i32_0 = arith.constant 0 : i32
    %c0_i32_1 = arith.constant 0 : i32
    return %c0_i32, %c0_i32_0 : i32, i32
  }
  func.func @transform_2(%arg0: i32) -> (i32, i32) {
    %c0_i32 = arith.constant 0 : i32
    %c0_i32_0 = arith.constant 0 : i32
    %c0_i32_1 = arith.constant 0 : i32
    return %c0_i32, %c0_i32_0 : i32, i32
  }
  func.func @transform_3(%arg0: i32) -> (i32, i32, i32) {
    %c0_i32 = arith.constant 0 : i32
    %c0_i32_0 = arith.constant 0 : i32
    %c0_i32_1 = arith.constant 0 : i32
    return %arg0, %c0_i32, %c0_i32_0 : i32, i32, i32
  }
}

</mosaic_0001>

<llo_original>
// kernel: fwd.9
$region0: #{fwd.9}
  #allocation0 [shape = 'u32[]', space=smem, size = 0x4, offset = 0x4, fixed_abs, tag = 'smem constant byte address 0x4 - core index']
  #allocation1 [shape = 'u32[144,128]{1,0:T(1,128)}', space=vmem, size = 0x12000, scoped, tag = 'internal scratch']
  %s0 = inlined_call_operand.vmem [shape: f32[2,34,8], index: 0, kind: input, shape index: {}]
  %s1 = inlined_call_operand.vmem [shape: bf16[3,8,128], index: 1, kind: input, shape index: {}]
  %s2 = inlined_call_operand.vmem [shape: f32[1,128], index: 2, kind: input, shape index: {}]
  %s3 = inlined_call_operand.vmem [shape: f32[2,32,128], index: 3, kind: output, shape index: {}]
  %s4 = sld [smem:[#allocation0]]
  $region45: #{fwd.9} parent=0
    _
  %s6 = ssub.s32 1, %s4
  %s7 = scalar_select 0, %s6, %s4
  loop: start=0, step=1, limit=4
  $region2: #{fwd.9} parent=0 // loop_pre_header
    _
  $region3: #{fwd.9} parent=0 // loop_header
    %s9 = sphi 0, %s13
    %p10 = scmp.ge.s32.totalorder %s9, 4
    %s19 = sphi 0, %s21
    %s22 = sphi 0, %s19
    %s23 = sphi 0, %s22
    %s39 = sphi 0, %s23
    %s43 = sphi 0, %s43
    %s45 = sphi 0, %s43
    %s46 = sphi 0, %s45
    %s60 = sphi 0, %s46
    %s64 = sphi 0, %s64
    %s66 = sphi 0, %s64
    %s67 = sphi 0, %s66
    %s81 = sphi 0, %s67
    %s87 = sphi 0, %s89
    %s90 = sphi 0, %s87
    %s91 = sphi 0, %s90
    %s107 = sphi 0, %s91
  $region4: #{fwd.9} parent=0 // loop_header_branch
    %12 = sbr.rel (%p10) target = $region8
  $region5: #{fwd.9} parent=0 // loop_body
    %s14 = ssub.s32 %s9, 1
    %s15 = ssub.s32 %s9, 2
    %s16 = sadd.s32 %s9, 1
    %s17 = ssub.s32 %s9, %s16
    %p18 = scmp.eq.s32.totalorder %s17, 0
    %s20 = sadd.s32 %s19, 1
    %s21 = scalar_select %p18, %s19, %s20
    %p24 = pneg %p18
    %p25 = scmp.eq.s32.totalorder %s9, 1
    %p26 = por %p24, %p25
    %p27 = scmp.ne.s32.totalorder %s19, %s22
    %p28 = scmp.eq.s32.totalorder %s9, 0
    %p29 = por %p27, %p28
    %p30 = scmp.ne.s32.totalorder %s19, %s22
    %p31 = scmp.eq.s32.totalorder %s14, 1
    %p32 = por %p30, %p31
    %p33 = scmp.ne.s32.totalorder %s22, %s23
    %p34 = scmp.eq.s32.totalorder %s14, 0
    %p35 = por %p33, %p34
    %p36 = scmp.ne.s32.totalorder %s22, %s23
    %p37 = scmp.eq.s32.totalorder %s15, 1
    %p38 = por %p36, %p37
    %p40 = scmp.ne.s32.totalorder %s23, %s39
    %p41 = scmp.eq.s32.totalorder %s15, 0
    %p42 = por %p40, %p41
    %s44 = sadd.s32 %s43, 1
    %p47 = scmp.eq.s32.totalorder %s9, 1
    %p48 = scmp.ne.s32.totalorder %s43, %s45
    %p49 = scmp.eq.s32.totalorder %s9, 0
    %p50 = por %p48, %p49
    %p51 = scmp.ne.s32.totalorder %s43, %s45
    %p52 = scmp.eq.s32.totalorder %s14, 1
    %p53 = por %p51, %p52
    %p54 = scmp.ne.s32.totalorder %s45, %s46
    %p55 = scmp.eq.s32.totalorder %s14, 0
    %p56 = por %p54, %p55
    %p57 = scmp.ne.s32.totalorder %s45, %s46
    %p58 = scmp.eq.s32.totalorder %s15, 1
    %p59 = por %p57, %p58
    %p61 = scmp.ne.s32.totalorder %s46, %s60
    %p62 = scmp.eq.s32.totalorder %s15, 0
    %p63 = por %p61, %p62
    %s65 = sadd.s32 %s64, 1
    %p68 = scmp.eq.s32.totalorder %s9, 1
    %p69 = scmp.ne.s32.totalorder %s64, %s66
    %p70 = scmp.eq.s32.totalorder %s9, 0
    %p71 = por %p69, %p70
    %p72 = scmp.ne.s32.totalorder %s64, %s66
    %p73 = scmp.eq.s32.totalorder %s14, 1
    %p74 = por %p72, %p73
    %p75 = scmp.ne.s32.totalorder %s66, %s67
    %p76 = scmp.eq.s32.totalorder %s14, 0
    %p77 = por %p75, %p76
    %p78 = scmp.ne.s32.totalorder %s66, %s67
    %p79 = scmp.eq.s32.totalorder %s15, 1
    %p80 = por %p78, %p79
    %p82 = scmp.ne.s32.totalorder %s67, %s81
    %p83 = scmp.eq.s32.totalorder %s15, 0
    %p84 = por %p82, %p83
    %s85 = ssub.s32 %s9, %s16
    %p86 = scmp.eq.s32.totalorder %s85, 0
    %s88 = sadd.s32 %s87, 1
    %s89 = scalar_select %p86, %s87, %s88
    %p92 = pneg %p86
    %p93 = scmp.eq.s32.totalorder %s9, 1
    %p94 = por %p92, %p93
    %p95 = scmp.ne.s32.totalorder %s87, %s90
    %p96 = scmp.eq.s32.totalorder %s9, 0
    %p97 = por %p95, %p96
    %p98 = scmp.ne.s32.totalorder %s87, %s90
    %p99 = scmp.eq.s32.totalorder %s14, 1
    %p100 = por %p98, %p99
    %p101 = scmp.ne.s32.totalorder %s90, %s91
    %p102 = scmp.eq.s32.totalorder %s14, 0
    %p103 = por %p101, %p102
    %p104 = scmp.ne.s32.totalorder %s90, %s91
    %p105 = scmp.eq.s32.totalorder %s15, 1
    %p106 = por %p104, %p105
    %p108 = scmp.ne.s32.totalorder %s91, %s107
    %p109 = scmp.eq.s32.totalorder %s15, 0
    %p110 = por %p108, %p109
    %p111 = scmp.le.s32.totalorder 1, %s9
    %p112 = scmp.lt.s32.totalorder %s9, 3
    %p113 = pnand %p111, %p112
    %p114 = pneg %p113
    // Predicated region
    $region9: #{fwd.9} parent=5 // pred_check
      _
    $region10: #{fwd.9} parent=5 // pred_check_branch
      %116 = sbr.rel (%p113) target = $region12
    $region11: #{fwd.9} parent=5 // pred_region
      %s117 = ssub.s32 %s9, 1
      // Predicated region
      $region13: #{fwd.9} parent=11 // pred_check
        %p118 = pneg %p56
      $region14: #{fwd.9} parent=11 // pred_check_branch
        %120 = sbr.rel (%p118) target = $region16
      $region15: #{fwd.9} parent=11 // pred_region
        _
      $region16: #{fwd.9} parent=11 // pred_fallthru
        _
      // Predicated region
      $region17: #{fwd.9} parent=11 // pred_check
        %p121 = pneg %p77
      $region18: #{fwd.9} parent=11 // pred_check_branch
        %123 = sbr.rel (%p121) target = $region20
      $region19: #{fwd.9} parent=11 // pred_region
        _
      $region20: #{fwd.9} parent=11 // pred_fallthru
        _
    $region12: #{fwd.9} parent=5 // pred_fallthru
      _
    %p124 = scmp.lt.s32.totalorder %s9, 2
    // Predicated region
    $region21: #{fwd.9} parent=5 // pred_check
      %p125 = pneg %p124
    $region22: #{fwd.9} parent=5 // pred_check_branch
      %127 = sbr.rel (%p125) target = $region24
    $region23: #{fwd.9} parent=5 // pred_region
      // Predicated region
      $region25: #{fwd.9} parent=23 // pred_check
        %p128 = pneg %p29
      $region26: #{fwd.9} parent=23 // pred_check_branch
        %130 = sbr.rel (%p128) target = $region28
      $region27: #{fwd.9} parent=23 // pred_region
        %p131 = scmp.lt.s32.totalorder %s9, 1
        %s132 = scalar_select %p131, %s9, 1
        %s133 = smul.addr %s132, 5
        %s134 = smul.addr %s133, 8
        %s135 = scalar_lea.vmem %s0, %s134
      $region28: #{fwd.9} parent=23 // pred_fallthru
        _
    $region24: #{fwd.9} parent=5 // pred_fallthru
      _
    %p136 = scmp.le.s32.totalorder 1, %s9
    %p137 = scmp.lt.s32.totalorder %s9, 3
    %p138 = pnand %p136, %p137
    %p139 = pneg %p138
    // Predicated region
    $region29: #{fwd.9} parent=5 // pred_check
      _
    $region30: #{fwd.9} parent=5 // pred_check_branch
      %141 = sbr.rel (%p138) target = $region32
    $region31: #{fwd.9} parent=5 // pred_region
      %s142 = ssub.s32 %s9, 1
      %p143 = scmp.lt.s32.totalorder %s14, 1
      %s144 = scalar_select %p143, %s14, 1
      %s145 = smul.addr %s144, 5
      %s146 = smul.addr %s145, 8
      %s147 = scalar_lea.vmem %s0, %s146
      %p148 = pneg %p35
      %p149 = pneg %p32
      %p150 = pneg %p56
      %p151 = pneg %p53
      %p152 = pneg %p77
      %p153 = pneg %p74
      %p154 = pneg %p103
      %p155 = pneg %p100
      %p156 = scmp.lt.s32.totalorder %s14, 1
      %s157 = scalar_select %p156, %s14, 1
      %s158 = smul.addr %s157, 4
      %s159 = smul.addr %s158, 8
      %s160 = scalar_lea.vmem %s3, %s159
      %p161 = scmp.lt.s32.totalorder %s14, 1
      %s162 = scalar_select %p161, %s14, 1
      %s163 = smul.addr %s162, 5
      %s164 = smul.addr %s163, 8
      %s165 = scalar_lea.vmem %s0, %s164
      %p166 = scmp.lt.s32.totalorder %s14, 1
      %s167 = scalar_select %p166, %s14, 1
      %s168 = smul.addr %s167, 4
      %s169 = smul.addr %s168, 8
      %s170 = scalar_lea.vmem %s3, %s169
      %v172 = vld [vmem:[%s165] sm:$0xff]
      %v173 = vld [vmem:[%s165 + $0x8] sm:$0xff]
      %v174 = vld [vmem:[%s165 + $0x10] sm:$0xff]
      %v175 = vld [vmem:[%s165 + $0x18] sm:$0xff]
      %v176 = vpack.c.bf16 %v173, %v172
      %v177 = vpack.c.bf16 %v175, %v174
      %v178 = vld [vmem:[%s1] sm:$0xf]
      %v179 = vld [vmem:[%s165 + $0x1] sm:$0xff]
      %v180 = vld [vmem:[%s165 + $0x9] sm:$0xff]
      %v181 = vld [vmem:[%s165 + $0x11] sm:$0xff]
      %v182 = vld [vmem:[%s165 + $0x19] sm:$0xff]
      %v183 = vpack.c.bf16 %v180, %v179
      %v184 = vpack.c.bf16 %v182, %v181
      %s185 = scalar_lea.vmem %s1, 4
      %v186 = vld [vmem:[%s185] sm:$0xf]
      %vm187 = vcmask 64512
      %v189 = vsel %vm187, %v183, 0
      %v192 = vsel %vm187, %v184, 0
      %vm194 = vcmask 1043456
      %v196 = vsel %vm194, %v186, 0
      %198 = vmatprep.subr.bf16.mxu0 0
      %199 = vmatpush1.bf16.msra.mxu0 %v196
      %200 = vmatprep.subr.bf16.mxu0 0
      %201 = vmatpush1.bf16.msra.mxu0 0
      %202 = vmatprep.subr.bf16.mxu0 0
      %203 = vmatpush1.bf16.msra.mxu0 0
      %204 = vmatprep.subr.bf16.mxu0 0
      %205 = vmatpush1.bf16.msra.mxu0 0
      %206 = vmatprep.subr.bf16.mxu0 0
      %207 = vmatpush1.bf16.msra.mxu0 0
      %208 = vmatprep.subr.bf16.mxu0 0
      %209 = vmatpush1.bf16.msra.mxu0 0
      %210 = vmatprep.subr.bf16.mxu0 0
      %211 = vmatpush1.bf16.msra.mxu0 0
      %212 = vmatprep.subr.bf16.mxu0 0
      %213 = vmatpush1.bf16.msra.mxu0 0
      %214 = vmatprep.subr.bf16.mxu0 0
      %215 = vmatpush1.bf16.msra.mxu0 0
      %216 = vmatprep.subr.bf16.mxu0 0
      %217 = vmatpush1.bf16.msra.mxu0 0
      %218 = vmatprep.subr.bf16.mxu0 0
      %219 = vmatpush1.bf16.msra.mxu0 0
      %220 = vmatprep.subr.bf16.mxu0 0
      %221 = vmatpush1.bf16.msra.mxu0 0
      %222 = vmatprep.subr.bf16.mxu0 0
      %223 = vmatpush1.bf16.msra.mxu0 0
      %224 = vmatprep.subr.bf16.mxu0 0
      %225 = vmatpush1.bf16.msra.mxu0 0
      %226 = vmatprep.subr.bf16.mxu0 0
      %227 = vmatpush1.bf16.msra.mxu0 0
      %228 = vmatprep.subr.bf16.mxu0 0
      %229 = vmatpush1.bf16.msra.mxu0 0
      %230 = vmatprep.mubr.bf16.mxu0 0
      %231 = vmatmul.mubr.bf16.gmra.mrb[0].mxu0 %v189
      %v232 = vpop.f32.mrb[0].mxu0
      %v233 = vadd.f32 0.0, %v232
      %v234 = vpop.f32.mrb[0].mxu0
      %v235 = vpop.f32.mrb[0].mxu0
      %v236 = vadd.f32 0.0, %v235
      %v237 = vpop.f32.mrb[0].mxu0
      %238 = vmatprep.mubr.bf16.mxu0 0
      %239 = vmatmul.mubr.bf16.gmra.mrb[0].mxu0 %v192
      %v240 = vpop.f32.mrb[0].mxu0
      %v241 = vadd.f32 0.0, %v240
      %v242 = vpop.f32.mrb[0].mxu0
      %v243 = vpop.f32.mrb[0].mxu0
      %v244 = vadd.f32 0.0, %v243
      %v245 = vpop.f32.mrb[0].mxu0
      %246 = vdwg.mxu0
      %v248 = vsel %vm187, %v176, 0
      %v251 = vsel %vm187, %v177, 0
      %v254 = vsel %vm194, %v178, 0
      %256 = vmatprep.subr.bf16.mxu0 0
      %257 = vmatpush1.bf16.msra.mxu0 %v254
      %258 = vmatprep.subr.bf16.mxu0 0
      %259 = vmatpush1.bf16.msra.mxu0 0
      %260 = vmatprep.subr.bf16.mxu0 0
      %261 = vmatpush1.bf16.msra.mxu0 0
      %262 = vmatprep.subr.bf16.mxu0 0
      %263 = vmatpush1.bf16.msra.mxu0 0
      %264 = vmatprep.subr.bf16.mxu0 0
      %265 = vmatpush1.bf16.msra.mxu0 0
      %266 = vmatprep.subr.bf16.mxu0 0
      %267 = vmatpush1.bf16.msra.mxu0 0
      %268 = vmatprep.subr.bf16.mxu0 0
      %269 = vmatpush1.bf16.msra.mxu0 0
      %270 = vmatprep.subr.bf16.mxu0 0
      %271 = vmatpush1.bf16.msra.mxu0 0
      %272 = vmatprep.subr.bf16.mxu0 0
      %273 = vmatpush1.bf16.msra.mxu0 0
      %274 = vmatprep.subr.bf16.mxu0 0
      %275 = vmatpush1.bf16.msra.mxu0 0
      %276 = vmatprep.subr.bf16.mxu0 0
      %277 = vmatpush1.bf16.msra.mxu0 0
      %278 = vmatprep.subr.bf16.mxu0 0
      %279 = vmatpush1.bf16.msra.mxu0 0
      %280 = vmatprep.subr.bf16.mxu0 0
      %281 = vmatpush1.bf16.msra.mxu0 0
      %282 = vmatprep.subr.bf16.mxu0 0
      %283 = vmatpush1.bf16.msra.mxu0 0
      %284 = vmatprep.subr.bf16.mxu0 0
      %285 = vmatpush1.bf16.msra.mxu0 0
      %286 = vmatprep.subr.bf16.mxu0 0
      %287 = vmatpush1.bf16.msra.mxu0 0
      %288 = vmatprep.mubr.bf16.mxu0 0
      %289 = vmatmul.mubr.bf16.gmra.mrb[0].mxu0 %v248
      %v290 = vpop.f32.mrb[0].mxu0
      %v291 = vadd.f32 %v233, %v290
      %v292 = vpop.f32.mrb[0].mxu0
      %v293 = vpop.f32.mrb[0].mxu0
      %v294 = vadd.f32 %v236, %v293
      %v295 = vpop.f32.mrb[0].mxu0
      %296 = vmatprep.mubr.bf16.mxu0 0
      %297 = vmatmul.mubr.bf16.gmra.mrb[0].mxu0 %v251
      %v298 = vpop.f32.mrb[0].mxu0
      %v299 = vadd.f32 %v241, %v298
      %v300 = vpop.f32.mrb[0].mxu0
      %v301 = vpop.f32.mrb[0].mxu0
      %v302 = vadd.f32 %v244, %v301
      %v303 = vpop.f32.mrb[0].mxu0
      %304 = vdwg.mxu0
      %v305 = vld [vmem:[%s165 + $0x2] sm:$0xff]
      %v306 = vld [vmem:[%s165 + $0xa] sm:$0xff]
      %v307 = vld [vmem:[%s165 + $0x12] sm:$0xff]
      %v308 = vld [vmem:[%s165 + $0x1a] sm:$0xff]
      %v309 = vpack.c.bf16 %v306, %v305
      %v310 = vpack.c.bf16 %v308, %v307
      %s311 = scalar_lea.vmem %s1, 8
      %v312 = vld [vmem:[%s311] sm:$0xf]
      %v314 = vsel %vm187, %v309, 0
      %v317 = vsel %vm187, %v310, 0
      %v320 = vsel %vm194, %v312, 0
      %322 = vmatprep.subr.bf16.mxu0 0
      %323 = vmatpush1.bf16.msra.mxu0 %v320
      %324 = vmatprep.subr.bf16.mxu0 0
      %325 = vmatpush1.bf16.msra.mxu0 0
      %326 = vmatprep.subr.bf16.mxu0 0
      %327 = vmatpush1.bf16.msra.mxu0 0
      %328 = vmatprep.subr.bf16.mxu0 0
      %329 = vmatpush1.bf16.msra.mxu0 0
      %330 = vmatprep.subr.bf16.mxu0 0
      %331 = vmatpush1.bf16.msra.mxu0 0
      %332 = vmatprep.subr.bf16.mxu0 0
      %333 = vmatpush1.bf16.msra.mxu0 0
      %334 = vmatprep.subr.bf16.mxu0 0
      %335 = vmatpush1.bf16.msra.mxu0 0
      %336 = vmatprep.subr.bf16.mxu0 0
      %337 = vmatpush1.bf16.msra.mxu0 0
      %338 = vmatprep.subr.bf16.mxu0 0
      %339 = vmatpush1.bf16.msra.mxu0 0
      %340 = vmatprep.subr.bf16.mxu0 0
      %341 = vmatpush1.bf16.msra.mxu0 0
      %342 = vmatprep.subr.bf16.mxu0 0
      %343 = vmatpush1.bf16.msra.mxu0 0
      %344 = vmatprep.subr.bf16.mxu0 0
      %345 = vmatpush1.bf16.msra.mxu0 0
      %346 = vmatprep.subr.bf16.mxu0 0
      %347 = vmatpush1.bf16.msra.mxu0 0
      %348 = vmatprep.subr.bf16.mxu0 0
      %349 = vmatpush1.bf16.msra.mxu0 0
      %350 = vmatprep.subr.bf16.mxu0 0
      %351 = vmatpush1.bf16.msra.mxu0 0
      %352 = vmatprep.subr.bf16.mxu0 0
      %353 = vmatpush1.bf16.msra.mxu0 0
      %354 = vmatprep.mubr.bf16.mxu0 0
      %355 = vmatmul.mubr.bf16.gmra.mrb[0].mxu0 %v314
      %v356 = vpop.f32.mrb[0].mxu0
      %v357 = vadd.f32 0.0, %v356
      %v358 = vpop.f32.mrb[0].mxu0
      %v359 = vpop.f32.mrb[0].mxu0
      %v360 = vadd.f32 0.0, %v359
      %v361 = vpop.f32.mrb[0].mxu0
      %362 = vmatprep.mubr.bf16.mxu0 0
      %363 = vmatmul.mubr.bf16.gmra.mrb[0].mxu0 %v317
      %v364 = vpop.f32.mrb[0].mxu0
      %v365 = vadd.f32 0.0, %v364
      %v366 = vpop.f32.mrb[0].mxu0
      %v367 = vpop.f32.mrb[0].mxu0
      %v368 = vadd.f32 0.0, %v367
      %v369 = vpop.f32.mrb[0].mxu0
      %370 = vdwg.mxu0
      %v371 = vadd.f32 %v291, %v357
      %v372 = vadd.f32 %v294, %v360
      %v373 = vadd.f32 %v299, %v365
      %v374 = vadd.f32 %v302, %v368
      %v375 = vld [vmem:[%s2] sm:$0x1]
      %v377 = vlaneseq
      %v378 = vshrl.u32 %v377, 7
      %v379 = vsub.s32 0, %v378
      %v380 = vrot.slane %v375, %v379
      %v382 = vadd.f32 %v371, %v380
      %v383 = vadd.f32 %v372, %v380
      %v384 = vadd.f32 %v373, %v380
      %v385 = vadd.f32 %v374, %v380
      %v386 = vmax.f32 %v382, 0.0
      %v387 = vmax.f32 %v383, 0.0
      %v388 = vmax.f32 %v384, 0.0
      %v389 = vmax.f32 %v385, 0.0
      %390 = vst [vmem:[%s170] sm:$0xff] %v386
      %391 = vst [vmem:[%s170 + $0x8] sm:$0xff] %v387
      %392 = vst [vmem:[%s170 + $0x10] sm:$0xff] %v388
      %393 = vst [vmem:[%s170 + $0x18] sm:$0xff] %v389
      %p394 = scmp.lt.s32.totalorder %s14, 1
      %s395 = scalar_select %p394, %s14, 1
      %s396 = smul.addr %s395, 4
      %s397 = smul.addr %s396, 8
      %s398 = scalar_lea.vmem %s3, %s397
      // Predicated region
      $region33: #{fwd.9} parent=31 // pred_check
        %p399 = pneg %p100
      $region34: #{fwd.9} parent=31 // pred_check_branch
        %401 = sbr.rel (%p399) target = $region36
      $region35: #{fwd.9} parent=31 // pred_region
        _
      $region36: #{fwd.9} parent=31 // pred_fallthru
        _
    $region32: #{fwd.9} parent=5 // pred_fallthru
      _
    %p402 = scmp.le.s32.totalorder 2, %s9
    // Predicated region
    $region37: #{fwd.9} parent=5 // pred_check
      %p403 = pneg %p402
    $region38: #{fwd.9} parent=5 // pred_check_branch
      %405 = sbr.rel (%p403) target = $region40
    $region39: #{fwd.9} parent=5 // pred_region
      %s406 = ssub.s32 %s9, 2
      // Predicated region
      $region41: #{fwd.9} parent=39 // pred_check
        %p407 = pneg %p106
      $region42: #{fwd.9} parent=39 // pred_check_branch
        %409 = sbr.rel (%p407) target = $region44
      $region43: #{fwd.9} parent=39 // pred_region
        %p410 = scmp.lt.s32.totalorder %s15, 1
        %s411 = scalar_select %p410, %s15, 1
        %s412 = smul.addr %s411, 4
        %s413 = smul.addr %s412, 8
        %s414 = scalar_lea.vmem %s3, %s413
      $region44: #{fwd.9} parent=39 // pred_fallthru
        _
    $region40: #{fwd.9} parent=5 // pred_fallthru
      _
  $region6: #{fwd.9} parent=0 // loop_footer
    %s13 = sadd.s32 1, %s9
  $region7: #{fwd.9} parent=0 // loop_footer_branch
    %8 = sbr.rel target = $region3
  $region8: #{fwd.9} parent=0 // loop_exit
    _

// kernel: fwd.10
$region0: #{fwd.10}
  #allocation0 [shape = 'u32[]', space=smem, size = 0x4, offset = 0x4, fixed_abs, tag = 'smem constant byte address 0x4 - core index']
  #allocation1 [shape = 'u32[144,128]{1,0:T(1,128)}', space=vmem, size = 0x12000, scoped, tag = 'internal scratch']
  %s0 = inlined_call_operand.vmem [shape: f32[2,18,128], index: 0, kind: input, shape index: {}]
  %s1 = inlined_call_operand.vmem [shape: bf16[3,128,128], index: 1, kind: input, shape index: {}]
  %s2 = inlined_call_operand.vmem [shape: f32[1,128], index: 2, kind: input, shape index: {}]
  %s3 = inlined_call_operand.vmem [shape: f32[2,16,128], index: 3, kind: output, shape index: {}]
  %s4 = sld [smem:[#allocation0]]
  $region45: #{fwd.10} parent=0
    _
  %s6 = ssub.s32 1, %s4
  %s7 = scalar_select 0, %s6, %s4
  loop: start=0, step=1, limit=4
  $region2: #{fwd.10} parent=0 // loop_pre_header
    _
  $region3: #{fwd.10} parent=0 // loop_header
    %s9 = sphi 0, %s13
    %p10 = scmp.ge.s32.totalorder %s9, 4
    %s19 = sphi 0, %s21
    %s22 = sphi 0, %s19
    %s23 = sphi 0, %s22
    %s39 = sphi 0, %s23
    %s43 = sphi 0, %s43
    %s45 = sphi 0, %s43
    %s46 = sphi 0, %s45
    %s60 = sphi 0, %s46
    %s64 = sphi 0, %s64
    %s66 = sphi 0, %s64
    %s67 = sphi 0, %s66
    %s81 = sphi 0, %s67
    %s87 = sphi 0, %s89
    %s90 = sphi 0, %s87
    %s91 = sphi 0, %s90
    %s107 = sphi 0, %s91
  $region4: #{fwd.10} parent=0 // loop_header_branch
    %12 = sbr.rel (%p10) target = $region8
  $region5: #{fwd.10} parent=0 // loop_body
    %s14 = ssub.s32 %s9, 1
    %s15 = ssub.s32 %s9, 2
    %s16 = sadd.s32 %s9, 1
    %s17 = ssub.s32 %s9, %s16
    %p18 = scmp.eq.s32.totalorder %s17, 0
    %s20 = sadd.s32 %s19, 1
    %s21 = scalar_select %p18, %s19, %s20
    %p24 = pneg %p18
    %p25 = scmp.eq.s32.totalorder %s9, 1
    %p26 = por %p24, %p25
    %p27 = scmp.ne.s32.totalorder %s19, %s22
    %p28 = scmp.eq.s32.totalorder %s9, 0
    %p29 = por %p27, %p28
    %p30 = scmp.ne.s32.totalorder %s19, %s22
    %p31 = scmp.eq.s32.totalorder %s14, 1
    %p32 = por %p30, %p31
    %p33 = scmp.ne.s32.totalorder %s22, %s23
    %p34 = scmp.eq.s32.totalorder %s14, 0
    %p35 = por %p33, %p34
    %p36 = scmp.ne.s32.totalorder %s22, %s23
    %p37 = scmp.eq.s32.totalorder %s15, 1
    %p38 = por %p36, %p37
    %p40 = scmp.ne.s32.totalorder %s23, %s39
    %p41 = scmp.eq.s32.totalorder %s15, 0
    %p42 = por %p40, %p41
    %s44 = sadd.s32 %s43, 1
    %p47 = scmp.eq.s32.totalorder %s9, 1
    %p48 = scmp.ne.s32.totalorder %s43, %s45
    %p49 = scmp.eq.s32.totalorder %s9, 0
    %p50 = por %p48, %p49
    %p51 = scmp.ne.s32.totalorder %s43, %s45
    %p52 = scmp.eq.s32.totalorder %s14, 1
    %p53 = por %p51, %p52
    %p54 = scmp.ne.s32.totalorder %s45, %s46
    %p55 = scmp.eq.s32.totalorder %s14, 0
    %p56 = por %p54, %p55
    %p57 = scmp.ne.s32.totalorder %s45, %s46
    %p58 = scmp.eq.s32.totalorder %s15, 1
    %p59 = por %p57, %p58
    %p61 = scmp.ne.s32.totalorder %s46, %s60
    %p62 = scmp.eq.s32.totalorder %s15, 0
    %p63 = por %p61, %p62
    %s65 = sadd.s32 %s64, 1
    %p68 = scmp.eq.s32.totalorder %s9, 1
    %p69 = scmp.ne.s32.totalorder %s64, %s66
    %p70 = scmp.eq.s32.totalorder %s9, 0
    %p71 = por %p69, %p70
    %p72 = scmp.ne.s32.totalorder %s64, %s66
    %p73 = scmp.eq.s32.totalorder %s14, 1
    %p74 = por %p72, %p73
    %p75 = scmp.ne.s32.totalorder %s66, %s67
    %p76 = scmp.eq.s32.totalorder %s14, 0
    %p77 = por %p75, %p76
    %p78 = scmp.ne.s32.totalorder %s66, %s67
    %p79 = scmp.eq.s32.totalorder %s15, 1
    %p80 = por %p78, %p79
    %p82 = scmp.ne.s32.totalorder %s67, %s81
    %p83 = scmp.eq.s32.totalorder %s15, 0
    %p84 = por %p82, %p83
    %s85 = ssub.s32 %s9, %s16
    %p86 = scmp.eq.s32.totalorder %s85, 0
    %s88 = sadd.s32 %s87, 1
    %s89 = scalar_select %p86, %s87, %s88
    %p92 = pneg %p86
    %p93 = scmp.eq.s32.totalorder %s9, 1
    %p94 = por %p92, %p93
    %p95 = scmp.ne.s32.totalorder %s87, %s90
    %p96 = scmp.eq.s32.totalorder %s9, 0
    %p97 = por %p95, %p96
    %p98 = scmp.ne.s32.totalorder %s87, %s90
    %p99 = scmp.eq.s32.totalorder %s14, 1
    %p100 = por %p98, %p99
    %p101 = scmp.ne.s32.totalorder %s90, %s91
    %p102 = scmp.eq.s32.totalorder %s14, 0
    %p103 = por %p101, %p102
    %p104 = scmp.ne.s32.totalorder %s90, %s91
    %p105 = scmp.eq.s32.totalorder %s15, 1
    %p106 = por %p104, %p105
    %p108 = scmp.ne.s32.totalorder %s91, %s107
    %p109 = scmp.eq.s32.totalorder %s15, 0
    %p110 = por %p108, %p109
    %p111 = scmp.le.s32.totalorder 1, %s9
    %p112 = scmp.lt.s32.totalorder %s9, 3
    %p113 = pnand %p111, %p112
    %p114 = pneg %p113
    // Predicated region
    $region9: #{fwd.10} parent=5 // pred_check
      _
    $region10: #{fwd.10} parent=5 // pred_check_branch
      %116 = sbr.rel (%p113) target = $region12
    $region11: #{fwd.10} parent=5 // pred_region
      %s117 = ssub.s32 %s9, 1
      // Predicated region
      $region13: #{fwd.10} parent=11 // pred_check
        %p118 = pneg %p56
      $region14: #{fwd.10} parent=11 // pred_check_branch
        %120 = sbr.rel (%p118) target = $region16
      $region15: #{fwd.10} parent=11 // pred_region
        _
      $region16: #{fwd.10} parent=11 // pred_fallthru
        _
      // Predicated region
      $region17: #{fwd.10} parent=11 // pred_check
        %p121 = pneg %p77
      $region18: #{fwd.10} parent=11 // pred_check_branch
        %123 = sbr.rel (%p121) target = $region20
      $region19: #{fwd.10} parent=11 // pred_region
        _
      $region20: #{fwd.10} parent=11 // pred_fallthru
        _
    $region12: #{fwd.10} parent=5 // pred_fallthru
      _
    %p124 = scmp.lt.s32.totalorder %s9, 2
    // Predicated region
    $region21: #{fwd.10} parent=5 // pred_check
      %p125 = pneg %p124
    $region22: #{fwd.10} parent=5 // pred_check_branch
      %127 = sbr.rel (%p125) target = $region24
    $region23: #{fwd.10} parent=5 // pred_region
      // Predicated region
      $region25: #{fwd.10} parent=23 // pred_check
        %p128 = pneg %p29
      $region26: #{fwd.10} parent=23 // pred_check_branch
        %130 = sbr.rel (%p128) target = $region28
      $region27: #{fwd.10} parent=23 // pred_region
        %p131 = scmp.lt.s32.totalorder %s9, 1
        %s132 = scalar_select %p131, %s9, 1
        %s133 = smul.addr %s132, 3
        %s134 = smul.addr %s133, 8
        %s135 = scalar_lea.vmem %s0, %s134
      $region28: #{fwd.10} parent=23 // pred_fallthru
        _
    $region24: #{fwd.10} parent=5 // pred_fallthru
      _
    %p136 = scmp.le.s32.totalorder 1, %s9
    %p137 = scmp.lt.s32.totalorder %s9, 3
    %p138 = pnand %p136, %p137
    %p139 = pneg %p138
    // Predicated region
    $region29: #{fwd.10} parent=5 // pred_check
      _
    $region30: #{fwd.10} parent=5 // pred_check_branch
      %141 = sbr.rel (%p138) target = $region32
    $region31: #{fwd.10} parent=5 // pred_region
      %s142 = ssub.s32 %s9, 1
      %p143 = scmp.lt.s32.totalorder %s14, 1
      %s144 = scalar_select %p143, %s14, 1
      %s145 = smul.addr %s144, 3
      %s146 = smul.addr %s145, 8
      %s147 = scalar_lea.vmem %s0, %s146
      %p148 = pneg %p35
      %p149 = pneg %p32
      %p150 = pneg %p56
      %p151 = pneg %p53
      %p152 = pneg %p77
      %p153 = pneg %p74
      %p154 = pneg %p103
      %p155 = pneg %p100
      %p156 = scmp.lt.s32.totalorder %s14, 1
      %s157 = scalar_select %p156, %s14, 1
      %s158 = smul.addr %s157, 2
      %s159 = smul.addr %s158, 8
      %s160 = scalar_lea.vmem %s3, %s159
      %p161 = scmp.lt.s32.totalorder %s14, 1
      %s162 = scalar_select %p161, %s14, 1
      %s163 = smul.addr %s162, 3
      %s164 = smul.addr %s163, 8
      %s165 = scalar_lea.vmem %s0, %s164
      %p166 = scmp.lt.s32.totalorder %s14, 1
      %s167 = scalar_select %p166, %s14, 1
      %s168 = smul.addr %s167, 2
      %s169 = smul.addr %s168, 8
      %s170 = scalar_lea.vmem %s3, %s169
      %v172 = vld [vmem:[%s165] sm:$0xff]
      %v173 = vld [vmem:[%s165 + $0x8] sm:$0xff]
      %v174 = vpack.c.bf16 %v173, %v172
      %v175 = vld [vmem:[%s1] sm:$0xf]
      %v176 = vld [vmem:[%s1 + $0x4] sm:$0xf]
      %v177 = vld [vmem:[%s1 + $0x8] sm:$0xf]
      %v178 = vld [vmem:[%s1 + $0xc] sm:$0xf]
      %v179 = vld [vmem:[%s1 + $0x10] sm:$0xf]
      %v180 = vld [vmem:[%s1 + $0x14] sm:$0xf]
      %v181 = vld [vmem:[%s1 + $0x18] sm:$0xf]
      %v182 = vld [vmem:[%s1 + $0x1c] sm:$0xf]
      %v183 = vld [vmem:[%s1 + $0x20] sm:$0xf]
      %v184 = vld [vmem:[%s1 + $0x24] sm:$0xf]
      %v185 = vld [vmem:[%s1 + $0x28] sm:$0xf]
      %v186 = vld [vmem:[%s1 + $0x2c] sm:$0xf]
      %v187 = vld [vmem:[%s1 + $0x30] sm:$0xf]
      %v188 = vld [vmem:[%s1 + $0x34] sm:$0xf]
      %v189 = vld [vmem:[%s1 + $0x38] sm:$0xf]
      %v190 = vld [vmem:[%s1 + $0x3c] sm:$0xf]
      %v191 = vld [vmem:[%s165 + $0x1] sm:$0xff]
      %v192 = vld [vmem:[%s165 + $0x9] sm:$0xff]
      %v193 = vpack.c.bf16 %v192, %v191
      %s194 = scalar_lea.vmem %s1, 64
      %v195 = vld [vmem:[%s194] sm:$0xf]
      %v196 = vld [vmem:[%s194 + $0x4] sm:$0xf]
      %v197 = vld [vmem:[%s194 + $0x8] sm:$0xf]
      %v198 = vld [vmem:[%s194 + $0xc] sm:$0xf]
      %v199 = vld [vmem:[%s194 + $0x10] sm:$0xf]
      %v200 = vld [vmem:[%s194 + $0x14] sm:$0xf]
      %v201 = vld [vmem:[%s194 + $0x18] sm:$0xf]
      %v202 = vld [vmem:[%s194 + $0x1c] sm:$0xf]
      %v203 = vld [vmem:[%s194 + $0x20] sm:$0xf]
      %v204 = vld [vmem:[%s194 + $0x24] sm:$0xf]
      %v205 = vld [vmem:[%s194 + $0x28] sm:$0xf]
      %v206 = vld [vmem:[%s194 + $0x2c] sm:$0xf]
      %v207 = vld [vmem:[%s194 + $0x30] sm:$0xf]
      %v208 = vld [vmem:[%s194 + $0x34] sm:$0xf]
      %v209 = vld [vmem:[%s194 + $0x38] sm:$0xf]
      %v210 = vld [vmem:[%s194 + $0x3c] sm:$0xf]
      %v227 = vunpack.c.l.b16 %v195
      %v228 = vunpack.c.l.b16 %v196
      %v229 = vunpack.c.l.b16 %v197
      %v230 = vunpack.c.l.b16 %v198
      %v231 = vunpack.c.l.b16 %v199
      %v232 = vunpack.c.l.b16 %v200
      %v233 = vunpack.c.l.b16 %v201
      %v234 = vunpack.c.l.b16 %v202
      %v235 = vunpack.c.l.b16 %v203
      %v236 = vunpack.c.l.b16 %v204
      %v237 = vunpack.c.l.b16 %v205
      %v238 = vunpack.c.l.b16 %v206
      %v239 = vunpack.c.l.b16 %v207
      %v240 = vunpack.c.l.b16 %v208
      %v241 = vunpack.c.l.b16 %v209
      %v242 = vunpack.c.l.b16 %v210
      %v243 = vpack.c.b16 %v228, %v227
      %v244 = vpack.c.b16 %v230, %v229
      %v245 = vpack.c.b16 %v232, %v231
      %v246 = vpack.c.b16 %v234, %v233
      %v247 = vpack.c.b16 %v236, %v235
      %v248 = vpack.c.b16 %v238, %v237
      %v249 = vpack.c.b16 %v240, %v239
      %v250 = vpack.c.b16 %v242, %v241
      %259 = vmatprep.subr.bf16.mxu0 0
      %260 = vmatpush1.bf16.msra.mxu0 %v243
      %261 = vmatprep.subr.bf16.mxu0 0
      %262 = vmatpush1.bf16.msra.mxu0 %v244
      %263 = vmatprep.subr.bf16.mxu0 0
      %264 = vmatpush1.bf16.msra.mxu0 %v245
      %265 = vmatprep.subr.bf16.mxu0 0
      %266 = vmatpush1.bf16.msra.mxu0 %v246
      %267 = vmatprep.subr.bf16.mxu0 0
      %268 = vmatpush1.bf16.msra.mxu0 %v247
      %269 = vmatprep.subr.bf16.mxu0 0
      %270 = vmatpush1.bf16.msra.mxu0 %v248
      %271 = vmatprep.subr.bf16.mxu0 0
      %272 = vmatpush1.bf16.msra.mxu0 %v249
      %273 = vmatprep.subr.bf16.mxu0 0
      %274 = vmatpush1.bf16.msra.mxu0 %v250
      %275 = vmatprep.subr.bf16.mxu0 0
      %276 = vmatpush1.bf16.msra.mxu0 0
      %277 = vmatprep.subr.bf16.mxu0 0
      %278 = vmatpush1.bf16.msra.mxu0 0
      %279 = vmatprep.subr.bf16.mxu0 0
      %280 = vmatpush1.bf16.msra.mxu0 0
      %281 = vmatprep.subr.bf16.mxu0 0
      %282 = vmatpush1.bf16.msra.mxu0 0
      %283 = vmatprep.subr.bf16.mxu0 0
      %284 = vmatpush1.bf16.msra.mxu0 0
      %285 = vmatprep.subr.bf16.mxu0 0
      %286 = vmatpush1.bf16.msra.mxu0 0
      %287 = vmatprep.subr.bf16.mxu0 0
      %288 = vmatpush1.bf16.msra.mxu0 0
      %289 = vmatprep.subr.bf16.mxu0 0
      %290 = vmatpush1.bf16.msra.mxu0 0
      %291 = vmatprep.mubr.bf16.mxu0 0
      %292 = vmatmul.mubr.bf16.gmra.mrb[0].mxu0 %v193
      %v293 = vpop.f32.mrb[0].mxu0
      %v294 = vadd.f32 0.0, %v293
      %v295 = vpop.f32.mrb[0].mxu0
      %v296 = vpop.f32.mrb[0].mxu0
      %v297 = vadd.f32 0.0, %v296
      %v298 = vpop.f32.mrb[0].mxu0
      %299 = vdwg.mxu0
      %v316 = vunpack.c.l.b16 %v175
      %v317 = vunpack.c.l.b16 %v176
      %v318 = vunpack.c.l.b16 %v177
      %v319 = vunpack.c.l.b16 %v178
      %v320 = vunpack.c.l.b16 %v179
      %v321 = vunpack.c.l.b16 %v180
      %v322 = vunpack.c.l.b16 %v181
      %v323 = vunpack.c.l.b16 %v182
      %v324 = vunpack.c.l.b16 %v183
      %v325 = vunpack.c.l.b16 %v184
      %v326 = vunpack.c.l.b16 %v185
      %v327 = vunpack.c.l.b16 %v186
      %v328 = vunpack.c.l.b16 %v187
      %v329 = vunpack.c.l.b16 %v188
      %v330 = vunpack.c.l.b16 %v189
      %v331 = vunpack.c.l.b16 %v190
      %v332 = vpack.c.b16 %v317, %v316
      %v333 = vpack.c.b16 %v319, %v318
      %v334 = vpack.c.b16 %v321, %v320
      %v335 = vpack.c.b16 %v323, %v322
      %v336 = vpack.c.b16 %v325, %v324
      %v337 = vpack.c.b16 %v327, %v326
      %v338 = vpack.c.b16 %v329, %v328
      %v339 = vpack.c.b16 %v331, %v330
      %348 = vmatprep.subr.bf16.mxu0 0
      %349 = vmatpush1.bf16.msra.mxu0 %v332
      %350 = vmatprep.subr.bf16.mxu0 0
      %351 = vmatpush1.bf16.msra.mxu0 %v333
      %352 = vmatprep.subr.bf16.mxu0 0
      %353 = vmatpush1.bf16.msra.mxu0 %v334
      %354 = vmatprep.subr.bf16.mxu0 0
      %355 = vmatpush1.bf16.msra.mxu0 %v335
      %356 = vmatprep.subr.bf16.mxu0 0
      %357 = vmatpush1.bf16.msra.mxu0 %v336
      %358 = vmatprep.subr.bf16.mxu0 0
      %359 = vmatpush1.bf16.msra.mxu0 %v337
      %360 = vmatprep.subr.bf16.mxu0 0
      %361 = vmatpush1.bf16.msra.mxu0 %v338
      %362 = vmatprep.subr.bf16.mxu0 0
      %363 = vmatpush1.bf16.msra.mxu0 %v339
      %364 = vmatprep.subr.bf16.mxu0 0
      %365 = vmatpush1.bf16.msra.mxu0 0
      %366 = vmatprep.subr.bf16.mxu0 0
      %367 = vmatpush1.bf16.msra.mxu0 0
      %368 = vmatprep.subr.bf16.mxu0 0
      %369 = vmatpush1.bf16.msra.mxu0 0
      %370 = vmatprep.subr.bf16.mxu0 0
      %371 = vmatpush1.bf16.msra.mxu0 0
      %372 = vmatprep.subr.bf16.mxu0 0
      %373 = vmatpush1.bf16.msra.mxu0 0
      %374 = vmatprep.subr.bf16.mxu0 0
      %375 = vmatpush1.bf16.msra.mxu0 0
      %376 = vmatprep.subr.bf16.mxu0 0
      %377 = vmatpush1.bf16.msra.mxu0 0
      %378 = vmatprep.subr.bf16.mxu0 0
      %379 = vmatpush1.bf16.msra.mxu0 0
      %380 = vmatprep.mubr.bf16.mxu0 0
      %381 = vmatmul.mubr.bf16.gmra.mrb[0].mxu0 %v174
      %v382 = vpop.f32.mrb[0].mxu0
      %v383 = vadd.f32 %v294, %v382
      %v384 = vpop.f32.mrb[0].mxu0
      %v385 = vpop.f32.mrb[0].mxu0
      %v386 = vadd.f32 %v297, %v385
      %v387 = vpop.f32.mrb[0].mxu0
      %388 = vdwg.mxu0
      %v389 = vld [vmem:[%s165 + $0x2] sm:$0xff]
      %v390 = vld [vmem:[%s165 + $0xa] sm:$0xff]
      %v391 = vpack.c.bf16 %v390, %v389
      %s392 = scalar_lea.vmem %s1, 128
      %v393 = vld [vmem:[%s392] sm:$0xf]
      %v394 = vld [vmem:[%s392 + $0x4] sm:$0xf]
      %v395 = vld [vmem:[%s392 + $0x8] sm:$0xf]
      %v396 = vld [vmem:[%s392 + $0xc] sm:$0xf]
      %v397 = vld [vmem:[%s392 + $0x10] sm:$0xf]
      %v398 = vld [vmem:[%s392 + $0x14] sm:$0xf]
      %v399 = vld [vmem:[%s392 + $0x18] sm:$0xf]
      %v400 = vld [vmem:[%s392 + $0x1c] sm:$0xf]
      %v401 = vld [vmem:[%s392 + $0x20] sm:$0xf]
      %v402 = vld [vmem:[%s392 + $0x24] sm:$0xf]
      %v403 = vld [vmem:[%s392 + $0x28] sm:$0xf]
      %v404 = vld [vmem:[%s392 + $0x2c] sm:$0xf]
      %v405 = vld [vmem:[%s392 + $0x30] sm:$0xf]
      %v406 = vld [vmem:[%s392 + $0x34] sm:$0xf]
      %v407 = vld [vmem:[%s392 + $0x38] sm:$0xf]
      %v408 = vld [vmem:[%s392 + $0x3c] sm:$0xf]
      %v425 = vunpack.c.l.b16 %v393
      %v426 = vunpack.c.l.b16 %v394
      %v427 = vunpack.c.l.b16 %v395
      %v428 = vunpack.c.l.b16 %v396
      %v429 = vunpack.c.l.b16 %v397
      %v430 = vunpack.c.l.b16 %v398
      %v431 = vunpack.c.l.b16 %v399
      %v432 = vunpack.c.l.b16 %v400
      %v433 = vunpack.c.l.b16 %v401
      %v434 = vunpack.c.l.b16 %v402
      %v435 = vunpack.c.l.b16 %v403
      %v436 = vunpack.c.l.b16 %v404
      %v437 = vunpack.c.l.b16 %v405
      %v438 = vunpack.c.l.b16 %v406
      %v439 = vunpack.c.l.b16 %v407
      %v440 = vunpack.c.l.b16 %v408
      %v441 = vpack.c.b16 %v426, %v425
      %v442 = vpack.c.b16 %v428, %v427
      %v443 = vpack.c.b16 %v430, %v429
      %v444 = vpack.c.b16 %v432, %v431
      %v445 = vpack.c.b16 %v434, %v433
      %v446 = vpack.c.b16 %v436, %v435
      %v447 = vpack.c.b16 %v438, %v437
      %v448 = vpack.c.b16 %v440, %v439
      %457 = vmatprep.subr.bf16.mxu0 0
      %458 = vmatpush1.bf16.msra.mxu0 %v441
      %459 = vmatprep.subr.bf16.mxu0 0
      %460 = vmatpush1.bf16.msra.mxu0 %v442
      %461 = vmatprep.subr.bf16.mxu0 0
      %462 = vmatpush1.bf16.msra.mxu0 %v443
      %463 = vmatprep.subr.bf16.mxu0 0
      %464 = vmatpush1.bf16.msra.mxu0 %v444
      %465 = vmatprep.subr.bf16.mxu0 0
      %466 = vmatpush1.bf16.msra.mxu0 %v445
      %467 = vmatprep.subr.bf16.mxu0 0
      %468 = vmatpush1.bf16.msra.mxu0 %v446
      %469 = vmatprep.subr.bf16.mxu0 0
      %470 = vmatpush1.bf16.msra.mxu0 %v447
      %471 = vmatprep.subr.bf16.mxu0 0
      %472 = vmatpush1.bf16.msra.mxu0 %v448
      %473 = vmatprep.subr.bf16.mxu0 0
      %474 = vmatpush1.bf16.msra.mxu0 0
      %475 = vmatprep.subr.bf16.mxu0 0
      %476 = vmatpush1.bf16.msra.mxu0 0
      %477 = vmatprep.subr.bf16.mxu0 0
      %478 = vmatpush1.bf16.msra.mxu0 0
      %479 = vmatprep.subr.bf16.mxu0 0
      %480 = vmatpush1.bf16.msra.mxu0 0
      %481 = vmatprep.subr.bf16.mxu0 0
      %482 = vmatpush1.bf16.msra.mxu0 0
      %483 = vmatprep.subr.bf16.mxu0 0
      %484 = vmatpush1.bf16.msra.mxu0 0
      %485 = vmatprep.subr.bf16.mxu0 0
      %486 = vmatpush1.bf16.msra.mxu0 0
      %487 = vmatprep.subr.bf16.mxu0 0
      %488 = vmatpush1.bf16.msra.mxu0 0
      %489 = vmatprep.mubr.bf16.mxu0 0
      %490 = vmatmul.mubr.bf16.gmra.mrb[0].mxu0 %v391
      %v491 = vpop.f32.mrb[0].mxu0
      %v492 = vadd.f32 0.0, %v491
      %v493 = vpop.f32.mrb[0].mxu0
      %v494 = vpop.f32.mrb[0].mxu0
      %v495 = vadd.f32 0.0, %v494
      %v496 = vpop.f32.mrb[0].mxu0
      %497 = vdwg.mxu0
      %v498 = vadd.f32 %v383, %v492
      %v499 = vadd.f32 %v386, %v495
      %v500 = vld [vmem:[%s2] sm:$0x1]
      %v502 = vlaneseq
      %v503 = vshrl.u32 %v502, 7
      %v504 = vsub.s32 0, %v503
      %v505 = vrot.slane %v500, %v504
      %v507 = vadd.f32 %v498, %v505
      %v508 = vadd.f32 %v499, %v505
      %v509 = vmax.f32 %v507, 0.0
      %v510 = vmax.f32 %v508, 0.0
      %511 = vst [vmem:[%s170] sm:$0xff] %v509
      %512 = vst [vmem:[%s170 + $0x8] sm:$0xff] %v510
      %p513 = scmp.lt.s32.totalorder %s14, 1
      %s514 = scalar_select %p513, %s14, 1
      %s515 = smul.addr %s514, 2
      %s516 = smul.addr %s515, 8
      %s517 = scalar_lea.vmem %s3, %s516
      // Predicated region
      $region33: #{fwd.10} parent=31 // pred_check
        %p518 = pneg %p100
      $region34: #{fwd.10} parent=31 // pred_check_branch
        %520 = sbr.rel (%p518) target = $region36
      $region35: #{fwd.10} parent=31 // pred_region
        _
      $region36: #{fwd.10} parent=31 // pred_fallthru
        _
    $region32: #{fwd.10} parent=5 // pred_fallthru
      _
    %p521 = scmp.le.s32.totalorder 2, %s9
    // Predicated region
    $region37: #{fwd.10} parent=5 // pred_check
      %p522 = pneg %p521
    $region38: #{fwd.10} parent=5 // pred_check_branch
      %524 = sbr.rel (%p522) target = $region40
    $region39: #{fwd.10} parent=5 // pred_region
      %s525 = ssub.s32 %s9, 2
      // Predicated region
      $region41: #{fwd.10} parent=39 // pred_check
        %p526 = pneg %p106
      $region42: #{fwd.10} parent=39 // pred_check_branch
        %528 = sbr.rel (%p526) target = $region44
      $region43: #{fwd.10} parent=39 // pred_region
        %p529 = scmp.lt.s32.totalorder %s15, 1
        %s530 = scalar_select %p529, %s15, 1
        %s531 = smul.addr %s530, 2
        %s532 = smul.addr %s531, 8
        %s533 = scalar_lea.vmem %s3, %s532
      $region44: #{fwd.10} parent=39 // pred_fallthru
        _
    $region40: #{fwd.10} parent=5 // pred_fallthru
      _
  $region6: #{fwd.10} parent=0 // loop_footer
    %s13 = sadd.s32 1, %s9
  $region7: #{fwd.10} parent=0 // loop_footer_branch
    %8 = sbr.rel target = $region3
  $region8: #{fwd.10} parent=0 // loop_exit
    _

// kernel: fwd.12
$region0: #{fwd.12}
  #allocation0 [shape = 'u32[]', space=smem, size = 0x4, offset = 0x4, fixed_abs, tag = 'smem constant byte address 0x4 - core index']
  #allocation1 [shape = 'u32[144,128]{1,0:T(1,128)}', space=vmem, size = 0x12000, scoped, tag = 'internal scratch']
  %s0 = inlined_call_operand.vmem [shape: f32[2,10,128], index: 0, kind: input, shape index: {}]
  %s1 = inlined_call_operand.vmem [shape: bf16[3,128,128], index: 1, kind: input, shape index: {}]
  %s2 = inlined_call_operand.vmem [shape: f32[1,128], index: 2, kind: input, shape index: {}]
  %s3 = inlined_call_operand.vmem [shape: bf16[128,128], index: 3, kind: input, shape index: {}]
  %s4 = inlined_call_operand.vmem [shape: f32[1,128], index: 4, kind: input, shape index: {}]
  %s5 = inlined_call_operand.vmem [shape: f32[2,8,128], index: 5, kind: output, shape index: {}]
  %s6 = sld [smem:[#allocation0]]
  $region53: #{fwd.12} parent=0
    _
  %s8 = ssub.s32 1, %s6
  %s9 = scalar_select 0, %s8, %s6
  loop: start=0, step=1, limit=4
  $region2: #{fwd.12} parent=0 // loop_pre_header
    _
  $region3: #{fwd.12} parent=0 // loop_header
    %s11 = sphi 0, %s15
    %p12 = scmp.ge.s32.totalorder %s11, 4
    %s21 = sphi 0, %s23
    %s24 = sphi 0, %s21
    %s25 = sphi 0, %s24
    %s41 = sphi 0, %s25
    %s45 = sphi 0, %s45
    %s47 = sphi 0, %s45
    %s48 = sphi 0, %s47
    %s62 = sphi 0, %s48
    %s66 = sphi 0, %s66
    %s68 = sphi 0, %s66
    %s69 = sphi 0, %s68
    %s83 = sphi 0, %s69
    %s87 = sphi 0, %s87
    %s89 = sphi 0, %s87
    %s90 = sphi 0, %s89
    %s104 = sphi 0, %s90
    %s108 = sphi 0, %s108
    %s110 = sphi 0, %s108
    %s111 = sphi 0, %s110
    %s125 = sphi 0, %s111
    %s131 = sphi 0, %s133
    %s134 = sphi 0, %s131
    %s135 = sphi 0, %s134
    %s151 = sphi 0, %s135
  $region4: #{fwd.12} parent=0 // loop_header_branch
    %14 = sbr.rel (%p12) target = $region8
  $region5: #{fwd.12} parent=0 // loop_body
    %s16 = ssub.s32 %s11, 1
    %s17 = ssub.s32 %s11, 2
    %s18 = sadd.s32 %s11, 1
    %s19 = ssub.s32 %s11, %s18
    %p20 = scmp.eq.s32.totalorder %s19, 0
    %s22 = sadd.s32 %s21, 1
    %s23 = scalar_select %p20, %s21, %s22
    %p26 = pneg %p20
    %p27 = scmp.eq.s32.totalorder %s11, 1
    %p28 = por %p26, %p27
    %p29 = scmp.ne.s32.totalorder %s21, %s24
    %p30 = scmp.eq.s32.totalorder %s11, 0
    %p31 = por %p29, %p30
    %p32 = scmp.ne.s32.totalorder %s21, %s24
    %p33 = scmp.eq.s32.totalorder %s16, 1
    %p34 = por %p32, %p33
    %p35 = scmp.ne.s32.totalorder %s24, %s25
    %p36 = scmp.eq.s32.totalorder %s16, 0
    %p37 = por %p35, %p36
    %p38 = scmp.ne.s32.totalorder %s24, %s25
    %p39 = scmp.eq.s32.totalorder %s17, 1
    %p40 = por %p38, %p39
    %p42 = scmp.ne.s32.totalorder %s25, %s41
    %p43 = scmp.eq.s32.totalorder %s17, 0
    %p44 = por %p42, %p43
    %s46 = sadd.s32 %s45, 1
    %p49 = scmp.eq.s32.totalorder %s11, 1
    %p50 = scmp.ne.s32.totalorder %s45, %s47
    %p51 = scmp.eq.s32.totalorder %s11, 0
    %p52 = por %p50, %p51
    %p53 = scmp.ne.s32.totalorder %s45, %s47
    %p54 = scmp.eq.s32.totalorder %s16, 1
    %p55 = por %p53, %p54
    %p56 = scmp.ne.s32.totalorder %s47, %s48
    %p57 = scmp.eq.s32.totalorder %s16, 0
    %p58 = por %p56, %p57
    %p59 = scmp.ne.s32.totalorder %s47, %s48
    %p60 = scmp.eq.s32.totalorder %s17, 1
    %p61 = por %p59, %p60
    %p63 = scmp.ne.s32.totalorder %s48, %s62
    %p64 = scmp.eq.s32.totalorder %s17, 0
    %p65 = por %p63, %p64
    %s67 = sadd.s32 %s66, 1
    %p70 = scmp.eq.s32.totalorder %s11, 1
    %p71 = scmp.ne.s32.totalorder %s66, %s68
    %p72 = scmp.eq.s32.totalorder %s11, 0
    %p73 = por %p71, %p72
    %p74 = scmp.ne.s32.totalorder %s66, %s68
    %p75 = scmp.eq.s32.totalorder %s16, 1
    %p76 = por %p74, %p75
    %p77 = scmp.ne.s32.totalorder %s68, %s69
    %p78 = scmp.eq.s32.totalorder %s16, 0
    %p79 = por %p77, %p78
    %p80 = scmp.ne.s32.totalorder %s68, %s69
    %p81 = scmp.eq.s32.totalorder %s17, 1
    %p82 = por %p80, %p81
    %p84 = scmp.ne.s32.totalorder %s69, %s83
    %p85 = scmp.eq.s32.totalorder %s17, 0
    %p86 = por %p84, %p85
    %s88 = sadd.s32 %s87, 1
    %p91 = scmp.eq.s32.totalorder %s11, 1
    %p92 = scmp.ne.s32.totalorder %s87, %s89
    %p93 = scmp.eq.s32.totalorder %s11, 0
    %p94 = por %p92, %p93
    %p95 = scmp.ne.s32.totalorder %s87, %s89
    %p96 = scmp.eq.s32.totalorder %s16, 1
    %p97 = por %p95, %p96
    %p98 = scmp.ne.s32.totalorder %s89, %s90
    %p99 = scmp.eq.s32.totalorder %s16, 0
    %p100 = por %p98, %p99
    %p101 = scmp.ne.s32.totalorder %s89, %s90
    %p102 = scmp.eq.s32.totalorder %s17, 1
    %p103 = por %p101, %p102
    %p105 = scmp.ne.s32.totalorder %s90, %s104
    %p106 = scmp.eq.s32.totalorder %s17, 0
    %p107 = por %p105, %p106
    %s109 = sadd.s32 %s108, 1
    %p112 = scmp.eq.s32.totalorder %s11, 1
    %p113 = scmp.ne.s32.totalorder %s108, %s110
    %p114 = scmp.eq.s32.totalorder %s11, 0
    %p115 = por %p113, %p114
    %p116 = scmp.ne.s32.totalorder %s108, %s110
    %p117 = scmp.eq.s32.totalorder %s16, 1
    %p118 = por %p116, %p117
    %p119 = scmp.ne.s32.totalorder %s110, %s111
    %p120 = scmp.eq.s32.totalorder %s16, 0
    %p121 = por %p119, %p120
    %p122 = scmp.ne.s32.totalorder %s110, %s111
    %p123 = scmp.eq.s32.totalorder %s17, 1
    %p124 = por %p122, %p123
    %p126 = scmp.ne.s32.totalorder %s111, %s125
    %p127 = scmp.eq.s32.totalorder %s17, 0
    %p128 = por %p126, %p127
    %s129 = ssub.s32 %s11, %s18
    %p130 = scmp.eq.s32.totalorder %s129, 0
    %s132 = sadd.s32 %s131, 1
    %s133 = scalar_select %p130, %s131, %s132
    %p136 = pneg %p130
    %p137 = scmp.eq.s32.totalorder %s11, 1
    %p138 = por %p136, %p137
    %p139 = scmp.ne.s32.totalorder %s131, %s134
    %p140 = scmp.eq.s32.totalorder %s11, 0
    %p141 = por %p139, %p140
    %p142 = scmp.ne.s32.totalorder %s131, %s134
    %p143 = scmp.eq.s32.totalorder %s16, 1
    %p144 = por %p142, %p143
    %p145 = scmp.ne.s32.totalorder %s134, %s135
    %p146 = scmp.eq.s32.totalorder %s16, 0
    %p147 = por %p145, %p146
    %p148 = scmp.ne.s32.totalorder %s134, %s135
    %p149 = scmp.eq.s32.totalorder %s17, 1
    %p150 = por %p148, %p149
    %p152 = scmp.ne.s32.totalorder %s135, %s151
    %p153 = scmp.eq.s32.totalorder %s17, 0
    %p154 = por %p152, %p153
    %p155 = scmp.le.s32.totalorder 1, %s11
    %p156 = scmp.lt.s32.totalorder %s11, 3
    %p157 = pnand %p155, %p156
    %p158 = pneg %p157
    // Predicated region
    $region9: #{fwd.12} parent=5 // pred_check
      _
    $region10: #{fwd.12} parent=5 // pred_check_branch
      %160 = sbr.rel (%p157) target = $region12
    $region11: #{fwd.12} parent=5 // pred_region
      %s161 = ssub.s32 %s11, 1
      // Predicated region
      $region13: #{fwd.12} parent=11 // pred_check
        %p162 = pneg %p58
      $region14: #{fwd.12} parent=11 // pred_check_branch
        %164 = sbr.rel (%p162) target = $region16
      $region15: #{fwd.12} parent=11 // pred_region
        _
      $region16: #{fwd.12} parent=11 // pred_fallthru
        _
      // Predicated region
      $region17: #{fwd.12} parent=11 // pred_check
        %p165 = pneg %p79
      $region18: #{fwd.12} parent=11 // pred_check_branch
        %167 = sbr.rel (%p165) target = $region20
      $region19: #{fwd.12} parent=11 // pred_region
        _
      $region20: #{fwd.12} parent=11 // pred_fallthru
        _
      // Predicated region
      $region21: #{fwd.12} parent=11 // pred_check
        %p168 = pneg %p100
      $region22: #{fwd.12} parent=11 // pred_check_branch
        %170 = sbr.rel (%p168) target = $region24
      $region23: #{fwd.12} parent=11 // pred_region
        _
      $region24: #{fwd.12} parent=11 // pred_fallthru
        _
      // Predicated region
      $region25: #{fwd.12} parent=11 // pred_check
        %p171 = pneg %p121
      $region26: #{fwd.12} parent=11 // pred_check_branch
        %173 = sbr.rel (%p171) target = $region28
      $region27: #{fwd.12} parent=11 // pred_region
        _
      $region28: #{fwd.12} parent=11 // pred_fallthru
        _
    $region12: #{fwd.12} parent=5 // pred_fallthru
      _
    %p174 = scmp.lt.s32.totalorder %s11, 2
    // Predicated region
    $region29: #{fwd.12} parent=5 // pred_check
      %p175 = pneg %p174
    $region30: #{fwd.12} parent=5 // pred_check_branch
      %177 = sbr.rel (%p175) target = $region32
    $region31: #{fwd.12} parent=5 // pred_region
      // Predicated region
      $region33: #{fwd.12} parent=31 // pred_check
        %p178 = pneg %p31
      $region34: #{fwd.12} parent=31 // pred_check_branch
        %180 = sbr.rel (%p178) target = $region36
      $region35: #{fwd.12} parent=31 // pred_region
        %p181 = scmp.lt.s32.totalorder %s11, 1
        %s182 = scalar_select %p181, %s11, 1
        %s183 = smul.addr %s182, 2
        %s184 = smul.addr %s183, 8
        %s185 = scalar_lea.vmem %s0, %s184
      $region36: #{fwd.12} parent=31 // pred_fallthru
        _
    $region32: #{fwd.12} parent=5 // pred_fallthru
      _
    %p186 = scmp.le.s32.totalorder 1, %s11
    %p187 = scmp.lt.s32.totalorder %s11, 3
    %p188 = pnand %p186, %p187
    %p189 = pneg %p188
    // Predicated region
    $region37: #{fwd.12} parent=5 // pred_check
      _
    $region38: #{fwd.12} parent=5 // pred_check_branch
      %191 = sbr.rel (%p188) target = $region40
    $region39: #{fwd.12} parent=5 // pred_region
      %s192 = ssub.s32 %s11, 1
      %p193 = scmp.lt.s32.totalorder %s16, 1
      %s194 = scalar_select %p193, %s16, 1
      %s195 = smul.addr %s194, 2
      %s196 = smul.addr %s195, 8
      %s197 = scalar_lea.vmem %s0, %s196
      %p198 = pneg %p37
      %p199 = pneg %p34
      %p200 = pneg %p58
      %p201 = pneg %p55
      %p202 = pneg %p79
      %p203 = pneg %p76
      %p204 = pneg %p100
      %p205 = pneg %p97
      %p206 = pneg %p121
      %p207 = pneg %p118
      %p208 = pneg %p147
      %p209 = pneg %p144
      %p210 = scmp.lt.s32.totalorder %s16, 1
      %s211 = scalar_select %p210, %s16, 1
      %s212 = smul.addr %s211, 8
      %s213 = scalar_lea.vmem %s5, %s212
      %p214 = scmp.lt.s32.totalorder %s16, 1
      %s215 = scalar_select %p214, %s16, 1
      %s216 = smul.addr %s215, 2
      %s217 = smul.addr %s216, 8
      %s218 = scalar_lea.vmem %s0, %s217
      %p219 = scmp.lt.s32.totalorder %s16, 1
      %s220 = scalar_select %p219, %s16, 1
      %s221 = smul.addr %s220, 8
      %s222 = scalar_lea.vmem %s5, %s221
      %v224 = vld [vmem:[%s218] sm:$0xff]
      %v225 = vpack.c.bf16 %v224, %v224
      %v226 = vld [vmem:[%s1] sm:$0xf]
      %v227 = vld [vmem:[%s1 + $0x4] sm:$0xf]
      %v228 = vld [vmem:[%s1 + $0x8] sm:$0xf]
      %v229 = vld [vmem:[%s1 + $0xc] sm:$0xf]
      %v230 = vld [vmem:[%s1 + $0x10] sm:$0xf]
      %v231 = vld [vmem:[%s1 + $0x14] sm:$0xf]
      %v232 = vld [vmem:[%s1 + $0x18] sm:$0xf]
      %v233 = vld [vmem:[%s1 + $0x1c] sm:$0xf]
      %v234 = vld [vmem:[%s1 + $0x20] sm:$0xf]
      %v235 = vld [vmem:[%s1 + $0x24] sm:$0xf]
      %v236 = vld [vmem:[%s1 + $0x28] sm:$0xf]
      %v237 = vld [vmem:[%s1 + $0x2c] sm:$0xf]
      %v238 = vld [vmem:[%s1 + $0x30] sm:$0xf]
      %v239 = vld [vmem:[%s1 + $0x34] sm:$0xf]
      %v240 = vld [vmem:[%s1 + $0x38] sm:$0xf]
      %v241 = vld [vmem:[%s1 + $0x3c] sm:$0xf]
      %v242 = vld [vmem:[%s218 + $0x1] sm:$0xff]
      %v243 = vpack.c.bf16 %v242, %v242
      %s244 = scalar_lea.vmem %s1, 64
      %v245 = vld [vmem:[%s244] sm:$0xf]
      %v246 = vld [vmem:[%s244 + $0x4] sm:$0xf]
      %v247 = vld [vmem:[%s244 + $0x8] sm:$0xf]
      %v248 = vld [vmem:[%s244 + $0xc] sm:$0xf]
      %v249 = vld [vmem:[%s244 + $0x10] sm:$0xf]
      %v250 = vld [vmem:[%s244 + $0x14] sm:$0xf]
      %v251 = vld [vmem:[%s244 + $0x18] sm:$0xf]
      %v252 = vld [vmem:[%s244 + $0x1c] sm:$0xf]
      %v253 = vld [vmem:[%s244 + $0x20] sm:$0xf]
      %v254 = vld [vmem:[%s244 + $0x24] sm:$0xf]
      %v255 = vld [vmem:[%s244 + $0x28] sm:$0xf]
      %v256 = vld [vmem:[%s244 + $0x2c] sm:$0xf]
      %v257 = vld [vmem:[%s244 + $0x30] sm:$0xf]
      %v258 = vld [vmem:[%s244 + $0x34] sm:$0xf]
      %v259 = vld [vmem:[%s244 + $0x38] sm:$0xf]
      %v260 = vld [vmem:[%s244 + $0x3c] sm:$0xf]
      %v277 = vunpack.c.l.b16 %v245
      %v278 = vunpack.c.l.b16 %v246
      %v279 = vunpack.c.l.b16 %v247
      %v280 = vunpack.c.l.b16 %v248
      %v281 = vunpack.c.l.b16 %v249
      %v282 = vunpack.c.l.b16 %v250
      %v283 = vunpack.c.l.b16 %v251
      %v284 = vunpack.c.l.b16 %v252
      %v285 = vunpack.c.l.b16 %v253
      %v286 = vunpack.c.l.b16 %v254
      %v287 = vunpack.c.l.b16 %v255
      %v288 = vunpack.c.l.b16 %v256
      %v289 = vunpack.c.l.b16 %v257
      %v290 = vunpack.c.l.b16 %v258
      %v291 = vunpack.c.l.b16 %v259
      %v292 = vunpack.c.l.b16 %v260
      %v293 = vpack.c.b16 %v278, %v277
      %v294 = vpack.c.b16 %v280, %v279
      %v295 = vpack.c.b16 %v282, %v281
      %v296 = vpack.c.b16 %v284, %v283
      %v297 = vpack.c.b16 %v286, %v285
      %v298 = vpack.c.b16 %v288, %v287
      %v299 = vpack.c.b16 %v290, %v289
      %v300 = vpack.c.b16 %v292, %v291
      %309 = vmatprep.subr.bf16.mxu0 0
      %310 = vmatpush1.bf16.msra.mxu0 %v293
      %311 = vmatprep.subr.bf16.mxu0 0
      %312 = vmatpush1.bf16.msra.mxu0 %v294
      %313 = vmatprep.subr.bf16.mxu0 0
      %314 = vmatpush1.bf16.msra.mxu0 %v295
      %315 = vmatprep.subr.bf16.mxu0 0
      %316 = vmatpush1.bf16.msra.mxu0 %v296
      %317 = vmatprep.subr.bf16.mxu0 0
      %318 = vmatpush1.bf16.msra.mxu0 %v297
      %319 = vmatprep.subr.bf16.mxu0 0
      %320 = vmatpush1.bf16.msra.mxu0 %v298
      %321 = vmatprep.subr.bf16.mxu0 0
      %322 = vmatpush1.bf16.msra.mxu0 %v299
      %323 = vmatprep.subr.bf16.mxu0 0
      %324 = vmatpush1.bf16.msra.mxu0 %v300
      %325 = vmatprep.subr.bf16.mxu0 0
      %326 = vmatpush1.bf16.msra.mxu0 0
      %327 = vmatprep.subr.bf16.mxu0 0
      %328 = vmatpush1.bf16.msra.mxu0 0
      %329 = vmatprep.subr.bf16.mxu0 0
      %330 = vmatpush1.bf16.msra.mxu0 0
      %331 = vmatprep.subr.bf16.mxu0 0
      %332 = vmatpush1.bf16.msra.mxu0 0
      %333 = vmatprep.subr.bf16.mxu0 0
      %334 = vmatpush1.bf16.msra.mxu0 0
      %335 = vmatprep.subr.bf16.mxu0 0
      %336 = vmatpush1.bf16.msra.mxu0 0
      %337 = vmatprep.subr.bf16.mxu0 0
      %338 = vmatpush1.bf16.msra.mxu0 0
      %339 = vmatprep.subr.bf16.mxu0 0
      %340 = vmatpush1.bf16.msra.mxu0 0
      %341 = vmatprep.mubr.bf16.mxu0 0
      %342 = vmatmul.mubr.bf16.gmra.mrb[0].mxu0 %v243
      %v343 = vpop.f32.mrb[0].mxu0
      %v344 = vadd.f32 0.0, %v343
      %v345 = vpop.f32.mrb[0].mxu0
      %v346 = vpop.f32.mrb[0].mxu0
      %v347 = vpop.f32.mrb[0].mxu0
      %348 = vdwg.mxu0
      %v365 = vunpack.c.l.b16 %v226
      %v366 = vunpack.c.l.b16 %v227
      %v367 = vunpack.c.l.b16 %v228
      %v368 = vunpack.c.l.b16 %v229
      %v369 = vunpack.c.l.b16 %v230
      %v370 = vunpack.c.l.b16 %v231
      %v371 = vunpack.c.l.b16 %v232
      %v372 = vunpack.c.l.b16 %v233
      %v373 = vunpack.c.l.b16 %v234
      %v374 = vunpack.c.l.b16 %v235
      %v375 = vunpack.c.l.b16 %v236
      %v376 = vunpack.c.l.b16 %v237
      %v377 = vunpack.c.l.b16 %v238
      %v378 = vunpack.c.l.b16 %v239
      %v379 = vunpack.c.l.b16 %v240
      %v380 = vunpack.c.l.b16 %v241
      %v381 = vpack.c.b16 %v366, %v365
      %v382 = vpack.c.b16 %v368, %v367
      %v383 = vpack.c.b16 %v370, %v369
      %v384 = vpack.c.b16 %v372, %v371
      %v385 = vpack.c.b16 %v374, %v373
      %v386 = vpack.c.b16 %v376, %v375
      %v387 = vpack.c.b16 %v378, %v377
      %v388 = vpack.c.b16 %v380, %v379
      %397 = vmatprep.subr.bf16.mxu0 0
      %398 = vmatpush1.bf16.msra.mxu0 %v381
      %399 = vmatprep.subr.bf16.mxu0 0
      %400 = vmatpush1.bf16.msra.mxu0 %v382
      %401 = vmatprep.subr.bf16.mxu0 0
      %402 = vmatpush1.bf16.msra.mxu0 %v383
      %403 = vmatprep.subr.bf16.mxu0 0
      %404 = vmatpush1.bf16.msra.mxu0 %v384
      %405 = vmatprep.subr.bf16.mxu0 0
      %406 = vmatpush1.bf16.msra.mxu0 %v385
      %407 = vmatprep.subr.bf16.mxu0 0
      %408 = vmatpush1.bf16.msra.mxu0 %v386
      %409 = vmatprep.subr.bf16.mxu0 0
      %410 = vmatpush1.bf16.msra.mxu0 %v387
      %411 = vmatprep.subr.bf16.mxu0 0
      %412 = vmatpush1.bf16.msra.mxu0 %v388
      %413 = vmatprep.subr.bf16.mxu0 0
      %414 = vmatpush1.bf16.msra.mxu0 0
      %415 = vmatprep.subr.bf16.mxu0 0
      %416 = vmatpush1.bf16.msra.mxu0 0
      %417 = vmatprep.subr.bf16.mxu0 0
      %418 = vmatpush1.bf16.msra.mxu0 0
      %419 = vmatprep.subr.bf16.mxu0 0
      %420 = vmatpush1.bf16.msra.mxu0 0
      %421 = vmatprep.subr.bf16.mxu0 0
      %422 = vmatpush1.bf16.msra.mxu0 0
      %423 = vmatprep.subr.bf16.mxu0 0
      %424 = vmatpush1.bf16.msra.mxu0 0
      %425 = vmatprep.subr.bf16.mxu0 0
      %426 = vmatpush1.bf16.msra.mxu0 0
      %427 = vmatprep.subr.bf16.mxu0 0
      %428 = vmatpush1.bf16.msra.mxu0 0
      %429 = vmatprep.mubr.bf16.mxu0 0
      %430 = vmatmul.mubr.bf16.gmra.mrb[0].mxu0 %v225
      %v431 = vpop.f32.mrb[0].mxu0
      %v432 = vadd.f32 %v344, %v431
      %v433 = vpop.f32.mrb[0].mxu0
      %v434 = vpop.f32.mrb[0].mxu0
      %v435 = vpop.f32.mrb[0].mxu0
      %436 = vdwg.mxu0
      %v437 = vld [vmem:[%s218 + $0x2] sm:$0xff]
      %v438 = vpack.c.bf16 %v437, %v437
      %s439 = scalar_lea.vmem %s1, 128
      %v440 = vld [vmem:[%s439] sm:$0xf]
      %v441 = vld [vmem:[%s439 + $0x4] sm:$0xf]
      %v442 = vld [vmem:[%s439 + $0x8] sm:$0xf]
      %v443 = vld [vmem:[%s439 + $0xc] sm:$0xf]
      %v444 = vld [vmem:[%s439 + $0x10] sm:$0xf]
      %v445 = vld [vmem:[%s439 + $0x14] sm:$0xf]
      %v446 = vld [vmem:[%s439 + $0x18] sm:$0xf]
      %v447 = vld [vmem:[%s439 + $0x1c] sm:$0xf]
      %v448 = vld [vmem:[%s439 + $0x20] sm:$0xf]
      %v449 = vld [vmem:[%s439 + $0x24] sm:$0xf]
      %v450 = vld [vmem:[%s439 + $0x28] sm:$0xf]
      %v451 = vld [vmem:[%s439 + $0x2c] sm:$0xf]
      %v452 = vld [vmem:[%s439 + $0x30] sm:$0xf]
      %v453 = vld [vmem:[%s439 + $0x34] sm:$0xf]
      %v454 = vld [vmem:[%s439 + $0x38] sm:$0xf]
      %v455 = vld [vmem:[%s439 + $0x3c] sm:$0xf]
      %v472 = vunpack.c.l.b16 %v440
      %v473 = vunpack.c.l.b16 %v441
      %v474 = vunpack.c.l.b16 %v442
      %v475 = vunpack.c.l.b16 %v443
      %v476 = vunpack.c.l.b16 %v444
      %v477 = vunpack.c.l.b16 %v445
      %v478 = vunpack.c.l.b16 %v446
      %v479 = vunpack.c.l.b16 %v447
      %v480 = vunpack.c.l.b16 %v448
      %v481 = vunpack.c.l.b16 %v449
      %v482 = vunpack.c.l.b16 %v450
      %v483 = vunpack.c.l.b16 %v451
      %v484 = vunpack.c.l.b16 %v452
      %v485 = vunpack.c.l.b16 %v453
      %v486 = vunpack.c.l.b16 %v454
      %v487 = vunpack.c.l.b16 %v455
      %v488 = vpack.c.b16 %v473, %v472
      %v489 = vpack.c.b16 %v475, %v474
      %v490 = vpack.c.b16 %v477, %v476
      %v491 = vpack.c.b16 %v479, %v478
      %v492 = vpack.c.b16 %v481, %v480
      %v493 = vpack.c.b16 %v483, %v482
      %v494 = vpack.c.b16 %v485, %v484
      %v495 = vpack.c.b16 %v487, %v486
      %504 = vmatprep.subr.bf16.mxu0 0
      %505 = vmatpush1.bf16.msra.mxu0 %v488
      %506 = vmatprep.subr.bf16.mxu0 0
      %507 = vmatpush1.bf16.msra.mxu0 %v489
      %508 = vmatprep.subr.bf16.mxu0 0
      %509 = vmatpush1.bf16.msra.mxu0 %v490
      %510 = vmatprep.subr.bf16.mxu0 0
      %511 = vmatpush1.bf16.msra.mxu0 %v491
      %512 = vmatprep.subr.bf16.mxu0 0
      %513 = vmatpush1.bf16.msra.mxu0 %v492
      %514 = vmatprep.subr.bf16.mxu0 0
      %515 = vmatpush1.bf16.msra.mxu0 %v493
      %516 = vmatprep.subr.bf16.mxu0 0
      %517 = vmatpush1.bf16.msra.mxu0 %v494
      %518 = vmatprep.subr.bf16.mxu0 0
      %519 = vmatpush1.bf16.msra.mxu0 %v495
      %520 = vmatprep.subr.bf16.mxu0 0
      %521 = vmatpush1.bf16.msra.mxu0 0
      %522 = vmatprep.subr.bf16.mxu0 0
      %523 = vmatpush1.bf16.msra.mxu0 0
      %524 = vmatprep.subr.bf16.mxu0 0
      %525 = vmatpush1.bf16.msra.mxu0 0
      %526 = vmatprep.subr.bf16.mxu0 0
      %527 = vmatpush1.bf16.msra.mxu0 0
      %528 = vmatprep.subr.bf16.mxu0 0
      %529 = vmatpush1.bf16.msra.mxu0 0
      %530 = vmatprep.subr.bf16.mxu0 0
      %531 = vmatpush1.bf16.msra.mxu0 0
      %532 = vmatprep.subr.bf16.mxu0 0
      %533 = vmatpush1.bf16.msra.mxu0 0
      %534 = vmatprep.subr.bf16.mxu0 0
      %535 = vmatpush1.bf16.msra.mxu0 0
      %536 = vmatprep.mubr.bf16.mxu0 0
      %537 = vmatmul.mubr.bf16.gmra.mrb[0].mxu0 %v438
      %v538 = vpop.f32.mrb[0].mxu0
      %v539 = vadd.f32 0.0, %v538
      %v540 = vpop.f32.mrb[0].mxu0
      %v541 = vpop.f32.mrb[0].mxu0
      %v542 = vpop.f32.mrb[0].mxu0
      %543 = vdwg.mxu0
      %v544 = vadd.f32 %v432, %v539
      %v545 = vld [vmem:[%s2] sm:$0x1]
      %v547 = vlaneseq
      %v548 = vshrl.u32 %v547, 7
      %v549 = vsub.s32 0, %v548
      %v550 = vrot.slane %v545, %v549
      %v552 = vadd.f32 %v544, %v550
      %v553 = vmax.f32 %v552, 0.0
      %v554 = vpack.c.bf16 %v553, %v553
      %v555 = vld [vmem:[%s3] sm:$0xf]
      %v556 = vld [vmem:[%s3 + $0x4] sm:$0xf]
      %v557 = vld [vmem:[%s3 + $0x8] sm:$0xf]
      %v558 = vld [vmem:[%s3 + $0xc] sm:$0xf]
      %v559 = vld [vmem:[%s3 + $0x10] sm:$0xf]
      %v560 = vld [vmem:[%s3 + $0x14] sm:$0xf]
      %v561 = vld [vmem:[%s3 + $0x18] sm:$0xf]
      %v562 = vld [vmem:[%s3 + $0x1c] sm:$0xf]
      %v563 = vld [vmem:[%s3 + $0x20] sm:$0xf]
      %v564 = vld [vmem:[%s3 + $0x24] sm:$0xf]
      %v565 = vld [vmem:[%s3 + $0x28] sm:$0xf]
      %v566 = vld [vmem:[%s3 + $0x2c] sm:$0xf]
      %v567 = vld [vmem:[%s3 + $0x30] sm:$0xf]
      %v568 = vld [vmem:[%s3 + $0x34] sm:$0xf]
      %v569 = vld [vmem:[%s3 + $0x38] sm:$0xf]
      %v570 = vld [vmem:[%s3 + $0x3c] sm:$0xf]
      %v571 = vld [vmem:[%s4] sm:$0x1]
      %v573 = vlaneseq
      %v574 = vshrl.u32 %v573, 7
      %v575 = vsub.s32 0, %v574
      %v576 = vrot.slane %v571, %v575
      %v594 = vunpack.c.l.b16 %v555
      %v595 = vunpack.c.l.b16 %v556
      %v596 = vunpack.c.l.b16 %v557
      %v597 = vunpack.c.l.b16 %v558
      %v598 = vunpack.c.l.b16 %v559
      %v599 = vunpack.c.l.b16 %v560
      %v600 = vunpack.c.l.b16 %v561
      %v601 = vunpack.c.l.b16 %v562
      %v602 = vunpack.c.l.b16 %v563
      %v603 = vunpack.c.l.b16 %v564
      %v604 = vunpack.c.l.b16 %v565
      %v605 = vunpack.c.l.b16 %v566
      %v606 = vunpack.c.l.b16 %v567
      %v607 = vunpack.c.l.b16 %v568
      %v608 = vunpack.c.l.b16 %v569
      %v609 = vunpack.c.l.b16 %v570
      %v610 = vpack.c.b16 %v595, %v594
      %v611 = vpack.c.b16 %v597, %v596
      %v612 = vpack.c.b16 %v599, %v598
      %v613 = vpack.c.b16 %v601, %v600
      %v614 = vpack.c.b16 %v603, %v602
      %v615 = vpack.c.b16 %v605, %v604
      %v616 = vpack.c.b16 %v607, %v606
      %v617 = vpack.c.b16 %v609, %v608
      %626 = vmatprep.subr.bf16.mxu0 0
      %627 = vmatpush1.bf16.msra.mxu0 %v610
      %628 = vmatprep.subr.bf16.mxu0 0
      %629 = vmatpush1.bf16.msra.mxu0 %v611
      %630 = vmatprep.subr.bf16.mxu0 0
      %631 = vmatpush1.bf16.msra.mxu0 %v612
      %632 = vmatprep.subr.bf16.mxu0 0
      %633 = vmatpush1.bf16.msra.mxu0 %v613
      %634 = vmatprep.subr.bf16.mxu0 0
      %635 = vmatpush1.bf16.msra.mxu0 %v614
      %636 = vmatprep.subr.bf16.mxu0 0
      %637 = vmatpush1.bf16.msra.mxu0 %v615
      %638 = vmatprep.subr.bf16.mxu0 0
      %639 = vmatpush1.bf16.msra.mxu0 %v616
      %640 = vmatprep.subr.bf16.mxu0 0
      %641 = vmatpush1.bf16.msra.mxu0 %v617
      %642 = vmatprep.subr.bf16.mxu0 0
      %643 = vmatpush1.bf16.msra.mxu0 0
      %644 = vmatprep.subr.bf16.mxu0 0
      %645 = vmatpush1.bf16.msra.mxu0 0
      %646 = vmatprep.subr.bf16.mxu0 0
      %647 = vmatpush1.bf16.msra.mxu0 0
      %648 = vmatprep.subr.bf16.mxu0 0
      %649 = vmatpush1.bf16.msra.mxu0 0
      %650 = vmatprep.subr.bf16.mxu0 0
      %651 = vmatpush1.bf16.msra.mxu0 0
      %652 = vmatprep.subr.bf16.mxu0 0
      %653 = vmatpush1.bf16.msra.mxu0 0
      %654 = vmatprep.subr.bf16.mxu0 0
      %655 = vmatpush1.bf16.msra.mxu0 0
      %656 = vmatprep.subr.bf16.mxu0 0
      %657 = vmatpush1.bf16.msra.mxu0 0
      %658 = vmatprep.mubr.bf16.mxu0 0
      %659 = vmatmul.mubr.bf16.gmra.mrb[0].mxu0 %v554
      %v660 = vpop.f32.mrb[0].mxu0
      %v661 = vadd.f32 %v576, %v660
      %v662 = vpop.f32.mrb[0].mxu0
      %v663 = vpop.f32.mrb[0].mxu0
      %v664 = vpop.f32.mrb[0].mxu0
      %665 = vdwg.mxu0
      %666 = vst [vmem:[%s222] sm:$0xff] %v661
      %p667 = scmp.lt.s32.totalorder %s16, 1
      %s668 = scalar_select %p667, %s16, 1
      %s669 = smul.addr %s668, 8
      %s670 = scalar_lea.vmem %s5, %s669
      // Predicated region
      $region41: #{fwd.12} parent=39 // pred_check
        %p671 = pneg %p144
      $region42: #{fwd.12} parent=39 // pred_check_branch
        %673 = sbr.rel (%p671) target = $region44
      $region43: #{fwd.12} parent=39 // pred_region
        _
      $region44: #{fwd.12} parent=39 // pred_fallthru
        _
    $region40: #{fwd.12} parent=5 // pred_fallthru
      _
    %p674 = scmp.le.s32.totalorder 2, %s11
    // Predicated region
    $region45: #{fwd.12} parent=5 // pred_check
      %p675 = pneg %p674
    $region46: #{fwd.12} parent=5 // pred_check_branch
      %677 = sbr.rel (%p675) target = $region48
    $region47: #{fwd.12} parent=5 // pred_region
      %s678 = ssub.s32 %s11, 2
      // Predicated region
      $region49: #{fwd.12} parent=47 // pred_check
        %p679 = pneg %p150
      $region50: #{fwd.12} parent=47 // pred_check_branch
        %681 = sbr.rel (%p679) target = $region52
      $region51: #{fwd.12} parent=47 // pred_region
        %p682 = scmp.lt.s32.totalorder %s17, 1
        %s683 = scalar_select %p682, %s17, 1
        %s684 = smul.addr %s683, 8
        %s685 = scalar_lea.vmem %s5, %s684
      $region52: #{fwd.12} parent=47 // pred_fallthru
        _
    $region48: #{fwd.12} parent=5 // pred_fallthru
      _
  $region6: #{fwd.12} parent=0 // loop_footer
    %s15 = sadd.s32 1, %s11
  $region7: #{fwd.12} parent=0 // loop_footer_branch
    %10 = sbr.rel target = $region3
  $region8: #{fwd.12} parent=0 // loop_exit
    _

// kernel: fwd.17
$region0: #{fwd.17}
  #allocation0 [shape = 'u32[]', space=smem, size = 0x4, offset = 0x4, fixed_abs, tag = 'smem constant byte address 0x4 - core index']
  #allocation1 [shape = 'u32[144,128]{1,0:T(1,128)}', space=vmem, size = 0x12000, scoped, tag = 'internal scratch']
  %s0 = inlined_call_operand.vmem [shape: f32[2,8,128], index: 0, kind: input, shape index: {}]
  %s1 = inlined_call_operand.vmem [shape: bf16[128,128], index: 1, kind: input, shape index: {}]
  %s2 = inlined_call_operand.vmem [shape: f32[1,128], index: 2, kind: input, shape index: {}]
  %s3 = inlined_call_operand.hbm [shape: f32[2,8,128], index: 3, kind: output, shape index: {}]
  %s4 = sld [smem:[#allocation0]]
  $region45: #{fwd.17} parent=0
    _
  %s6 = ssub.s32 1, %s4
  %s7 = scalar_select 0, %s6, %s4
  $region1: #{fwd.17} parent=0
    #allocation2 [shape = 'u8[8192]{0}', space=vmem, size = 0x2000, scoped, tag = 'output window, operand 0']
    #allocation3 [shape = 's32[2]{0}', space=sflag, size = 0x8, scoped, tag = 'scoped memory for fwd.17']
    %8 = vsyncpa [#allocation3], 0
    %s9 = scalar_lea.sflag [#allocation3], 1
    %10 = vsyncpa %s9, 0
    loop: start=0, step=1, limit=4
    $region2: #{fwd.17} parent=1 // loop_pre_header
      _
    $region3: #{fwd.17} parent=1 // loop_header
      %s12 = sphi 0, %s16
      %p13 = scmp.ge.s32.totalorder %s12, 4
      %s22 = sphi 0, %s24
      %s25 = sphi 0, %s22
      %s26 = sphi 0, %s25
      %s42 = sphi 0, %s26
      %s46 = sphi 0, %s46
      %s48 = sphi 0, %s46
      %s49 = sphi 0, %s48
      %s63 = sphi 0, %s49
      %s67 = sphi 0, %s67
      %s69 = sphi 0, %s67
      %s70 = sphi 0, %s69
      %s84 = sphi 0, %s70
      %s90 = sphi 0, %s92
      %s93 = sphi 0, %s90
      %s94 = sphi 0, %s93
      %s110 = sphi 0, %s94
    $region4: #{fwd.17} parent=1 // loop_header_branch
      %15 = sbr.rel (%p13) target = $region8
    $region5: #{fwd.17} parent=1 // loop_body
      %s17 = ssub.s32 %s12, 1
      %s18 = ssub.s32 %s12, 2
      %s19 = sadd.s32 %s12, 1
      %s20 = ssub.s32 %s12, %s19
      %p21 = scmp.eq.s32.totalorder %s20, 0
      %s23 = sadd.s32 %s22, 1
      %s24 = scalar_select %p21, %s22, %s23
      %p27 = pneg %p21
      %p28 = scmp.eq.s32.totalorder %s12, 1
      %p29 = por %p27, %p28
      %p30 = scmp.ne.s32.totalorder %s22, %s25
      %p31 = scmp.eq.s32.totalorder %s12, 0
      %p32 = por %p30, %p31
      %p33 = scmp.ne.s32.totalorder %s22, %s25
      %p34 = scmp.eq.s32.totalorder %s17, 1
      %p35 = por %p33, %p34
      %p36 = scmp.ne.s32.totalorder %s25, %s26
      %p37 = scmp.eq.s32.totalorder %s17, 0
      %p38 = por %p36, %p37
      %p39 = scmp.ne.s32.totalorder %s25, %s26
      %p40 = scmp.eq.s32.totalorder %s18, 1
      %p41 = por %p39, %p40
      %p43 = scmp.ne.s32.totalorder %s26, %s42
      %p44 = scmp.eq.s32.totalorder %s18, 0
      %p45 = por %p43, %p44
      %s47 = sadd.s32 %s46, 1
      %p50 = scmp.eq.s32.totalorder %s12, 1
      %p51 = scmp.ne.s32.totalorder %s46, %s48
      %p52 = scmp.eq.s32.totalorder %s12, 0
      %p53 = por %p51, %p52
      %p54 = scmp.ne.s32.totalorder %s46, %s48
      %p55 = scmp.eq.s32.totalorder %s17, 1
      %p56 = por %p54, %p55
      %p57 = scmp.ne.s32.totalorder %s48, %s49
      %p58 = scmp.eq.s32.totalorder %s17, 0
      %p59 = por %p57, %p58
      %p60 = scmp.ne.s32.totalorder %s48, %s49
      %p61 = scmp.eq.s32.totalorder %s18, 1
      %p62 = por %p60, %p61
      %p64 = scmp.ne.s32.totalorder %s49, %s63
      %p65 = scmp.eq.s32.totalorder %s18, 0
      %p66 = por %p64, %p65
      %s68 = sadd.s32 %s67, 1
      %p71 = scmp.eq.s32.totalorder %s12, 1
      %p72 = scmp.ne.s32.totalorder %s67, %s69
      %p73 = scmp.eq.s32.totalorder %s12, 0
      %p74 = por %p72, %p73
      %p75 = scmp.ne.s32.totalorder %s67, %s69
      %p76 = scmp.eq.s32.totalorder %s17, 1
      %p77 = por %p75, %p76
      %p78 = scmp.ne.s32.totalorder %s69, %s70
      %p79 = scmp.eq.s32.totalorder %s17, 0
      %p80 = por %p78, %p79
      %p81 = scmp.ne.s32.totalorder %s69, %s70
      %p82 = scmp.eq.s32.totalorder %s18, 1
      %p83 = por %p81, %p82
      %p85 = scmp.ne.s32.totalorder %s70, %s84
      %p86 = scmp.eq.s32.totalorder %s18, 0
      %p87 = por %p85, %p86
      %s88 = ssub.s32 %s12, %s19
      %p89 = scmp.eq.s32.totalorder %s88, 0
      %s91 = sadd.s32 %s90, 1
      %s92 = scalar_select %p89, %s90, %s91
      %p95 = pneg %p89
      %p96 = scmp.eq.s32.totalorder %s12, 1
      %p97 = por %p95, %p96
      %p98 = scmp.ne.s32.totalorder %s90, %s93
      %p99 = scmp.eq.s32.totalorder %s12, 0
      %p100 = por %p98, %p99
      %p101 = scmp.ne.s32.totalorder %s90, %s93
      %p102 = scmp.eq.s32.totalorder %s17, 1
      %p103 = por %p101, %p102
      %p104 = scmp.ne.s32.totalorder %s93, %s94
      %p105 = scmp.eq.s32.totalorder %s17, 0
      %p106 = por %p104, %p105
      %p107 = scmp.ne.s32.totalorder %s93, %s94
      %p108 = scmp.eq.s32.totalorder %s18, 1
      %p109 = por %p107, %p108
      %p111 = scmp.ne.s32.totalorder %s94, %s110
      %p112 = scmp.eq.s32.totalorder %s18, 0
      %p113 = por %p111, %p112
      %p114 = scmp.le.s32.totalorder 1, %s12
      %p115 = scmp.lt.s32.totalorder %s12, 3
      %p116 = pnand %p114, %p115
      %p117 = pneg %p116
      // Predicated region
      $region9: #{fwd.17} parent=5 // pred_check
        _
      $region10: #{fwd.17} parent=5 // pred_check_branch
        %119 = sbr.rel (%p116) target = $region12
      $region11: #{fwd.17} parent=5 // pred_region
        %s120 = ssub.s32 %s12, 1
        // Predicated region
        $region13: #{fwd.17} parent=11 // pred_check
          %p121 = pneg %p59
        $region14: #{fwd.17} parent=11 // pred_check_branch
          %123 = sbr.rel (%p121) target = $region16
        $region15: #{fwd.17} parent=11 // pred_region
          _
        $region16: #{fwd.17} parent=11 // pred_fallthru
          _
        // Predicated region
        $region17: #{fwd.17} parent=11 // pred_check
          %p124 = pneg %p80
        $region18: #{fwd.17} parent=11 // pred_check_branch
          %126 = sbr.rel (%p124) target = $region20
        $region19: #{fwd.17} parent=11 // pred_region
          _
        $region20: #{fwd.17} parent=11 // pred_fallthru
          _
      $region12: #{fwd.17} parent=5 // pred_fallthru
        _
      %p127 = scmp.lt.s32.totalorder %s12, 2
      // Predicated region
      $region21: #{fwd.17} parent=5 // pred_check
        %p128 = pneg %p127
      $region22: #{fwd.17} parent=5 // pred_check_branch
        %130 = sbr.rel (%p128) target = $region24
      $region23: #{fwd.17} parent=5 // pred_region
        // Predicated region
        $region25: #{fwd.17} parent=23 // pred_check
          %p131 = pneg %p32
        $region26: #{fwd.17} parent=23 // pred_check_branch
          %133 = sbr.rel (%p131) target = $region28
        $region27: #{fwd.17} parent=23 // pred_region
          %p134 = scmp.lt.s32.totalorder %s12, 1
          %s135 = scalar_select %p134, %s12, 1
          %s136 = smul.addr %s135, 8
          %s137 = scalar_lea.vmem %s0, %s136
        $region28: #{fwd.17} parent=23 // pred_fallthru
          _
      $region24: #{fwd.17} parent=5 // pred_fallthru
        _
      %p138 = scmp.le.s32.totalorder 1, %s12
      %p139 = scmp.lt.s32.totalorder %s12, 3
      %p140 = pnand %p138, %p139
      %p141 = pneg %p140
      // Predicated region
      $region29: #{fwd.17} parent=5 // pred_check
        _
      $region30: #{fwd.17} parent=5 // pred_check_branch
        %143 = sbr.rel (%p140) target = $region32
      $region31: #{fwd.17} parent=5 // pred_region
        %s144 = ssub.s32 %s12, 1
        %p145 = scmp.lt.s32.totalorder %s17, 1
        %s146 = scalar_select %p145, %s17, 1
        %s147 = smul.addr %s146, 8
        %s148 = scalar_lea.vmem %s0, %s147
        %p149 = pneg %p38
        %p150 = pneg %p35
        %p151 = pneg %p59
        %p152 = pneg %p56
        %p153 = pneg %p80
        %p154 = pneg %p77
        %p155 = pneg %p106
        %p156 = pneg %p103
        %s157 = sand.u32 %s93, 1
        %s158 = scalar_lea.sflag [#allocation3], %s157
        %s159 = sand.u32 %s93, 1
        %s160 = smul.addr %s159, 8
        %s161 = scalar_lea.vmem [#allocation2], %s160
        %p162 = scmp.lt.s32.totalorder %s17, 1
        %s163 = scalar_select %p162, %s17, 1
        %s164 = smul.addr %s163, 8
        %s165 = scalar_lea.vmem %s0, %s164
        %v167 = vld [vmem:[%s165] sm:$0xff]
        %v168 = vpack.c.bf16 %v167, %v167
        %v169 = vld [vmem:[%s1] sm:$0xf]
        %v170 = vld [vmem:[%s1 + $0x4] sm:$0xf]
        %v171 = vld [vmem:[%s1 + $0x8] sm:$0xf]
        %v172 = vld [vmem:[%s1 + $0xc] sm:$0xf]
        %v173 = vld [vmem:[%s1 + $0x10] sm:$0xf]
        %v174 = vld [vmem:[%s1 + $0x14] sm:$0xf]
        %v175 = vld [vmem:[%s1 + $0x18] sm:$0xf]
        %v176 = vld [vmem:[%s1 + $0x1c] sm:$0xf]
        %v177 = vld [vmem:[%s1 + $0x20] sm:$0xf]
        %v178 = vld [vmem:[%s1 + $0x24] sm:$0xf]
        %v179 = vld [vmem:[%s1 + $0x28] sm:$0xf]
        %v180 = vld [vmem:[%s1 + $0x2c] sm:$0xf]
        %v181 = vld [vmem:[%s1 + $0x30] sm:$0xf]
        %v182 = vld [vmem:[%s1 + $0x34] sm:$0xf]
        %v183 = vld [vmem:[%s1 + $0x38] sm:$0xf]
        %v184 = vld [vmem:[%s1 + $0x3c] sm:$0xf]
        %v185 = vld [vmem:[%s2] sm:$0x1]
        %v187 = vlaneseq
        %v188 = vshrl.u32 %v187, 7
        %v189 = vsub.s32 0, %v188
        %v190 = vrot.slane %v185, %v189
        %v208 = vunpack.c.l.b16 %v169
        %v209 = vunpack.c.l.b16 %v170
        %v210 = vunpack.c.l.b16 %v171
        %v211 = vunpack.c.l.b16 %v172
        %v212 = vunpack.c.l.b16 %v173
        %v213 = vunpack.c.l.b16 %v174
        %v214 = vunpack.c.l.b16 %v175
        %v215 = vunpack.c.l.b16 %v176
        %v216 = vunpack.c.l.b16 %v177
        %v217 = vunpack.c.l.b16 %v178
        %v218 = vunpack.c.l.b16 %v179
        %v219 = vunpack.c.l.b16 %v180
        %v220 = vunpack.c.l.b16 %v181
        %v221 = vunpack.c.l.b16 %v182
        %v222 = vunpack.c.l.b16 %v183
        %v223 = vunpack.c.l.b16 %v184
        %v224 = vpack.c.b16 %v209, %v208
        %v225 = vpack.c.b16 %v211, %v210
        %v226 = vpack.c.b16 %v213, %v212
        %v227 = vpack.c.b16 %v215, %v214
        %v228 = vpack.c.b16 %v217, %v216
        %v229 = vpack.c.b16 %v219, %v218
        %v230 = vpack.c.b16 %v221, %v220
        %v231 = vpack.c.b16 %v223, %v222
        %240 = vmatprep.subr.bf16.mxu0 0
        %241 = vmatpush1.bf16.msra.mxu0 %v224
        %242 = vmatprep.subr.bf16.mxu0 0
        %243 = vmatpush1.bf16.msra.mxu0 %v225
        %244 = vmatprep.subr.bf16.mxu0 0
        %245 = vmatpush1.bf16.msra.mxu0 %v226
        %246 = vmatprep.subr.bf16.mxu0 0
        %247 = vmatpush1.bf16.msra.mxu0 %v227
        %248 = vmatprep.subr.bf16.mxu0 0
        %249 = vmatpush1.bf16.msra.mxu0 %v228
        %250 = vmatprep.subr.bf16.mxu0 0
        %251 = vmatpush1.bf16.msra.mxu0 %v229
        %252 = vmatprep.subr.bf16.mxu0 0
        %253 = vmatpush1.bf16.msra.mxu0 %v230
        %254 = vmatprep.subr.bf16.mxu0 0
        %255 = vmatpush1.bf16.msra.mxu0 %v231
        %256 = vmatprep.subr.bf16.mxu0 0
        %257 = vmatpush1.bf16.msra.mxu0 0
        %258 = vmatprep.subr.bf16.mxu0 0
        %259 = vmatpush1.bf16.msra.mxu0 0
        %260 = vmatprep.subr.bf16.mxu0 0
        %261 = vmatpush1.bf16.msra.mxu0 0
        %262 = vmatprep.subr.bf16.mxu0 0
        %263 = vmatpush1.bf16.msra.mxu0 0
        %264 = vmatprep.subr.bf16.mxu0 0
        %265 = vmatpush1.bf16.msra.mxu0 0
        %266 = vmatprep.subr.bf16.mxu0 0
        %267 = vmatpush1.bf16.msra.mxu0 0
        %268 = vmatprep.subr.bf16.mxu0 0
        %269 = vmatpush1.bf16.msra.mxu0 0
        %270 = vmatprep.subr.bf16.mxu0 0
        %271 = vmatpush1.bf16.msra.mxu0 0
        %272 = vmatprep.mubr.bf16.mxu0 0
        %273 = vmatmul.mubr.bf16.gmra.mrb[0].mxu0 %v168
        %v274 = vpop.f32.mrb[0].mxu0
        %v275 = vadd.f32 %v190, %v274
        %v276 = vpop.f32.mrb[0].mxu0
        %v277 = vpop.f32.mrb[0].mxu0
        %v278 = vpop.f32.mrb[0].mxu0
        %279 = vdwg.mxu0
        %280 = vmax.xlane.f32.xlu0 %v275
        %v281 = vpop.xlane.xlu0 %280
        %v282 = vsub.f32 %v275, %v281
        %v283 = vmul.f32 %v282, 1.442695
        %v284 = vpow.pop %v283
        %285 = vadd.xlane.f32.xlu0 %v284
        %v286 = vpop.xlane.xlu0 %285
        %v287 = vlog2.pop %v286
        %v288 = vmul.f32 %v287, 0.6931472
        %v289 = vadd.f32 %v288, %v281
        %v290 = vsub.f32 %v275, %v289
        %291 = vst [vmem:[%s161] sm:$0xff] %v290
        %s292 = sand.u32 %s93, 1
        %s293 = scalar_lea.sflag [#allocation3], %s292
        %s294 = sand.u32 %s93, 1
        %s295 = smul.addr %s294, 8
        %s296 = scalar_lea.vmem [#allocation2], %s295
        // Predicated region
        $region33: #{fwd.17} parent=31 // pred_check
          %p297 = pneg %p103
        $region34: #{fwd.17} parent=31 // pred_check_branch
          %299 = sbr.rel (%p297) target = $region36
        $region35: #{fwd.17} parent=31 // pred_region
          %s301 = ssub.s32 128, 128
          %302 = vsyncadd %s293, %s301
          %s303 = smul.addr %s17, 128
          %s304 = scalar_lea.hbm %s3, %s303
          %s306 = sshll.u32 %s296, 4
          %s307 = int_to_ptr.vmem [resolvable:$true] %s306
          %309 = dma.vmem_to_hbm [thread:$0]  %s307, 128, %s304, %s293
        $region36: #{fwd.17} parent=31 // pred_fallthru
          _
      $region32: #{fwd.17} parent=5 // pred_fallthru
        _
      %p310 = scmp.le.s32.totalorder 2, %s12
      // Predicated region
      $region37: #{fwd.17} parent=5 // pred_check
        %p311 = pneg %p310
      $region38: #{fwd.17} parent=5 // pred_check_branch
        %313 = sbr.rel (%p311) target = $region40
      $region39: #{fwd.17} parent=5 // pred_region
        %s314 = ssub.s32 %s12, 2
        // Predicated region
        $region41: #{fwd.17} parent=39 // pred_check
          %p315 = pneg %p109
        $region42: #{fwd.17} parent=39 // pred_check_branch
          %317 = sbr.rel (%p315) target = $region44
        $region43: #{fwd.17} parent=39 // pred_region
          %s318 = sand.u32 %s94, 1
          %s319 = scalar_lea.sflag [#allocation3], %s318
          %s320 = sand.u32 %s94, 1
          %s321 = smul.addr %s320, 8
          %s322 = scalar_lea.vmem [#allocation2], %s321
          %323 = dma.done %s319, 128
        $region44: #{fwd.17} parent=39 // pred_fallthru
          _
      $region40: #{fwd.17} parent=5 // pred_fallthru
        _
    $region6: #{fwd.17} parent=1 // loop_footer
      %s16 = sadd.s32 1, %s12
    $region7: #{fwd.17} parent=1 // loop_footer_branch
      %11 = sbr.rel target = $region3
    $region8: #{fwd.17} parent=1 // loop_exit
      _
    %324 = vsyncpa [#allocation3], 1
    %s325 = scalar_lea.sflag [#allocation3], 1
    %326 = vsyncpa %s325, 1

// kernel: fwd.13
$region0: #{fwd.13}
  #allocation0 [shape = 'u32[]', space=smem, size = 0x4, offset = 0x4, fixed_abs, tag = 'smem constant byte address 0x4 - core index']
  #allocation1 [shape = 'u32[144,128]{1,0:T(1,128)}', space=vmem, size = 0x12000, scoped, tag = 'internal scratch']
  #allocation2 [shape = 's32[1]{0}', space=sflag, size = 0x4, scoped, tag = 'scoped memory for fwd.13']
  #allocation3 [shape = 'u8[512]{0}', space=smem, size = 0x200, scoped, tag = 'prefetched SMEM operand 0']
  %s0 = inlined_call_operand.vmem [shape: s32[2], index: 0, kind: input, shape index: {}]
  %s1 = inlined_call_operand.vmem [shape: f32[2,8,128], index: 1, kind: input, shape index: {}]
  %s2 = inlined_call_operand.vmem [shape: f32[29,128], index: 2, kind: input, shape index: {}]
  %s3 = inlined_call_operand.vmem [shape: f32[2,256], index: 3, kind: input, shape index: {}]
  %s4 = inlined_call_operand.vmem [shape: bf16[128,256], index: 4, kind: input, shape index: {}]
  %s5 = inlined_call_operand.vmem [shape: bf16[256,128], index: 5, kind: input, shape index: {}]
  %s6 = inlined_call_operand.vmem [shape: bf16[128,256], index: 6, kind: input, shape index: {}]
  %s7 = inlined_call_operand.vmem [shape: bf16[128,128], index: 7, kind: input, shape index: {}]
  %s8 = inlined_call_operand.vmem [shape: bf16[128,384], index: 8, kind: input, shape index: {}]
  %s9 = inlined_call_operand.vmem [shape: bf16[128,128], index: 9, kind: input, shape index: {}]
  %s10 = inlined_call_operand.vmem [shape: bf16[128,256], index: 10, kind: input, shape index: {}]
  %s11 = inlined_call_operand.vmem [shape: bf16[256,128], index: 11, kind: input, shape index: {}]
  %s12 = inlined_call_operand.vmem [shape: f32[2,8,128], index: 12, kind: output, shape index: {}]
  %s13 = sld [smem:[#allocation0]]
  $region77: #{fwd.13} parent=0
    _
  %s15 = ssub.s32 1, %s13
  %s16 = scalar_select 0, %s15, %s13
  %s17 = sshll.u32 %s0, 4
  %s18 = int_to_ptr.vmem [resolvable:$true] %s17
  %20 = dma.vmem_to_smem %s18, 16, [#allocation3], [#allocation2]
  %21 = dma.done [#allocation2], 16
  %22 = sfence
  loop: start=0, step=1, limit=4
  $region2: #{fwd.13} parent=0 // loop_pre_header
    _
  $region3: #{fwd.13} parent=0 // loop_header
    %s24 = sphi 0, %s28
    %p25 = scmp.ge.s32.totalorder %s24, 4
    %s34 = sphi 0, %s36
    %s37 = sphi 0, %s34
    %s38 = sphi 0, %s37
    %s54 = sphi 0, %s38
    %s58 = sphi 0, %s58
    %s60 = sphi 0, %s58
    %s61 = sphi 0, %s60
    %s75 = sphi 0, %s61
    %s79 = sphi 0, %s79
    %s81 = sphi 0, %s79
    %s82 = sphi 0, %s81
    %s96 = sphi 0, %s82
    %s100 = sphi 0, %s100
    %s102 = sphi 0, %s100
    %s103 = sphi 0, %s102
    %s117 = sphi 0, %s103
    %s121 = sphi 0, %s121
    %s123 = sphi 0, %s121
    %s124 = sphi 0, %s123
    %s138 = sphi 0, %s124
    %s142 = sphi 0, %s142
    %s144 = sphi 0, %s142
    %s145 = sphi 0, %s144
    %s159 = sphi 0, %s145
    %s163 = sphi 0, %s163
    %s165 = sphi 0, %s163
    %s166 = sphi 0, %s165
    %s180 = sphi 0, %s166
    %s184 = sphi 0, %s184
    %s186 = sphi 0, %s184
    %s187 = sphi 0, %s186
    %s201 = sphi 0, %s187
    %s205 = sphi 0, %s205
    %s207 = sphi 0, %s205
    %s208 = sphi 0, %s207
    %s222 = sphi 0, %s208
    %s226 = sphi 0, %s226
    %s228 = sphi 0, %s226
    %s229 = sphi 0, %s228
    %s243 = sphi 0, %s229
    %s247 = sphi 0, %s247
    %s249 = sphi 0, %s247
    %s250 = sphi 0, %s249
    %s264 = sphi 0, %s250
    %s270 = sphi 0, %s272
    %s273 = sphi 0, %s270
    %s274 = sphi 0, %s273
    %s290 = sphi 0, %s274
  $region4: #{fwd.13} parent=0 // loop_header_branch
    %27 = sbr.rel (%p25) target = $region8
  $region5: #{fwd.13} parent=0 // loop_body
    %s29 = ssub.s32 %s24, 1
    %s30 = ssub.s32 %s24, 2
    %s31 = sadd.s32 %s24, 1
    %s32 = ssub.s32 %s24, %s31
    %p33 = scmp.eq.s32.totalorder %s32, 0
    %s35 = sadd.s32 %s34, 1
    %s36 = scalar_select %p33, %s34, %s35
    %p39 = pneg %p33
    %p40 = scmp.eq.s32.totalorder %s24, 1
    %p41 = por %p39, %p40
    %p42 = scmp.ne.s32.totalorder %s34, %s37
    %p43 = scmp.eq.s32.totalorder %s24, 0
    %p44 = por %p42, %p43
    %p45 = scmp.ne.s32.totalorder %s34, %s37
    %p46 = scmp.eq.s32.totalorder %s29, 1
    %p47 = por %p45, %p46
    %p48 = scmp.ne.s32.totalorder %s37, %s38
    %p49 = scmp.eq.s32.totalorder %s29, 0
    %p50 = por %p48, %p49
    %p51 = scmp.ne.s32.totalorder %s37, %s38
    %p52 = scmp.eq.s32.totalorder %s30, 1
    %p53 = por %p51, %p52
    %p55 = scmp.ne.s32.totalorder %s38, %s54
    %p56 = scmp.eq.s32.totalorder %s30, 0
    %p57 = por %p55, %p56
    %s59 = sadd.s32 %s58, 1
    %p62 = scmp.eq.s32.totalorder %s24, 1
    %p63 = scmp.ne.s32.totalorder %s58, %s60
    %p64 = scmp.eq.s32.totalorder %s24, 0
    %p65 = por %p63, %p64
    %p66 = scmp.ne.s32.totalorder %s58, %s60
    %p67 = scmp.eq.s32.totalorder %s29, 1
    %p68 = por %p66, %p67
    %p69 = scmp.ne.s32.totalorder %s60, %s61
    %p70 = scmp.eq.s32.totalorder %s29, 0
    %p71 = por %p69, %p70
    %p72 = scmp.ne.s32.totalorder %s60, %s61
    %p73 = scmp.eq.s32.totalorder %s30, 1
    %p74 = por %p72, %p73
    %p76 = scmp.ne.s32.totalorder %s61, %s75
    %p77 = scmp.eq.s32.totalorder %s30, 0
    %p78 = por %p76, %p77
    %s80 = sadd.s32 %s79, 1
    %p83 = scmp.eq.s32.totalorder %s24, 1
    %p84 = scmp.ne.s32.totalorder %s79, %s81
    %p85 = scmp.eq.s32.totalorder %s24, 0
    %p86 = por %p84, %p85
    %p87 = scmp.ne.s32.totalorder %s79, %s81
    %p88 = scmp.eq.s32.totalorder %s29, 1
    %p89 = por %p87, %p88
    %p90 = scmp.ne.s32.totalorder %s81, %s82
    %p91 = scmp.eq.s32.totalorder %s29, 0
    %p92 = por %p90, %p91
    %p93 = scmp.ne.s32.totalorder %s81, %s82
    %p94 = scmp.eq.s32.totalorder %s30, 1
    %p95 = por %p93, %p94
    %p97 = scmp.ne.s32.totalorder %s82, %s96
    %p98 = scmp.eq.s32.totalorder %s30, 0
    %p99 = por %p97, %p98
    %s101 = sadd.s32 %s100, 1
    %p104 = scmp.eq.s32.totalorder %s24, 1
    %p105 = scmp.ne.s32.totalorder %s100, %s102
    %p106 = scmp.eq.s32.totalorder %s24, 0
    %p107 = por %p105, %p106
    %p108 = scmp.ne.s32.totalorder %s100, %s102
    %p109 = scmp.eq.s32.totalorder %s29, 1
    %p110 = por %p108, %p109
    %p111 = scmp.ne.s32.totalorder %s102, %s103
    %p112 = scmp.eq.s32.totalorder %s29, 0
    %p113 = por %p111, %p112
    %p114 = scmp.ne.s32.totalorder %s102, %s103
    %p115 = scmp.eq.s32.totalorder %s30, 1
    %p116 = por %p114, %p115
    %p118 = scmp.ne.s32.totalorder %s103, %s117
    %p119 = scmp.eq.s32.totalorder %s30, 0
    %p120 = por %p118, %p119
    %s122 = sadd.s32 %s121, 1
    %p125 = scmp.eq.s32.totalorder %s24, 1
    %p126 = scmp.ne.s32.totalorder %s121, %s123
    %p127 = scmp.eq.s32.totalorder %s24, 0
    %p128 = por %p126, %p127
    %p129 = scmp.ne.s32.totalorder %s121, %s123
    %p130 = scmp.eq.s32.totalorder %s29, 1
    %p131 = por %p129, %p130
    %p132 = scmp.ne.s32.totalorder %s123, %s124
    %p133 = scmp.eq.s32.totalorder %s29, 0
    %p134 = por %p132, %p133
    %p135 = scmp.ne.s32.totalorder %s123, %s124
    %p136 = scmp.eq.s32.totalorder %s30, 1
    %p137 = por %p135, %p136
    %p139 = scmp.ne.s32.totalorder %s124, %s138
    %p140 = scmp.eq.s32.totalorder %s30, 0
    %p141 = por %p139, %p140
    %s143 = sadd.s32 %s142, 1
    %p146 = scmp.eq.s32.totalorder %s24, 1
    %p147 = scmp.ne.s32.totalorder %s142, %s144
    %p148 = scmp.eq.s32.totalorder %s24, 0
    %p149 = por %p147, %p148
    %p150 = scmp.ne.s32.totalorder %s142, %s144
    %p151 = scmp.eq.s32.totalorder %s29, 1
    %p152 = por %p150, %p151
    %p153 = scmp.ne.s32.totalorder %s144, %s145
    %p154 = scmp.eq.s32.totalorder %s29, 0
    %p155 = por %p153, %p154
    %p156 = scmp.ne.s32.totalorder %s144, %s145
    %p157 = scmp.eq.s32.totalorder %s30, 1
    %p158 = por %p156, %p157
    %p160 = scmp.ne.s32.totalorder %s145, %s159
    %p161 = scmp.eq.s32.totalorder %s30, 0
    %p162 = por %p160, %p161
    %s164 = sadd.s32 %s163, 1
    %p167 = scmp.eq.s32.totalorder %s24, 1
    %p168 = scmp.ne.s32.totalorder %s163, %s165
    %p169 = scmp.eq.s32.totalorder %s24, 0
    %p170 = por %p168, %p169
    %p171 = scmp.ne.s32.totalorder %s163, %s165
    %p172 = scmp.eq.s32.totalorder %s29, 1
    %p173 = por %p171, %p172
    %p174 = scmp.ne.s32.totalorder %s165, %s166
    %p175 = scmp.eq.s32.totalorder %s29, 0
    %p176 = por %p174, %p175
    %p177 = scmp.ne.s32.totalorder %s165, %s166
    %p178 = scmp.eq.s32.totalorder %s30, 1
    %p179 = por %p177, %p178
    %p181 = scmp.ne.s32.totalorder %s166, %s180
    %p182 = scmp.eq.s32.totalorder %s30, 0
    %p183 = por %p181, %p182
    %s185 = sadd.s32 %s184, 1
    %p188 = scmp.eq.s32.totalorder %s24, 1
    %p189 = scmp.ne.s32.totalorder %s184, %s186
    %p190 = scmp.eq.s32.totalorder %s24, 0
    %p191 = por %p189, %p190
    %p192 = scmp.ne.s32.totalorder %s184, %s186
    %p193 = scmp.eq.s32.totalorder %s29, 1
    %p194 = por %p192, %p193
    %p195 = scmp.ne.s32.totalorder %s186, %s187
    %p196 = scmp.eq.s32.totalorder %s29, 0
    %p197 = por %p195, %p196
    %p198 = scmp.ne.s32.totalorder %s186, %s187
    %p199 = scmp.eq.s32.totalorder %s30, 1
    %p200 = por %p198, %p199
    %p202 = scmp.ne.s32.totalorder %s187, %s201
    %p203 = scmp.eq.s32.totalorder %s30, 0
    %p204 = por %p202, %p203
    %s206 = sadd.s32 %s205, 1
    %p209 = scmp.eq.s32.totalorder %s24, 1
    %p210 = scmp.ne.s32.totalorder %s205, %s207
    %p211 = scmp.eq.s32.totalorder %s24, 0
    %p212 = por %p210, %p211
    %p213 = scmp.ne.s32.totalorder %s205, %s207
    %p214 = scmp.eq.s32.totalorder %s29, 1
    %p215 = por %p213, %p214
    %p216 = scmp.ne.s32.totalorder %s207, %s208
    %p217 = scmp.eq.s32.totalorder %s29, 0
    %p218 = por %p216, %p217
    %p219 = scmp.ne.s32.totalorder %s207, %s208
    %p220 = scmp.eq.s32.totalorder %s30, 1
    %p221 = por %p219, %p220
    %p223 = scmp.ne.s32.totalorder %s208, %s222
    %p224 = scmp.eq.s32.totalorder %s30, 0
    %p225 = por %p223, %p224
    %s227 = sadd.s32 %s226, 1
    %p230 = scmp.eq.s32.totalorder %s24, 1
    %p231 = scmp.ne.s32.totalorder %s226, %s228
    %p232 = scmp.eq.s32.totalorder %s24, 0
    %p233 = por %p231, %p232
    %p234 = scmp.ne.s32.totalorder %s226, %s228
    %p235 = scmp.eq.s32.totalorder %s29, 1
    %p236 = por %p234, %p235
    %p237 = scmp.ne.s32.totalorder %s228, %s229
    %p238 = scmp.eq.s32.totalorder %s29, 0
    %p239 = por %p237, %p238
    %p240 = scmp.ne.s32.totalorder %s228, %s229
    %p241 = scmp.eq.s32.totalorder %s30, 1
    %p242 = por %p240, %p241
    %p244 = scmp.ne.s32.totalorder %s229, %s243
    %p245 = scmp.eq.s32.totalorder %s30, 0
    %p246 = por %p244, %p245
    %s248 = sadd.s32 %s247, 1
    %p251 = scmp.eq.s32.totalorder %s24, 1
    %p252 = scmp.ne.s32.totalorder %s247, %s249
    %p253 = scmp.eq.s32.totalorder %s24, 0
    %p254 = por %p252, %p253
    %p255 = scmp.ne.s32.totalorder %s247, %s249
    %p256 = scmp.eq.s32.totalorder %s29, 1
    %p257 = por %p255, %p256
    %p258 = scmp.ne.s32.totalorder %s249, %s250
    %p259 = scmp.eq.s32.totalorder %s29, 0
    %p260 = por %p258, %p259
    %p261 = scmp.ne.s32.totalorder %s249, %s250
    %p262 = scmp.eq.s32.totalorder %s30, 1
    %p263 = por %p261, %p262
    %p265 = scmp.ne.s32.totalorder %s250, %s264
    %p266 = scmp.eq.s32.totalorder %s30, 0
    %p267 = por %p265, %p266
    %s268 = ssub.s32 %s24, %s31
    %p269 = scmp.eq.s32.totalorder %s268, 0
    %s271 = sadd.s32 %s270, 1
    %s272 = scalar_select %p269, %s270, %s271
    %p275 = pneg %p269
    %p276 = scmp.eq.s32.totalorder %s24, 1
    %p277 = por %p275, %p276
    %p278 = scmp.ne.s32.totalorder %s270, %s273
    %p279 = scmp.eq.s32.totalorder %s24, 0
    %p280 = por %p278, %p279
    %p281 = scmp.ne.s32.totalorder %s270, %s273
    %p282 = scmp.eq.s32.totalorder %s29, 1
    %p283 = por %p281, %p282
    %p284 = scmp.ne.s32.totalorder %s273, %s274
    %p285 = scmp.eq.s32.totalorder %s29, 0
    %p286 = por %p284, %p285
    %p287 = scmp.ne.s32.totalorder %s273, %s274
    %p288 = scmp.eq.s32.totalorder %s30, 1
    %p289 = por %p287, %p288
    %p291 = scmp.ne.s32.totalorder %s274, %s290
    %p292 = scmp.eq.s32.totalorder %s30, 0
    %p293 = por %p291, %p292
    %p294 = scmp.le.s32.totalorder 1, %s24
    %p295 = scmp.lt.s32.totalorder %s24, 3
    %p296 = pnand %p294, %p295
    %p297 = pneg %p296
    // Predicated region
    $region9: #{fwd.13} parent=5 // pred_check
      _
    $region10: #{fwd.13} parent=5 // pred_check_branch
      %299 = sbr.rel (%p296) target = $region12
    $region11: #{fwd.13} parent=5 // pred_region
      %s300 = ssub.s32 %s24, 1
      // Predicated region
      $region13: #{fwd.13} parent=11 // pred_check
        %p301 = pneg %p71
      $region14: #{fwd.13} parent=11 // pred_check_branch
        %303 = sbr.rel (%p301) target = $region16
      $region15: #{fwd.13} parent=11 // pred_region
        _
      $region16: #{fwd.13} parent=11 // pred_fallthru
        _
      // Predicated region
      $region17: #{fwd.13} parent=11 // pred_check
        %p304 = pneg %p92
      $region18: #{fwd.13} parent=11 // pred_check_branch
        %306 = sbr.rel (%p304) target = $region20
      $region19: #{fwd.13} parent=11 // pred_region
        _
      $region20: #{fwd.13} parent=11 // pred_fallthru
        _
      // Predicated region
      $region21: #{fwd.13} parent=11 // pred_check
        %p307 = pneg %p113
      $region22: #{fwd.13} parent=11 // pred_check_branch
        %309 = sbr.rel (%p307) target = $region24
      $region23: #{fwd.13} parent=11 // pred_region
        _
      $region24: #{fwd.13} parent=11 // pred_fallthru
        _
      // Predicated region
      $region25: #{fwd.13} parent=11 // pred_check
        %p310 = pneg %p134
      $region26: #{fwd.13} parent=11 // pred_check_branch
        %312 = sbr.rel (%p310) target = $region28
      $region27: #{fwd.13} parent=11 // pred_region
        _
      $region28: #{fwd.13} parent=11 // pred_fallthru
        _
      // Predicated region
      $region29: #{fwd.13} parent=11 // pred_check
        %p313 = pneg %p155
      $region30: #{fwd.13} parent=11 // pred_check_branch
        %315 = sbr.rel (%p313) target = $region32
      $region31: #{fwd.13} parent=11 // pred_region
        _
      $region32: #{fwd.13} parent=11 // pred_fallthru
        _
      // Predicated region
      $region33: #{fwd.13} parent=11 // pred_check
        %p316 = pneg %p176
      $region34: #{fwd.13} parent=11 // pred_check_branch
        %318 = sbr.rel (%p316) target = $region36
      $region35: #{fwd.13} parent=11 // pred_region
        _
      $region36: #{fwd.13} parent=11 // pred_fallthru
        _
      // Predicated region
      $region37: #{fwd.13} parent=11 // pred_check
        %p319 = pneg %p197
      $region38: #{fwd.13} parent=11 // pred_check_branch
        %321 = sbr.rel (%p319) target = $region40
      $region39: #{fwd.13} parent=11 // pred_region
        _
      $region40: #{fwd.13} parent=11 // pred_fallthru
        _
      // Predicated region
      $region41: #{fwd.13} parent=11 // pred_check
        %p322 = pneg %p218
      $region42: #{fwd.13} parent=11 // pred_check_branch
        %324 = sbr.rel (%p322) target = $region44
      $region43: #{fwd.13} parent=11 // pred_region
        _
      $region44: #{fwd.13} parent=11 // pred_fallthru
        _
      // Predicated region
      $region45: #{fwd.13} parent=11 // pred_check
        %p325 = pneg %p239
      $region46: #{fwd.13} parent=11 // pred_check_branch
        %327 = sbr.rel (%p325) target = $region48
      $region47: #{fwd.13} parent=11 // pred_region
        _
      $region48: #{fwd.13} parent=11 // pred_fallthru
        _
      // Predicated region
      $region49: #{fwd.13} parent=11 // pred_check
        %p328 = pneg %p260
      $region50: #{fwd.13} parent=11 // pred_check_branch
        %330 = sbr.rel (%p328) target = $region52
      $region51: #{fwd.13} parent=11 // pred_region
        _
      $region52: #{fwd.13} parent=11 // pred_fallthru
        _
    $region12: #{fwd.13} parent=5 // pred_fallthru
      _
    %p331 = scmp.lt.s32.totalorder %s24, 2
    // Predicated region
    $region53: #{fwd.13} parent=5 // pred_check
      %p332 = pneg %p331
    $region54: #{fwd.13} parent=5 // pred_check_branch
      %334 = sbr.rel (%p332) target = $region56
    $region55: #{fwd.13} parent=5 // pred_region
      // Predicated region
      $region57: #{fwd.13} parent=55 // pred_check
        %p335 = pneg %p44
      $region58: #{fwd.13} parent=55 // pred_check_branch
        %337 = sbr.rel (%p335) target = $region60
      $region59: #{fwd.13} parent=55 // pred_region
        %p338 = scmp.lt.s32.totalorder %s24, 1
        %s339 = scalar_select %p338, %s24, 1
        %s340 = smul.addr %s339, 8
        %s341 = scalar_lea.vmem %s1, %s340
      $region60: #{fwd.13} parent=55 // pred_fallthru
        _
    $region56: #{fwd.13} parent=5 // pred_fallthru
      _
    %p342 = scmp.le.s32.totalorder 1, %s24
    %p343 = scmp.lt.s32.totalorder %s24, 3
    %p344 = pnand %p342, %p343
    %p345 = pneg %p344
    // Predicated region
    $region61: #{fwd.13} parent=5 // pred_check
      _
    $region62: #{fwd.13} parent=5 // pred_check_branch
      %347 = sbr.rel (%p344) target = $region64
    $region63: #{fwd.13} parent=5 // pred_region
      %s348 = ssub.s32 %s24, 1
      %p349 = scmp.lt.s32.totalorder %s29, 1
      %s350 = scalar_select %p349, %s29, 1
      %s351 = smul.addr %s350, 8
      %s352 = scalar_lea.vmem %s1, %s351
      %p353 = pneg %p50
      %p354 = pneg %p47
      %p355 = pneg %p71
      %p356 = pneg %p68
      %p357 = pneg %p92
      %p358 = pneg %p89
      %p359 = pneg %p113
      %p360 = pneg %p110
      %p361 = pneg %p134
      %p362 = pneg %p131
      %p363 = pneg %p155
      %p364 = pneg %p152
      %p365 = pneg %p176
      %p366 = pneg %p173
      %p367 = pneg %p197
      %p368 = pneg %p194
      %p369 = pneg %p218
      %p370 = pneg %p215
      %p371 = pneg %p239
      %p372 = pneg %p236
      %p373 = pneg %p260
      %p374 = pneg %p257
      %p375 = pneg %p286
      %p376 = pneg %p283
      %p377 = scmp.lt.s32.totalorder %s29, 1
      %s378 = scalar_select %p377, %s29, 1
      %s379 = smul.addr %s378, 8
      %s380 = scalar_lea.vmem %s12, %s379
      %p381 = scmp.lt.s32.totalorder %s29, 1
      %s382 = scalar_select %p381, %s29, 1
      %s383 = smul.addr %s382, 8
      %s384 = scalar_lea.vmem %s1, %s383
      %p385 = scmp.lt.s32.totalorder %s29, 1
      %s386 = scalar_select %p385, %s29, 1
      %s387 = smul.addr %s386, 8
      %s388 = scalar_lea.vmem %s12, %s387
      %v390 = vld [vmem:[%s384] sm:$0xff]
      %v391 = vld [vmem:[%s2] sm:$0x1]
      %v392 = vld [vmem:[%s2 + $0x1] sm:$0x1]
      %393 = vadd.xlane.f32.xlu0 %v390
      %v394 = vpop.xlane.xlu0 %393
      %v395 = vrcp.pop 128.0
      %v396 = vmul.f32 %v394, %v395
      %v397 = vsub.f32 %v390, %v396
      %v398 = vmul.f32 %v397, %v397
      %399 = vadd.xlane.f32.xlu0 %v398
      %v400 = vpop.xlane.xlu0 %399
      %v401 = vmul.f32 %v400, %v395
      %v402 = vadd.f32 %v401, 1e-05
      %v403 = vrsqrt.pop %v402
      %v404 = vmul.f32 %v397, %v403
      %v405 = vlaneseq
      %v406 = vshrl.u32 %v405, 7
      %v407 = vsub.s32 0, %v406
      %v408 = vrot.slane %v391, %v407
      %v409 = vmul.f32 %v404, %v408
      %v410 = vlaneseq
      %v411 = vshrl.u32 %v410, 7
      %v412 = vsub.s32 0, %v411
      %v413 = vrot.slane %v392, %v412
      %v414 = vadd.f32 %v409, %v413
      %v415 = vpack.c.bf16 %v414, %v414
      %v416 = vld [vmem:[%s4] sm:$0xff]
      %v417 = vld [vmem:[%s4 + $0x8] sm:$0xff]
      %v418 = vld [vmem:[%s4 + $0x10] sm:$0xff]
      %v419 = vld [vmem:[%s4 + $0x18] sm:$0xff]
      %v420 = vld [vmem:[%s4 + $0x20] sm:$0xff]
      %v421 = vld [vmem:[%s4 + $0x28] sm:$0xff]
      %v422 = vld [vmem:[%s4 + $0x30] sm:$0xff]
      %v423 = vld [vmem:[%s4 + $0x38] sm:$0xff]
      %v424 = vld [vmem:[%s4 + $0x40] sm:$0xff]
      %v425 = vld [vmem:[%s4 + $0x48] sm:$0xff]
      %v426 = vld [vmem:[%s4 + $0x50] sm:$0xff]
      %v427 = vld [vmem:[%s4 + $0x58] sm:$0xff]
      %v428 = vld [vmem:[%s4 + $0x60] sm:$0xff]
      %v429 = vld [vmem:[%s4 + $0x68] sm:$0xff]
      %v430 = vld [vmem:[%s4 + $0x70] sm:$0xff]
      %v431 = vld [vmem:[%s4 + $0x78] sm:$0xff]
      %v432 = vld [vmem:[%s3] ss:$2 sm:$0x3]
      %v434 = vlaneseq
      %v435 = vshrl.u32 %v434, 7
      %v436 = vsub.s32 0, %v435
      %v437 = vrot.slane %v432, %v436
      %v438 = vlaneseq
      %v439 = vshrl.u32 %v438, 7
      %v440 = vsub.s32 1, %v439
      %v441 = vrot.slane %v432, %v440
      %v460 = vunpack.c.l.b16 %v416
      %v461 = vunpack.c.h.b16 %v416
      %v462 = vunpack.c.l.b16 %v417
      %v463 = vunpack.c.h.b16 %v417
      %v464 = vunpack.c.l.b16 %v418
      %v465 = vunpack.c.h.b16 %v418
      %v466 = vunpack.c.l.b16 %v419
      %v467 = vunpack.c.h.b16 %v419
      %v468 = vunpack.c.l.b16 %v420
      %v469 = vunpack.c.h.b16 %v420
      %v470 = vunpack.c.l.b16 %v421
      %v471 = vunpack.c.h.b16 %v421
      %v472 = vunpack.c.l.b16 %v422
      %v473 = vunpack.c.h.b16 %v422
      %v474 = vunpack.c.l.b16 %v423
      %v475 = vunpack.c.h.b16 %v423
      %v476 = vunpack.c.l.b16 %v424
      %v477 = vunpack.c.h.b16 %v424
      %v478 = vunpack.c.l.b16 %v425
      %v479 = vunpack.c.h.b16 %v425
      %v480 = vunpack.c.l.b16 %v426
      %v481 = vunpack.c.h.b16 %v426
      %v482 = vunpack.c.l.b16 %v427
      %v483 = vunpack.c.h.b16 %v427
      %v484 = vunpack.c.l.b16 %v428
      %v485 = vunpack.c.h.b16 %v428
      %v486 = vunpack.c.l.b16 %v429
      %v487 = vunpack.c.h.b16 %v429
      %v488 = vunpack.c.l.b16 %v430
      %v489 = vunpack.c.h.b16 %v430
      %v490 = vunpack.c.l.b16 %v431
      %v491 = vunpack.c.h.b16 %v431
      %v492 = vpack.c.b16 %v462, %v460
      %v493 = vpack.c.b16 %v463, %v461
      %v494 = vpack.c.b16 %v466, %v464
      %v495 = vpack.c.b16 %v467, %v465
      %v496 = vpack.c.b16 %v470, %v468
      %v497 = vpack.c.b16 %v471, %v469
      %v498 = vpack.c.b16 %v474, %v472
      %v499 = vpack.c.b16 %v475, %v473
      %v500 = vpack.c.b16 %v478, %v476
      %v501 = vpack.c.b16 %v479, %v477
      %v502 = vpack.c.b16 %v482, %v480
      %v503 = vpack.c.b16 %v483, %v481
      %v504 = vpack.c.b16 %v486, %v484
      %v505 = vpack.c.b16 %v487, %v485
      %v506 = vpack.c.b16 %v490, %v488
      %v507 = vpack.c.b16 %v491, %v489
      %524 = vmatprep.subr.bf16.mxu0 %v493
      %525 = vmatpush1.bf16.msra.mxu0 %v492
      %526 = vmatprep.subr.bf16.mxu0 %v495
      %527 = vmatpush1.bf16.msra.mxu0 %v494
      %528 = vmatprep.subr.bf16.mxu0 %v497
      %529 = vmatpush1.bf16.msra.mxu0 %v496
      %530 = vmatprep.subr.bf16.mxu0 %v499
      %531 = vmatpush1.bf16.msra.mxu0 %v498
      %532 = vmatprep.subr.bf16.mxu0 %v501
      %533 = vmatpush1.bf16.msra.mxu0 %v500
      %534 = vmatprep.subr.bf16.mxu0 %v503
      %535 = vmatpush1.bf16.msra.mxu0 %v502
      %536 = vmatprep.subr.bf16.mxu0 %v505
      %537 = vmatpush1.bf16.msra.mxu0 %v504
      %538 = vmatprep.subr.bf16.mxu0 %v507
      %539 = vmatpush1.bf16.msra.mxu0 %v506
      %540 = vmatprep.subr.bf16.mxu0 0
      %541 = vmatpush1.bf16.msra.mxu0 0
      %542 = vmatprep.subr.bf16.mxu0 0
      %543 = vmatpush1.bf16.msra.mxu0 0
      %544 = vmatprep.subr.bf16.mxu0 0
      %545 = vmatpush1.bf16.msra.mxu0 0
      %546 = vmatprep.subr.bf16.mxu0 0
      %547 = vmatpush1.bf16.msra.mxu0 0
      %548 = vmatprep.subr.bf16.mxu0 0
      %549 = vmatpush1.bf16.msra.mxu0 0
      %550 = vmatprep.subr.bf16.mxu0 0
      %551 = vmatpush1.bf16.msra.mxu0 0
      %552 = vmatprep.subr.bf16.mxu0 0
      %553 = vmatpush1.bf16.msra.mxu0 0
      %554 = vmatprep.subr.bf16.mxu0 0
      %555 = vmatpush1.bf16.msra.mxu0 0
      %556 = vmatprep.mubr.bf16.mxu0 0
      %557 = vmatmul.mubr.bf16.gmra.mrb[0].mxu0 %v415
      %v558 = vpop.f32.mrb[0].mxu0
      %v559 = vadd.f32 %v437, %v558
      %v560 = vpop.f32.mrb[0].mxu0
      %v561 = vadd.f32 %v441, %v560
      %v562 = vpop.f32.mrb[0].mxu0
      %v563 = vpop.f32.mrb[0].mxu0
      %564 = vdwg.mxu0
      %v565 = vxor.u32 %v559, 2147483648
      %v566 = vxor.u32 %v561, 2147483648
      %v567 = vmul.f32 %v565, 1.442695
      %v568 = vpow.pop %v567
      %v569 = vmul.f32 %v566, 1.442695
      %v570 = vpow.pop %v569
      %v571 = vadd.f32 %v568, 1.0
      %v572 = vadd.f32 %v570, 1.0
      %v573 = vrcp.pop %v571
      %v574 = vmul.f32 1.0, %v573
      %v575 = vrcp.pop %v572
      %v576 = vmul.f32 1.0, %v575
      %v577 = vmul.f32 %v559, %v574
      %v578 = vmul.f32 %v561, %v576
      %v579 = vpack.c.bf16 %v577, %v577
      %v580 = vpack.c.bf16 %v578, %v578
      %v581 = vld [vmem:[%s5] sm:$0xf]
      %v582 = vld [vmem:[%s5 + $0x4] sm:$0xf]
      %v583 = vld [vmem:[%s5 + $0x8] sm:$0xf]
      %v584 = vld [vmem:[%s5 + $0xc] sm:$0xf]
      %v585 = vld [vmem:[%s5 + $0x10] sm:$0xf]
      %v586 = vld [vmem:[%s5 + $0x14] sm:$0xf]
      %v587 = vld [vmem:[%s5 + $0x18] sm:$0xf]
      %v588 = vld [vmem:[%s5 + $0x1c] sm:$0xf]
      %v589 = vld [vmem:[%s5 + $0x20] sm:$0xf]
      %v590 = vld [vmem:[%s5 + $0x24] sm:$0xf]
      %v591 = vld [vmem:[%s5 + $0x28] sm:$0xf]
      %v592 = vld [vmem:[%s5 + $0x2c] sm:$0xf]
      %v593 = vld [vmem:[%s5 + $0x30] sm:$0xf]
      %v594 = vld [vmem:[%s5 + $0x34] sm:$0xf]
      %v595 = vld [vmem:[%s5 + $0x38] sm:$0xf]
      %v596 = vld [vmem:[%s5 + $0x3c] sm:$0xf]
      %v597 = vld [vmem:[%s5 + $0x40] sm:$0xf]
      %v598 = vld [vmem:[%s5 + $0x44] sm:$0xf]
      %v599 = vld [vmem:[%s5 + $0x48] sm:$0xf]
      %v600 = vld [vmem:[%s5 + $0x4c] sm:$0xf]
      %v601 = vld [vmem:[%s5 + $0x50] sm:$0xf]
      %v602 = vld [vmem:[%s5 + $0x54] sm:$0xf]
      %v603 = vld [vmem:[%s5 + $0x58] sm:$0xf]
      %v604 = vld [vmem:[%s5 + $0x5c] sm:$0xf]
      %v605 = vld [vmem:[%s5 + $0x60] sm:$0xf]
      %v606 = vld [vmem:[%s5 + $0x64] sm:$0xf]
      %v607 = vld [vmem:[%s5 + $0x68] sm:$0xf]
      %v608 = vld [vmem:[%s5 + $0x6c] sm:$0xf]
      %v609 = vld [vmem:[%s5 + $0x70] sm:$0xf]
      %v610 = vld [vmem:[%s5 + $0x74] sm:$0xf]
      %v611 = vld [vmem:[%s5 + $0x78] sm:$0xf]
      %v612 = vld [vmem:[%s5 + $0x7c] sm:$0xf]
      %v613 = vld [vmem:[%s2 + $0x2] sm:$0x1]
      %v614 = vlaneseq
      %v615 = vshrl.u32 %v614, 7
      %v616 = vsub.s32 0, %v615
      %v617 = vrot.slane %v613, %v616
      %v650 = vunpack.c.l.b16 %v581
      %v651 = vunpack.c.l.b16 %v582
      %v652 = vunpack.c.l.b16 %v583
      %v653 = vunpack.c.l.b16 %v584
      %v654 = vunpack.c.l.b16 %v585
      %v655 = vunpack.c.l.b16 %v586
      %v656 = vunpack.c.l.b16 %v587
      %v657 = vunpack.c.l.b16 %v588
      %v658 = vunpack.c.l.b16 %v589
      %v659 = vunpack.c.l.b16 %v590
      %v660 = vunpack.c.l.b16 %v591
      %v661 = vunpack.c.l.b16 %v592
      %v662 = vunpack.c.l.b16 %v593
      %v663 = vunpack.c.l.b16 %v594
      %v664 = vunpack.c.l.b16 %v595
      %v665 = vunpack.c.l.b16 %v596
      %v666 = vunpack.c.l.b16 %v597
      %v667 = vunpack.c.l.b16 %v598
      %v668 = vunpack.c.l.b16 %v599
      %v669 = vunpack.c.l.b16 %v600
      %v670 = vunpack.c.l.b16 %v601
      %v671 = vunpack.c.l.b16 %v602
      %v672 = vunpack.c.l.b16 %v603
      %v673 = vunpack.c.l.b16 %v604
      %v674 = vunpack.c.l.b16 %v605
      %v675 = vunpack.c.l.b16 %v606
      %v676 = vunpack.c.l.b16 %v607
      %v677 = vunpack.c.l.b16 %v608
      %v678 = vunpack.c.l.b16 %v609
      %v679 = vunpack.c.l.b16 %v610
      %v680 = vunpack.c.l.b16 %v611
      %v681 = vunpack.c.l.b16 %v612
      %v682 = vpack.c.b16 %v651, %v650
      %v683 = vpack.c.b16 %v653, %v652
      %v684 = vpack.c.b16 %v655, %v654
      %v685 = vpack.c.b16 %v657, %v656
      %v686 = vpack.c.b16 %v659, %v658
      %v687 = vpack.c.b16 %v661, %v660
      %v688 = vpack.c.b16 %v663, %v662
      %v689 = vpack.c.b16 %v665, %v664
      %v690 = vpack.c.b16 %v667, %v666
      %v691 = vpack.c.b16 %v669, %v668
      %v692 = vpack.c.b16 %v671, %v670
      %v693 = vpack.c.b16 %v673, %v672
      %v694 = vpack.c.b16 %v675, %v674
      %v695 = vpack.c.b16 %v677, %v676
      %v696 = vpack.c.b16 %v679, %v678
      %v697 = vpack.c.b16 %v681, %v680
      %714 = vmatprep.subr.bf16.mxu0 0
      %715 = vmatpush1.bf16.msra.mxu0 %v682
      %716 = vmatprep.subr.bf16.mxu0 0
      %717 = vmatpush1.bf16.msra.mxu0 %v683
      %718 = vmatprep.subr.bf16.mxu0 0
      %719 = vmatpush1.bf16.msra.mxu0 %v684
      %720 = vmatprep.subr.bf16.mxu0 0
      %721 = vmatpush1.bf16.msra.mxu0 %v685
      %722 = vmatprep.subr.bf16.mxu0 0
      %723 = vmatpush1.bf16.msra.mxu0 %v686
      %724 = vmatprep.subr.bf16.mxu0 0
      %725 = vmatpush1.bf16.msra.mxu0 %v687
      %726 = vmatprep.subr.bf16.mxu0 0
      %727 = vmatpush1.bf16.msra.mxu0 %v688
      %728 = vmatprep.subr.bf16.mxu0 0
      %729 = vmatpush1.bf16.msra.mxu0 %v689
      %730 = vmatprep.subr.bf16.mxu0 0
      %731 = vmatpush1.bf16.msra.mxu0 %v690
      %732 = vmatprep.subr.bf16.mxu0 0
      %733 = vmatpush1.bf16.msra.mxu0 %v691
      %734 = vmatprep.subr.bf16.mxu0 0
      %735 = vmatpush1.bf16.msra.mxu0 %v692
      %736 = vmatprep.subr.bf16.mxu0 0
      %737 = vmatpush1.bf16.msra.mxu0 %v693
      %738 = vmatprep.subr.bf16.mxu0 0
      %739 = vmatpush1.bf16.msra.mxu0 %v694
      %740 = vmatprep.subr.bf16.mxu0 0
      %741 = vmatpush1.bf16.msra.mxu0 %v695
      %742 = vmatprep.subr.bf16.mxu0 0
      %743 = vmatpush1.bf16.msra.mxu0 %v696
      %744 = vmatprep.subr.bf16.mxu0 0
      %745 = vmatpush1.bf16.msra.mxu0 %v697
      %746 = vmatprep.mubr.bf16.mxu0 %v580
      %747 = vmatmul.mubr.bf16.gmra.mrb[0].mxu0 %v579
      %v748 = vpop.f32.mrb[0].mxu0
      %v749 = vadd.f32 %v617, %v748
      %v750 = vpop.f32.mrb[0].mxu0
      %v751 = vpop.f32.mrb[0].mxu0
      %v752 = vpop.f32.mrb[0].mxu0
      %753 = vdwg.mxu0
      %v754 = vmul.f32 %v749, 0.5
      %v755 = vadd.f32 %v754, %v390
      %v756 = vld [vmem:[%s2 + $0x3] sm:$0x1]
      %v757 = vld [vmem:[%s2 + $0x4] sm:$0x1]
      %758 = vadd.xlane.f32.xlu0 %v755
      %v759 = vpop.xlane.xlu0 %758
      %v760 = vmul.f32 %v759, %v395
      %v761 = vsub.f32 %v755, %v760
      %v762 = vmul.f32 %v761, %v761
      %763 = vadd.xlane.f32.xlu0 %v762
      %v764 = vpop.xlane.xlu0 %763
      %v765 = vmul.f32 %v764, %v395
      %v766 = vadd.f32 %v765, 1e-05
      %v767 = vrsqrt.pop %v766
      %v768 = vmul.f32 %v761, %v767
      %v769 = vlaneseq
      %v770 = vshrl.u32 %v769, 7
      %v771 = vsub.s32 0, %v770
      %v772 = vrot.slane %v756, %v771
      %v773 = vmul.f32 %v768, %v772
      %v774 = vlaneseq
      %v775 = vshrl.u32 %v774, 7
      %v776 = vsub.s32 0, %v775
      %v777 = vrot.slane %v757, %v776
      %v778 = vadd.f32 %v773, %v777
      %v779 = vpack.c.bf16 %v778, %v778
      %v780 = vld [vmem:[%s6] sm:$0xff]
      %v781 = vld [vmem:[%s6 + $0x8] sm:$0xff]
      %v782 = vld [vmem:[%s6 + $0x10] sm:$0xff]
      %v783 = vld [vmem:[%s6 + $0x18] sm:$0xff]
      %v784 = vld [vmem:[%s6 + $0x20] sm:$0xff]
      %v785 = vld [vmem:[%s6 + $0x28] sm:$0xff]
      %v786 = vld [vmem:[%s6 + $0x30] sm:$0xff]
      %v787 = vld [vmem:[%s6 + $0x38] sm:$0xff]
      %v788 = vld [vmem:[%s6 + $0x40] sm:$0xff]
      %v789 = vld [vmem:[%s6 + $0x48] sm:$0xff]
      %v790 = vld [vmem:[%s6 + $0x50] sm:$0xff]
      %v791 = vld [vmem:[%s6 + $0x58] sm:$0xff]
      %v792 = vld [vmem:[%s6 + $0x60] sm:$0xff]
      %v793 = vld [vmem:[%s6 + $0x68] sm:$0xff]
      %v794 = vld [vmem:[%s6 + $0x70] sm:$0xff]
      %v795 = vld [vmem:[%s6 + $0x78] sm:$0xff]
      %v812 = vunpack.c.l.b16 %v780
      %v813 = vunpack.c.h.b16 %v780
      %v814 = vunpack.c.l.b16 %v781
      %v815 = vunpack.c.h.b16 %v781
      %v816 = vunpack.c.l.b16 %v782
      %v817 = vunpack.c.h.b16 %v782
      %v818 = vunpack.c.l.b16 %v783
      %v819 = vunpack.c.h.b16 %v783
      %v820 = vunpack.c.l.b16 %v784
      %v821 = vunpack.c.h.b16 %v784
      %v822 = vunpack.c.l.b16 %v785
      %v823 = vunpack.c.h.b16 %v785
      %v824 = vunpack.c.l.b16 %v786
      %v825 = vunpack.c.h.b16 %v786
      %v826 = vunpack.c.l.b16 %v787
      %v827 = vunpack.c.h.b16 %v787
      %v828 = vunpack.c.l.b16 %v788
      %v829 = vunpack.c.h.b16 %v788
      %v830 = vunpack.c.l.b16 %v789
      %v831 = vunpack.c.h.b16 %v789
      %v832 = vunpack.c.l.b16 %v790
      %v833 = vunpack.c.h.b16 %v790
      %v834 = vunpack.c.l.b16 %v791
      %v835 = vunpack.c.h.b16 %v791
      %v836 = vunpack.c.l.b16 %v792
      %v837 = vunpack.c.h.b16 %v792
      %v838 = vunpack.c.l.b16 %v793
      %v839 = vunpack.c.h.b16 %v793
      %v840 = vunpack.c.l.b16 %v794
      %v841 = vunpack.c.h.b16 %v794
      %v842 = vunpack.c.l.b16 %v795
      %v843 = vunpack.c.h.b16 %v795
      %v844 = vpack.c.b16 %v814, %v812
      %v845 = vpack.c.b16 %v815, %v813
      %v846 = vpack.c.b16 %v818, %v816
      %v847 = vpack.c.b16 %v819, %v817
      %v848 = vpack.c.b16 %v822, %v820
      %v849 = vpack.c.b16 %v823, %v821
      %v850 = vpack.c.b16 %v826, %v824
      %v851 = vpack.c.b16 %v827, %v825
      %v852 = vpack.c.b16 %v830, %v828
      %v853 = vpack.c.b16 %v831, %v829
      %v854 = vpack.c.b16 %v834, %v832
      %v855 = vpack.c.b16 %v835, %v833
      %v856 = vpack.c.b16 %v838, %v836
      %v857 = vpack.c.b16 %v839, %v837
      %v858 = vpack.c.b16 %v842, %v840
      %v859 = vpack.c.b16 %v843, %v841
      %876 = vmatprep.subr.bf16.mxu0 %v845
      %877 = vmatpush1.bf16.msra.mxu0 %v844
      %878 = vmatprep.subr.bf16.mxu0 %v847
      %879 = vmatpush1.bf16.msra.mxu0 %v846
      %880 = vmatprep.subr.bf16.mxu0 %v849
      %881 = vmatpush1.bf16.msra.mxu0 %v848
      %882 = vmatprep.subr.bf16.mxu0 %v851
      %883 = vmatpush1.bf16.msra.mxu0 %v850
      %884 = vmatprep.subr.bf16.mxu0 %v853
      %885 = vmatpush1.bf16.msra.mxu0 %v852
      %886 = vmatprep.subr.bf16.mxu0 %v855
      %887 = vmatpush1.bf16.msra.mxu0 %v854
      %888 = vmatprep.subr.bf16.mxu0 %v857
      %889 = vmatpush1.bf16.msra.mxu0 %v856
      %890 = vmatprep.subr.bf16.mxu0 %v859
      %891 = vmatpush1.bf16.msra.mxu0 %v858
      %892 = vmatprep.subr.bf16.mxu0 0
      %893 = vmatpush1.bf16.msra.mxu0 0
      %894 = vmatprep.subr.bf16.mxu0 0
      %895 = vmatpush1.bf16.msra.mxu0 0
      %896 = vmatprep.subr.bf16.mxu0 0
      %897 = vmatpush1.bf16.msra.mxu0 0
      %898 = vmatprep.subr.bf16.mxu0 0
      %899 = vmatpush1.bf16.msra.mxu0 0
      %900 = vmatprep.subr.bf16.mxu0 0
      %901 = vmatpush1.bf16.msra.mxu0 0
      %902 = vmatprep.subr.bf16.mxu0 0
      %903 = vmatpush1.bf16.msra.mxu0 0
      %904 = vmatprep.subr.bf16.mxu0 0
      %905 = vmatpush1.bf16.msra.mxu0 0
      %906 = vmatprep.subr.bf16.mxu0 0
      %907 = vmatpush1.bf16.msra.mxu0 0
      %908 = vmatprep.mubr.bf16.mxu0 0
      %909 = vmatmul.mubr.bf16.gmra.mrb[0].mxu0 %v779
      %v910 = vpop.f32.mrb[0].mxu0
      %v911 = vadd.f32 0.0, %v910
      %v912 = vpop.f32.mrb[0].mxu0
      %v913 = vadd.f32 0.0, %v912
      %v914 = vpop.f32.mrb[0].mxu0
      %v915 = vpop.f32.mrb[0].mxu0
      %916 = vdwg.mxu0
      %v917 = vld [vmem:[%s2 + $0x5] sm:$0x1]
      %v918 = vlaneseq
      %v919 = vshrl.u32 %v918, 7
      %v920 = vsub.s32 0, %v919
      %v921 = vrot.slane %v917, %v920
      %v922 = vadd.f32 %v911, %v921
      %v923 = vld [vmem:[%s2 + $0x6] sm:$0x1]
      %v924 = vlaneseq
      %v925 = vshrl.u32 %v924, 7
      %v926 = vsub.s32 0, %v925
      %v927 = vrot.slane %v923, %v926
      %v928 = vadd.f32 %v913, %v927
      %v929 = vxor.u32 %v928, 2147483648
      %v930 = vmul.f32 %v929, 1.442695
      %v931 = vpow.pop %v930
      %v932 = vadd.f32 %v931, 1.0
      %v933 = vrcp.pop %v932
      %v934 = vmul.f32 1.0, %v933
      %v935 = vmul.f32 %v922, %v934
      %v936 = vlaneseq
      %v937 = vshrl.u32 %v936, 7
      %v938 = vld [vmem:[%s2 + $0x16] sm:$0x1]
      %v939 = vrot.slane %v935, 5
      %v940 = vadd.s32 %v937, 4294967293
      %vm941 = vcmp.ge.s32.totalorder %v940, 0
      %vm942 = vcmp.lt.s32.totalorder %v940, 8
      %vm943 = vmand %vm941, %vm942
      %v944 = vsel %vm943, 1, 0
      %vm945 = vcmp.eq.s32.totalorder %v944, 1
      %v946 = vsel %vm945, %v939, 0.0
      %v947 = vlaneseq
      %v948 = vshrl.u32 %v947, 7
      %v949 = vsub.s32 0, %v948
      %v950 = vrot.slane %v938, %v949
      %v951 = vmul.f32 %v946, %v950
      %v952 = vadd.f32 %v951, 0.0
      %v953 = vld [vmem:[%s2 + $0x17] sm:$0x1]
      %v954 = vrot.slane %v935, 6
      %v955 = vadd.s32 %v937, 4294967294
      %vm956 = vcmp.ge.s32.totalorder %v955, 0
      %vm957 = vcmp.lt.s32.totalorder %v955, 8
      %vm958 = vmand %vm956, %vm957
      %v959 = vsel %vm958, 1, 0
      %vm960 = vcmp.eq.s32.totalorder %v959, 1
      %v961 = vsel %vm960, %v954, 0.0
      %v962 = vlaneseq
      %v963 = vshrl.u32 %v962, 7
      %v964 = vsub.s32 0, %v963
      %v965 = vrot.slane %v953, %v964
      %v966 = vmul.f32 %v961, %v965
      %v967 = vadd.f32 %v952, %v966
      %v968 = vld [vmem:[%s2 + $0x18] sm:$0x1]
      %v969 = vrot.slane %v935, 7
      %v970 = vadd.s32 %v937, 4294967295
      %vm971 = vcmp.ge.s32.totalorder %v970, 0
      %vm972 = vcmp.lt.s32.totalorder %v970, 8
      %vm973 = vmand %vm971, %vm972
      %v974 = vsel %vm973, 1, 0
      %vm975 = vcmp.eq.s32.totalorder %v974, 1
      %v976 = vsel %vm975, %v969, 0.0
      %v977 = vlaneseq
      %v978 = vshrl.u32 %v977, 7
      %v979 = vsub.s32 0, %v978
      %v980 = vrot.slane %v968, %v979
      %v981 = vmul.f32 %v976, %v980
      %v982 = vadd.f32 %v967, %v981
      %v983 = vld [vmem:[%s2 + $0x19] sm:$0x1]
      %v984 = vlaneseq
      %v985 = vshrl.u32 %v984, 7
      %v986 = vsub.s32 0, %v985
      %v987 = vrot.slane %v983, %v986
      %v988 = vmul.f32 %v935, %v987
      %v989 = vadd.f32 %v982, %v988
      %v990 = vld [vmem:[%s2 + $0x1a] sm:$0x1]
      %v991 = vrot.slane %v935, 1
      %v992 = vadd.s32 %v937, 1
      %vm993 = vcmp.ge.s32.totalorder %v992, 0
      %vm994 = vcmp.lt.s32.totalorder %v992, 8
      %vm995 = vmand %vm993, %vm994
      %v996 = vsel %vm995, 1, 0
      %vm997 = vcmp.eq.s32.totalorder %v996, 1
      %v998 = vsel %vm997, %v991, 0.0
      %v999 = vlaneseq
      %v1000 = vshrl.u32 %v999, 7
      %v1001 = vsub.s32 0, %v1000
      %v1002 = vrot.slane %v990, %v1001
      %v1003 = vmul.f32 %v998, %v1002
      %v1004 = vadd.f32 %v989, %v1003
      %v1005 = vld [vmem:[%s2 + $0x1b] sm:$0x1]
      %v1006 = vrot.slane %v935, 2
      %v1007 = vadd.s32 %v937, 2
      %vm1008 = vcmp.ge.s32.totalorder %v1007, 0
      %vm1009 = vcmp.lt.s32.totalorder %v1007, 8
      %vm1010 = vmand %vm1008, %vm1009
      %v1011 = vsel %vm1010, 1, 0
      %vm1012 = vcmp.eq.s32.totalorder %v1011, 1
      %v1013 = vsel %vm1012, %v1006, 0.0
      %v1014 = vlaneseq
      %v1015 = vshrl.u32 %v1014, 7
      %v1016 = vsub.s32 0, %v1015
      %v1017 = vrot.slane %v1005, %v1016
      %v1018 = vmul.f32 %v1013, %v1017
      %v1019 = vadd.f32 %v1004, %v1018
      %v1020 = vld [vmem:[%s2 + $0x1c] sm:$0x1]
      %v1021 = vrot.slane %v935, 3
      %v1022 = vadd.s32 %v937, 3
      %vm1023 = vcmp.ge.s32.totalorder %v1022, 0
      %vm1024 = vcmp.lt.s32.totalorder %v1022, 8
      %vm1025 = vmand %vm1023, %vm1024
      %v1026 = vsel %vm1025, 1, 0
      %vm1027 = vcmp.eq.s32.totalorder %v1026, 1
      %v1028 = vsel %vm1027, %v1021, 0.0
      %v1029 = vlaneseq
      %v1030 = vshrl.u32 %v1029, 7
      %v1031 = vsub.s32 0, %v1030
      %v1032 = vrot.slane %v1020, %v1031
      %v1033 = vmul.f32 %v1028, %v1032
      %v1034 = vadd.f32 %v1019, %v1033
      %v1035 = vld [vmem:[%s2 + $0x7] sm:$0x1]
      %v1036 = vlaneseq
      %v1037 = vshrl.u32 %v1036, 7
      %v1038 = vsub.s32 0, %v1037
      %v1039 = vrot.slane %v1035, %v1038
      %v1040 = vadd.f32 %v1034, %v1039
      %v1041 = vld [vmem:[%s2 + $0x8] sm:$0x1]
      %v1042 = vlaneseq
      %v1043 = vshrl.u32 %v1042, 7
      %v1044 = vsub.s32 0, %v1043
      %v1045 = vrot.slane %v1041, %v1044
      %v1046 = vmul.f32 %v1040, %v1045
      %v1047 = vld [vmem:[%s2 + $0x9] sm:$0x1]
      %v1048 = vlaneseq
      %v1049 = vshrl.u32 %v1048, 7
      %v1050 = vsub.s32 0, %v1049
      %v1051 = vrot.slane %v1047, %v1050
      %v1052 = vadd.f32 %v1046, %v1051
      %v1053 = vxor.u32 %v1052, 2147483648
      %v1054 = vmul.f32 %v1053, 1.442695
      %v1055 = vpow.pop %v1054
      %v1056 = vadd.f32 %v1055, 1.0
      %v1057 = vrcp.pop %v1056
      %v1058 = vmul.f32 1.0, %v1057
      %v1059 = vmul.f32 %v1052, %v1058
      %v1060 = vpack.c.bf16 %v1059, %v1059
      %v1061 = vld [vmem:[%s7] sm:$0xf]
      %v1062 = vld [vmem:[%s7 + $0x4] sm:$0xf]
      %v1063 = vld [vmem:[%s7 + $0x8] sm:$0xf]
      %v1064 = vld [vmem:[%s7 + $0xc] sm:$0xf]
      %v1065 = vld [vmem:[%s7 + $0x10] sm:$0xf]
      %v1066 = vld [vmem:[%s7 + $0x14] sm:$0xf]
      %v1067 = vld [vmem:[%s7 + $0x18] sm:$0xf]
      %v1068 = vld [vmem:[%s7 + $0x1c] sm:$0xf]
      %v1069 = vld [vmem:[%s7 + $0x20] sm:$0xf]
      %v1070 = vld [vmem:[%s7 + $0x24] sm:$0xf]
      %v1071 = vld [vmem:[%s7 + $0x28] sm:$0xf]
      %v1072 = vld [vmem:[%s7 + $0x2c] sm:$0xf]
      %v1073 = vld [vmem:[%s7 + $0x30] sm:$0xf]
      %v1074 = vld [vmem:[%s7 + $0x34] sm:$0xf]
      %v1075 = vld [vmem:[%s7 + $0x38] sm:$0xf]
      %v1076 = vld [vmem:[%s7 + $0x3c] sm:$0xf]
      %v1077 = vld [vmem:[%s2 + $0xa] sm:$0x1]
      %v1078 = vlaneseq
      %v1079 = vshrl.u32 %v1078, 7
      %v1080 = vsub.s32 0, %v1079
      %v1081 = vrot.slane %v1077, %v1080
      %v1098 = vunpack.c.l.b16 %v1061
      %v1099 = vunpack.c.l.b16 %v1062
      %v1100 = vunpack.c.l.b16 %v1063
      %v1101 = vunpack.c.l.b16 %v1064
      %v1102 = vunpack.c.l.b16 %v1065
      %v1103 = vunpack.c.l.b16 %v1066
      %v1104 = vunpack.c.l.b16 %v1067
      %v1105 = vunpack.c.l.b16 %v1068
      %v1106 = vunpack.c.l.b16 %v1069
      %v1107 = vunpack.c.l.b16 %v1070
      %v1108 = vunpack.c.l.b16 %v1071
      %v1109 = vunpack.c.l.b16 %v1072
      %v1110 = vunpack.c.l.b16 %v1073
      %v1111 = vunpack.c.l.b16 %v1074
      %v1112 = vunpack.c.l.b16 %v1075
      %v1113 = vunpack.c.l.b16 %v1076
      %v1114 = vpack.c.b16 %v1099, %v1098
      %v1115 = vpack.c.b16 %v1101, %v1100
      %v1116 = vpack.c.b16 %v1103, %v1102
      %v1117 = vpack.c.b16 %v1105, %v1104
      %v1118 = vpack.c.b16 %v1107, %v1106
      %v1119 = vpack.c.b16 %v1109, %v1108
      %v1120 = vpack.c.b16 %v1111, %v1110
      %v1121 = vpack.c.b16 %v1113, %v1112
      %1130 = vmatprep.subr.bf16.mxu0 0
      %1131 = vmatpush1.bf16.msra.mxu0 %v1114
      %1132 = vmatprep.subr.bf16.mxu0 0
      %1133 = vmatpush1.bf16.msra.mxu0 %v1115
      %1134 = vmatprep.subr.bf16.mxu0 0
      %1135 = vmatpush1.bf16.msra.mxu0 %v1116
      %1136 = vmatprep.subr.bf16.mxu0 0
      %1137 = vmatpush1.bf16.msra.mxu0 %v1117
      %1138 = vmatprep.subr.bf16.mxu0 0
      %1139 = vmatpush1.bf16.msra.mxu0 %v1118
      %1140 = vmatprep.subr.bf16.mxu0 0
      %1141 = vmatpush1.bf16.msra.mxu0 %v1119
      %1142 = vmatprep.subr.bf16.mxu0 0
      %1143 = vmatpush1.bf16.msra.mxu0 %v1120
      %1144 = vmatprep.subr.bf16.mxu0 0
      %1145 = vmatpush1.bf16.msra.mxu0 %v1121
      %1146 = vmatprep.subr.bf16.mxu0 0
      %1147 = vmatpush1.bf16.msra.mxu0 0
      %1148 = vmatprep.subr.bf16.mxu0 0
      %1149 = vmatpush1.bf16.msra.mxu0 0
      %1150 = vmatprep.subr.bf16.mxu0 0
      %1151 = vmatpush1.bf16.msra.mxu0 0
      %1152 = vmatprep.subr.bf16.mxu0 0
      %1153 = vmatpush1.bf16.msra.mxu0 0
      %1154 = vmatprep.subr.bf16.mxu0 0
      %1155 = vmatpush1.bf16.msra.mxu0 0
      %1156 = vmatprep.subr.bf16.mxu0 0
      %1157 = vmatpush1.bf16.msra.mxu0 0
      %1158 = vmatprep.subr.bf16.mxu0 0
      %1159 = vmatpush1.bf16.msra.mxu0 0
      %1160 = vmatprep.subr.bf16.mxu0 0
      %1161 = vmatpush1.bf16.msra.mxu0 0
      %1162 = vmatprep.mubr.bf16.mxu0 0
      %1163 = vmatmul.mubr.bf16.gmra.mrb[0].mxu0 %v1060
      %v1164 = vpop.f32.mrb[0].mxu0
      %v1165 = vadd.f32 %v1081, %v1164
      %v1166 = vpop.f32.mrb[0].mxu0
      %v1167 = vpop.f32.mrb[0].mxu0
      %v1168 = vpop.f32.mrb[0].mxu0
      %1169 = vdwg.mxu0
      %v1170 = vadd.f32 %v1165, %v755
      %v1171 = vld [vmem:[%s2 + $0xb] sm:$0x1]
      %v1172 = vld [vmem:[%s2 + $0xc] sm:$0x1]
      %1173 = vadd.xlane.f32.xlu0 %v1170
      %v1174 = vpop.xlane.xlu0 %1173
      %v1175 = vmul.f32 %v1174, %v395
      %v1176 = vsub.f32 %v1170, %v1175
      %v1177 = vmul.f32 %v1176, %v1176
      %1178 = vadd.xlane.f32.xlu0 %v1177
      %v1179 = vpop.xlane.xlu0 %1178
      %v1180 = vmul.f32 %v1179, %v395
      %v1181 = vadd.f32 %v1180, 1e-05
      %v1182 = vrsqrt.pop %v1181
      %v1183 = vmul.f32 %v1176, %v1182
      %v1184 = vlaneseq
      %v1185 = vshrl.u32 %v1184, 7
      %v1186 = vsub.s32 0, %v1185
      %v1187 = vrot.slane %v1171, %v1186
      %v1188 = vmul.f32 %v1183, %v1187
      %v1189 = vlaneseq
      %v1190 = vshrl.u32 %v1189, 7
      %v1191 = vsub.s32 0, %v1190
      %v1192 = vrot.slane %v1172, %v1191
      %v1193 = vadd.f32 %v1188, %v1192
      %v1194 = vpack.c.bf16 %v1193, %v1193
      %v1195 = vld [vmem:[%s8] sm:$0xff]
      %v1196 = vld [vmem:[%s8 + $0x8] sm:$0xf]
      %v1197 = vld [vmem:[%s8 + $0xc] sm:$0xff]
      %v1198 = vld [vmem:[%s8 + $0x14] sm:$0xf]
      %v1199 = vld [vmem:[%s8 + $0x18] sm:$0xff]
      %v1200 = vld [vmem:[%s8 + $0x20] sm:$0xf]
      %v1201 = vld [vmem:[%s8 + $0x24] sm:$0xff]
      %v1202 = vld [vmem:[%s8 + $0x2c] sm:$0xf]
      %v1203 = vld [vmem:[%s8 + $0x30] sm:$0xff]
      %v1204 = vld [vmem:[%s8 + $0x38] sm:$0xf]
      %v1205 = vld [vmem:[%s8 + $0x3c] sm:$0xff]
      %v1206 = vld [vmem:[%s8 + $0x44] sm:$0xf]
      %v1207 = vld [vmem:[%s8 + $0x48] sm:$0xff]
      %v1208 = vld [vmem:[%s8 + $0x50] sm:$0xf]
      %v1209 = vld [vmem:[%s8 + $0x54] sm:$0xff]
      %v1210 = vld [vmem:[%s8 + $0x5c] sm:$0xf]
      %v1211 = vld [vmem:[%s8 + $0x60] sm:$0xff]
      %v1212 = vld [vmem:[%s8 + $0x68] sm:$0xf]
      %v1213 = vld [vmem:[%s8 + $0x6c] sm:$0xff]
      %v1214 = vld [vmem:[%s8 + $0x74] sm:$0xf]
      %v1215 = vld [vmem:[%s8 + $0x78] sm:$0xff]
      %v1216 = vld [vmem:[%s8 + $0x80] sm:$0xf]
      %v1217 = vld [vmem:[%s8 + $0x84] sm:$0xff]
      %v1218 = vld [vmem:[%s8 + $0x8c] sm:$0xf]
      %v1219 = vld [vmem:[%s8 + $0x90] sm:$0xff]
      %v1220 = vld [vmem:[%s8 + $0x98] sm:$0xf]
      %v1221 = vld [vmem:[%s8 + $0x9c] sm:$0xff]
      %v1222 = vld [vmem:[%s8 + $0xa4] sm:$0xf]
      %v1223 = vld [vmem:[%s8 + $0xa8] sm:$0xff]
      %v1224 = vld [vmem:[%s8 + $0xb0] sm:$0xf]
      %v1225 = vld [vmem:[%s8 + $0xb4] sm:$0xff]
      %v1226 = vld [vmem:[%s8 + $0xbc] sm:$0xf]
      %v1259 = vunpack.c.l.b16 %v1195
      %v1260 = vunpack.c.h.b16 %v1195
      %v1261 = vunpack.c.l.b16 %v1196
      %v1262 = vunpack.c.l.b16 %v1197
      %v1263 = vunpack.c.h.b16 %v1197
      %v1264 = vunpack.c.l.b16 %v1198
      %v1265 = vunpack.c.l.b16 %v1199
      %v1266 = vunpack.c.h.b16 %v1199
      %v1267 = vunpack.c.l.b16 %v1200
      %v1268 = vunpack.c.l.b16 %v1201
      %v1269 = vunpack.c.h.b16 %v1201
      %v1270 = vunpack.c.l.b16 %v1202
      %v1271 = vunpack.c.l.b16 %v1203
      %v1272 = vunpack.c.h.b16 %v1203
      %v1273 = vunpack.c.l.b16 %v1204
      %v1274 = vunpack.c.l.b16 %v1205
      %v1275 = vunpack.c.h.b16 %v1205
      %v1276 = vunpack.c.l.b16 %v1206
      %v1277 = vunpack.c.l.b16 %v1207
      %v1278 = vunpack.c.h.b16 %v1207
      %v1279 = vunpack.c.l.b16 %v1208
      %v1280 = vunpack.c.l.b16 %v1209
      %v1281 = vunpack.c.h.b16 %v1209
      %v1282 = vunpack.c.l.b16 %v1210
      %v1283 = vunpack.c.l.b16 %v1211
      %v1284 = vunpack.c.h.b16 %v1211
      %v1285 = vunpack.c.l.b16 %v1212
      %v1286 = vunpack.c.l.b16 %v1213
      %v1287 = vunpack.c.h.b16 %v1213
      %v1288 = vunpack.c.l.b16 %v1214
      %v1289 = vunpack.c.l.b16 %v1215
      %v1290 = vunpack.c.h.b16 %v1215
      %v1291 = vunpack.c.l.b16 %v1216
      %v1292 = vunpack.c.l.b16 %v1217
      %v1293 = vunpack.c.h.b16 %v1217
      %v1294 = vunpack.c.l.b16 %v1218
      %v1295 = vunpack.c.l.b16 %v1219
      %v1296 = vunpack.c.h.b16 %v1219
      %v1297 = vunpack.c.l.b16 %v1220
      %v1298 = vunpack.c.l.b16 %v1221
      %v1299 = vunpack.c.h.b16 %v1221
      %v1300 = vunpack.c.l.b16 %v1222
      %v1301 = vunpack.c.l.b16 %v1223
      %v1302 = vunpack.c.h.b16 %v1223
      %v1303 = vunpack.c.l.b16 %v1224
      %v1304 = vunpack.c.l.b16 %v1225
      %v1305 = vunpack.c.h.b16 %v1225
      %v1306 = vunpack.c.l.b16 %v1226
      %v1307 = vpack.c.b16 %v1262, %v1259
      %v1308 = vpack.c.b16 %v1263, %v1260
      %v1309 = vpack.c.b16 %v1264, %v1261
      %v1310 = vpack.c.b16 %v1268, %v1265
      %v1311 = vpack.c.b16 %v1269, %v1266
      %v1312 = vpack.c.b16 %v1270, %v1267
      %v1313 = vpack.c.b16 %v1274, %v1271
      %v1314 = vpack.c.b16 %v1275, %v1272
      %v1315 = vpack.c.b16 %v1276, %v1273
      %v1316 = vpack.c.b16 %v1280, %v1277
      %v1317 = vpack.c.b16 %v1281, %v1278
      %v1318 = vpack.c.b16 %v1282, %v1279
      %v1319 = vpack.c.b16 %v1286, %v1283
      %v1320 = vpack.c.b16 %v1287, %v1284
      %v1321 = vpack.c.b16 %v1288, %v1285
      %v1322 = vpack.c.b16 %v1292, %v1289
      %v1323 = vpack.c.b16 %v1293, %v1290
      %v1324 = vpack.c.b16 %v1294, %v1291
      %v1325 = vpack.c.b16 %v1298, %v1295
      %v1326 = vpack.c.b16 %v1299, %v1296
      %v1327 = vpack.c.b16 %v1300, %v1297
      %v1328 = vpack.c.b16 %v1304, %v1301
      %v1329 = vpack.c.b16 %v1305, %v1302
      %v1330 = vpack.c.b16 %v1306, %v1303
      %1355 = vmatprep.subr.bf16.mxu0 %v1308
      %1356 = vmatpush1.bf16.msra.mxu0 %v1307
      %1357 = vmatprep.subr.bf16.mxu0 %v1311
      %1358 = vmatpush1.bf16.msra.mxu0 %v1310
      %1359 = vmatprep.subr.bf16.mxu0 %v1314
      %1360 = vmatpush1.bf16.msra.mxu0 %v1313
      %1361 = vmatprep.subr.bf16.mxu0 %v1317
      %1362 = vmatpush1.bf16.msra.mxu0 %v1316
      %1363 = vmatprep.subr.bf16.mxu0 %v1320
      %1364 = vmatpush1.bf16.msra.mxu0 %v1319
      %1365 = vmatprep.subr.bf16.mxu0 %v1323
      %1366 = vmatpush1.bf16.msra.mxu0 %v1322
      %1367 = vmatprep.subr.bf16.mxu0 %v1326
      %1368 = vmatpush1.bf16.msra.mxu0 %v1325
      %1369 = vmatprep.subr.bf16.mxu0 %v1329
      %1370 = vmatpush1.bf16.msra.mxu0 %v1328
      %1371 = vmatprep.subr.bf16.mxu0 0
      %1372 = vmatpush1.bf16.msra.mxu0 0
      %1373 = vmatprep.subr.bf16.mxu0 0
      %1374 = vmatpush1.bf16.msra.mxu0 0
      %1375 = vmatprep.subr.bf16.mxu0 0
      %1376 = vmatpush1.bf16.msra.mxu0 0
      %1377 = vmatprep.subr.bf16.mxu0 0
      %1378 = vmatpush1.bf16.msra.mxu0 0
      %1379 = vmatprep.subr.bf16.mxu0 0
      %1380 = vmatpush1.bf16.msra.mxu0 0
      %1381 = vmatprep.subr.bf16.mxu0 0
      %1382 = vmatpush1.bf16.msra.mxu0 0
      %1383 = vmatprep.subr.bf16.mxu0 0
      %1384 = vmatpush1.bf16.msra.mxu0 0
      %1385 = vmatprep.subr.bf16.mxu0 0
      %1386 = vmatpush1.bf16.msra.mxu0 0
      %1387 = vmatprep.mubr.bf16.mxu0 0
      %1388 = vmatmul.mubr.bf16.gmra.mrb[0].mxu0 %v1194
      %v1389 = vpop.f32.mrb[0].mxu0
      %v1390 = vadd.f32 0.0, %v1389
      %v1391 = vpop.f32.mrb[0].mxu0
      %v1392 = vadd.f32 0.0, %v1391
      %v1393 = vpop.f32.mrb[0].mxu0
      %v1394 = vpop.f32.mrb[0].mxu0
      %1395 = vdwg.mxu0
      %1396 = vmatprep.subr.bf16.mxu0 0
      %1397 = vmatpush1.bf16.msra.mxu0 %v1309
      %1398 = vmatprep.subr.bf16.mxu0 0
      %1399 = vmatpush1.bf16.msra.mxu0 %v1312
      %1400 = vmatprep.subr.bf16.mxu0 0
      %1401 = vmatpush1.bf16.msra.mxu0 %v1315
      %1402 = vmatprep.subr.bf16.mxu0 0
      %1403 = vmatpush1.bf16.msra.mxu0 %v1318
      %1404 = vmatprep.subr.bf16.mxu0 0
      %1405 = vmatpush1.bf16.msra.mxu0 %v1321
      %1406 = vmatprep.subr.bf16.mxu0 0
      %1407 = vmatpush1.bf16.msra.mxu0 %v1324
      %1408 = vmatprep.subr.bf16.mxu0 0
      %1409 = vmatpush1.bf16.msra.mxu0 %v1327
      %1410 = vmatprep.subr.bf16.mxu0 0
      %1411 = vmatpush1.bf16.msra.mxu0 %v1330
      %1412 = vmatprep.subr.bf16.mxu0 0
      %1413 = vmatpush1.bf16.msra.mxu0 0
      %1414 = vmatprep.subr.bf16.mxu0 0
      %1415 = vmatpush1.bf16.msra.mxu0 0
      %1416 = vmatprep.subr.bf16.mxu0 0
      %1417 = vmatpush1.bf16.msra.mxu0 0
      %1418 = vmatprep.subr.bf16.mxu0 0
      %1419 = vmatpush1.bf16.msra.mxu0 0
      %1420 = vmatprep.subr.bf16.mxu0 0
      %1421 = vmatpush1.bf16.msra.mxu0 0
      %1422 = vmatprep.subr.bf16.mxu0 0
      %1423 = vmatpush1.bf16.msra.mxu0 0
      %1424 = vmatprep.subr.bf16.mxu0 0
      %1425 = vmatpush1.bf16.msra.mxu0 0
      %1426 = vmatprep.subr.bf16.mxu0 0
      %1427 = vmatpush1.bf16.msra.mxu0 0
      %1428 = vmatprep.mubr.bf16.mxu0 0
      %1429 = vmatmul.mubr.bf16.gmra.mrb[0].mxu0 %v1194
      %v1430 = vpop.f32.mrb[0].mxu0
      %v1431 = vadd.f32 0.0, %v1430
      %v1432 = vpop.f32.mrb[0].mxu0
      %v1433 = vpop.f32.mrb[0].mxu0
      %v1434 = vpop.f32.mrb[0].mxu0
      %1435 = vdwg.mxu0
      %v1436 = vld [vmem:[%s2 + $0xd] sm:$0x1]
      %v1437 = vlaneseq
      %v1438 = vshrl.u32 %v1437, 7
      %v1439 = vsub.s32 0, %v1438
      %v1440 = vrot.slane %v1436, %v1439
      %v1441 = vadd.f32 %v1390, %v1440
      %v1442 = vld [vmem:[%s2 + $0xe] sm:$0x1]
      %v1443 = vlaneseq
      %v1444 = vshrl.u32 %v1443, 7
      %v1445 = vsub.s32 0, %v1444
      %v1446 = vrot.slane %v1442, %v1445
      %v1447 = vadd.f32 %v1392, %v1446
      %v1448 = vld [vmem:[%s2 + $0xf] sm:$0x1]
      %v1449 = vlaneseq
      %v1450 = vshrl.u32 %v1449, 7
      %v1451 = vsub.s32 0, %v1450
      %v1452 = vrot.slane %v1448, %v1451
      %v1453 = vadd.f32 %v1431, %v1452
      %v1454 = vlaneseq
      %v1455 = vand.u32 %v1454, 127
      %s1456 = sld [smem:[#allocation3 + %s29]]
      %v1457 = vstv %s1456
      %vm1458 = vcmp.lt.s32.totalorder %v1455, %v1457
      %v1459 = vsel %vm1458, 0.0, -1e+30
      %v1460 = vld [vmem:[%s2 + $0x10] sm:$0x1]
      %v1461 = vlaneseq
      %v1462 = vshrl.u32 %v1461, 7
      %v1463 = vsub.s32 0, %v1462
      %v1464 = vrot.slane %v1460, %v1463
      %v1465 = vadd.f32 %v1464, 0.0
      %v1466 = vmul.f32 %v1441, 0.17677669
      %v1467 = vpack.c.bf16 %v1466, %v1466
      %v1468 = vpack.c.bf16 %v1447, %v1447
      %v1469 = vpack.c.bf16 %v1453, %v1453
      %vm1470 = vcmask 261120
      %v1472 = vsel %vm1470, %v1467, 0
      %v1475 = vsel %vm1470, %v1468, 0
      %1477 = vmatprep.subr.bf16.mxu0 0
      %1478 = vmatpush1.bf16.xpose.msra.mxu0 %v1475
      %1479 = vmatprep.subr.bf16.mxu0 0
      %1480 = vmatpush1.bf16.xpose.msra.mxu0 0
      %1481 = vmatprep.subr.bf16.mxu0 0
      %1482 = vmatpush1.bf16.xpose.msra.mxu0 0
      %1483 = vmatprep.subr.bf16.mxu0 0
      %1484 = vmatpush1.bf16.xpose.msra.mxu0 0
      %1485 = vmatprep.subr.bf16.mxu0 0
      %1486 = vmatpush1.bf16.xpose.msra.mxu0 0
      %1487 = vmatprep.subr.bf16.mxu0 0
      %1488 = vmatpush1.bf16.xpose.msra.mxu0 0
      %1489 = vmatprep.subr.bf16.mxu0 0
      %1490 = vmatpush1.bf16.xpose.msra.mxu0 0
      %1491 = vmatprep.subr.bf16.mxu0 0
      %1492 = vmatpush1.bf16.xpose.msra.mxu0 0
      %1493 = vmatprep.subr.bf16.mxu0 0
      %1494 = vmatpush1.bf16.xpose.msra.mxu0 0
      %1495 = vmatprep.subr.bf16.mxu0 0
      %1496 = vmatpush1.bf16.xpose.msra.mxu0 0
      %1497 = vmatprep.subr.bf16.mxu0 0
      %1498 = vmatpush1.bf16.xpose.msra.mxu0 0
      %1499 = vmatprep.subr.bf16.mxu0 0
      %1500 = vmatpush1.bf16.xpose.msra.mxu0 0
      %1501 = vmatprep.subr.bf16.mxu0 0
      %1502 = vmatpush1.bf16.xpose.msra.mxu0 0
      %1503 = vmatprep.subr.bf16.mxu0 0
      %1504 = vmatpush1.bf16.xpose.msra.mxu0 0
      %1505 = vmatprep.subr.bf16.mxu0 0
      %1506 = vmatpush1.bf16.xpose.msra.mxu0 0
      %1507 = vmatprep.subr.bf16.mxu0 0
      %1508 = vmatpush1.bf16.xpose.msra.mxu0 0
      %1509 = vmatprep.mubr.bf16.mxu0 0
      %1510 = vmatmul.mubr.bf16.gmra.mrb[0].mxu0 %v1472
      %v1511 = vpop.f32.mrb[0].mxu0
      %v1512 = vadd.f32 %v1459, %v1511
      %v1513 = vpop.f32.mrb[0].mxu0
      %v1514 = vpop.f32.mrb[0].mxu0
      %v1515 = vpop.f32.mrb[0].mxu0
      %1516 = vdwg.mxu0
      %vm1517 = vcmask 64512
      %v1518 = vsel %vm1517, %v1512, -inf
      %1519 = vmax.xlane.f32.xlu0 %v1518
      %v1520 = vpop.xlane.xlu0 %1519
      %v1521 = vsub.f32 %v1512, %v1520
      %v1522 = vmul.f32 %v1521, 1.442695
      %v1523 = vpow.pop %v1522
      %v1524 = vsel %vm1517, %v1523, 0.0
      %1525 = vadd.xlane.f32.xlu0 %v1524
      %v1526 = vpop.xlane.xlu0 %1525
      %v1527 = vrcp.pop %v1526
      %v1528 = vmul.f32 %v1523, %v1527
      %v1529 = vpack.c.bf16 %v1528, %v1528
      %v1531 = vsel %vm1517, %v1529, 0
      %vm1533 = vcmask 1043456
      %v1535 = vsel %vm1533, %v1469, 0
      %1537 = vmatprep.subr.bf16.mxu0 0
      %1538 = vmatpush1.bf16.msra.mxu0 %v1535
      %1539 = vmatprep.subr.bf16.mxu0 0
      %1540 = vmatpush1.bf16.msra.mxu0 0
      %1541 = vmatprep.subr.bf16.mxu0 0
      %1542 = vmatpush1.bf16.msra.mxu0 0
      %1543 = vmatprep.subr.bf16.mxu0 0
      %1544 = vmatpush1.bf16.msra.mxu0 0
      %1545 = vmatprep.subr.bf16.mxu0 0
      %1546 = vmatpush1.bf16.msra.mxu0 0
      %1547 = vmatprep.subr.bf16.mxu0 0
      %1548 = vmatpush1.bf16.msra.mxu0 0
      %1549 = vmatprep.subr.bf16.mxu0 0
      %1550 = vmatpush1.bf16.msra.mxu0 0
      %1551 = vmatprep.subr.bf16.mxu0 0
      %1552 = vmatpush1.bf16.msra.mxu0 0
      %1553 = vmatprep.subr.bf16.mxu0 0
      %1554 = vmatpush1.bf16.msra.mxu0 0
      %1555 = vmatprep.subr.bf16.mxu0 0
      %1556 = vmatpush1.bf16.msra.mxu0 0
      %1557 = vmatprep.subr.bf16.mxu0 0
      %1558 = vmatpush1.bf16.msra.mxu0 0
      %1559 = vmatprep.subr.bf16.mxu0 0
      %1560 = vmatpush1.bf16.msra.mxu0 0
      %1561 = vmatprep.subr.bf16.mxu0 0
      %1562 = vmatpush1.bf16.msra.mxu0 0
      %1563 = vmatprep.subr.bf16.mxu0 0
      %1564 = vmatpush1.bf16.msra.mxu0 0
      %1565 = vmatprep.subr.bf16.mxu0 0
      %1566 = vmatpush1.bf16.msra.mxu0 0
      %1567 = vmatprep.subr.bf16.mxu0 0
      %1568 = vmatpush1.bf16.msra.mxu0 0
      %1569 = vmatprep.mubr.bf16.mxu0 0
      %1570 = vmatmul.mubr.bf16.gmra.mrb[0].mxu0 %v1531
      %v1571 = vpop.f32.mrb[0].mxu0
      %v1572 = vadd.f32 0.0, %v1571
      %v1573 = vpop.f32.mrb[0].mxu0
      %v1574 = vpop.f32.mrb[0].mxu0
      %v1575 = vpop.f32.mrb[0].mxu0
      %1576 = vdwg.mxu0
      %v1577 = vpack.c.bf16 %v1572, %v1572
      %v1578 = vld [vmem:[%s9] sm:$0xf]
      %v1579 = vld [vmem:[%s9 + $0x4] sm:$0xf]
      %v1580 = vld [vmem:[%s9 + $0x8] sm:$0xf]
      %v1581 = vld [vmem:[%s9 + $0xc] sm:$0xf]
      %v1586 = vunpack.c.l.b16 %v1578
      %v1587 = vunpack.c.l.b16 %v1579
      %v1588 = vunpack.c.l.b16 %v1580
      %v1589 = vunpack.c.l.b16 %v1581
      %v1590 = vpack.c.b16 %v1587, %v1586
      %v1591 = vpack.c.b16 %v1589, %v1588
      %v1595 = vsel %vm1470, %v1577, 0
      %1597 = vmatprep.subr.bf16.mxu0 0
      %1598 = vmatpush1.bf16.msra.mxu0 %v1590
      %1599 = vmatprep.subr.bf16.mxu0 0
      %1600 = vmatpush1.bf16.msra.mxu0 %v1591
      %1601 = vmatprep.subr.bf16.mxu0 0
      %1602 = vmatpush1.bf16.msra.mxu0 0
      %1603 = vmatprep.subr.bf16.mxu0 0
      %1604 = vmatpush1.bf16.msra.mxu0 0
      %1605 = vmatprep.subr.bf16.mxu0 0
      %1606 = vmatpush1.bf16.msra.mxu0 0
      %1607 = vmatprep.subr.bf16.mxu0 0
      %1608 = vmatpush1.bf16.msra.mxu0 0
      %1609 = vmatprep.subr.bf16.mxu0 0
      %1610 = vmatpush1.bf16.msra.mxu0 0
      %1611 = vmatprep.subr.bf16.mxu0 0
      %1612 = vmatpush1.bf16.msra.mxu0 0
      %1613 = vmatprep.subr.bf16.mxu0 0
      %1614 = vmatpush1.bf16.msra.mxu0 0
      %1615 = vmatprep.subr.bf16.mxu0 0
      %1616 = vmatpush1.bf16.msra.mxu0 0
      %1617 = vmatprep.subr.bf16.mxu0 0
      %1618 = vmatpush1.bf16.msra.mxu0 0
      %1619 = vmatprep.subr.bf16.mxu0 0
      %1620 = vmatpush1.bf16.msra.mxu0 0
      %1621 = vmatprep.subr.bf16.mxu0 0
      %1622 = vmatpush1.bf16.msra.mxu0 0
      %1623 = vmatprep.subr.bf16.mxu0 0
      %1624 = vmatpush1.bf16.msra.mxu0 0
      %1625 = vmatprep.subr.bf16.mxu0 0
      %1626 = vmatpush1.bf16.msra.mxu0 0
      %1627 = vmatprep.subr.bf16.mxu0 0
      %1628 = vmatpush1.bf16.msra.mxu0 0
      %1629 = vmatprep.mubr.bf16.mxu0 0
      %1630 = vmatmul.mubr.bf16.gmra.mrb[0].mxu0 %v1595
      %v1631 = vpop.f32.mrb[0].mxu0
      %v1632 = vadd.f32 0.0, %v1631
      %v1633 = vpop.f32.mrb[0].mxu0
      %v1634 = vpop.f32.mrb[0].mxu0
      %v1635 = vpop.f32.mrb[0].mxu0
      %1636 = vdwg.mxu0
      %v1637 = vadd.f32 %v1465, %v1632
      %1639 = vrot.lane.b32.xlu0 %v1467, 96
      %v1640 = vpop.permute.xlu0 %1639
      %1642 = vrot.lane.b32.xlu0 %v1468, 96
      %v1643 = vpop.permute.xlu0 %1642
      %v1645 = vsel %vm1470, %v1640, 0
      %v1648 = vsel %vm1470, %v1643, 0
      %1650 = vmatprep.subr.bf16.mxu0 0
      %1651 = vmatpush1.bf16.xpose.msra.mxu0 %v1648
      %1652 = vmatprep.subr.bf16.mxu0 0
      %1653 = vmatpush1.bf16.xpose.msra.mxu0 0
      %1654 = vmatprep.subr.bf16.mxu0 0
      %1655 = vmatpush1.bf16.xpose.msra.mxu0 0
      %1656 = vmatprep.subr.bf16.mxu0 0
      %1657 = vmatpush1.bf16.xpose.msra.mxu0 0
      %1658 = vmatprep.subr.bf16.mxu0 0
      %1659 = vmatpush1.bf16.xpose.msra.mxu0 0
      %1660 = vmatprep.subr.bf16.mxu0 0
      %1661 = vmatpush1.bf16.xpose.msra.mxu0 0
      %1662 = vmatprep.subr.bf16.mxu0 0
      %1663 = vmatpush1.bf16.xpose.msra.mxu0 0
      %1664 = vmatprep.subr.bf16.mxu0 0
      %1665 = vmatpush1.bf16.xpose.msra.mxu0 0
      %1666 = vmatprep.subr.bf16.mxu0 0
      %1667 = vmatpush1.bf16.xpose.msra.mxu0 0
      %1668 = vmatprep.subr.bf16.mxu0 0
      %1669 = vmatpush1.bf16.xpose.msra.mxu0 0
      %1670 = vmatprep.subr.bf16.mxu0 0
      %1671 = vmatpush1.bf16.xpose.msra.mxu0 0
      %1672 = vmatprep.subr.bf16.mxu0 0
      %1673 = vmatpush1.bf16.xpose.msra.mxu0 0
      %1674 = vmatprep.subr.bf16.mxu0 0
      %1675 = vmatpush1.bf16.xpose.msra.mxu0 0
      %1676 = vmatprep.subr.bf16.mxu0 0
      %1677 = vmatpush1.bf16.xpose.msra.mxu0 0
      %1678 = vmatprep.subr.bf16.mxu0 0
      %1679 = vmatpush1.bf16.xpose.msra.mxu0 0
      %1680 = vmatprep.subr.bf16.mxu0 0
      %1681 = vmatpush1.bf16.xpose.msra.mxu0 0
      %1682 = vmatprep.mubr.bf16.mxu0 0
      %1683 = vmatmul.mubr.bf16.gmra.mrb[0].mxu0 %v1645
      %v1684 = vpop.f32.mrb[0].mxu0
      %v1685 = vadd.f32 %v1459, %v1684
      %v1686 = vpop.f32.mrb[0].mxu0
      %v1687 = vpop.f32.mrb[0].mxu0
      %v1688 = vpop.f32.mrb[0].mxu0
      %1689 = vdwg.mxu0
      %v1690 = vsel %vm1517, %v1685, -inf
      %1691 = vmax.xlane.f32.xlu0 %v1690
      %v1692 = vpop.xlane.xlu0 %1691
      %v1693 = vsub.f32 %v1685, %v1692
      %v1694 = vmul.f32 %v1693, 1.442695
      %v1695 = vpow.pop %v1694
      %v1696 = vsel %vm1517, %v1695, 0.0
      %1697 = vadd.xlane.f32.xlu0 %v1696
      %v1698 = vpop.xlane.xlu0 %1697
      %v1699 = vrcp.pop %v1698
      %v1700 = vmul.f32 %v1695, %v1699
      %v1701 = vpack.c.bf16 %v1700, %v1700
      %1703 = vrot.lane.b32.xlu0 %v1469, 96
      %v1704 = vpop.permute.xlu0 %1703
      %v1706 = vsel %vm1517, %v1701, 0
      %v1709 = vsel %vm1533, %v1704, 0
      %1711 = vmatprep.subr.bf16.mxu0 0
      %1712 = vmatpush1.bf16.msra.mxu0 %v1709
      %1713 = vmatprep.subr.bf16.mxu0 0
      %1714 = vmatpush1.bf16.msra.mxu0 0
      %1715 = vmatprep.subr.bf16.mxu0 0
      %1716 = vmatpush1.bf16.msra.mxu0 0
      %1717 = vmatprep.subr.bf16.mxu0 0
      %1718 = vmatpush1.bf16.msra.mxu0 0
      %1719 = vmatprep.subr.bf16.mxu0 0
      %1720 = vmatpush1.bf16.msra.mxu0 0
      %1721 = vmatprep.subr.bf16.mxu0 0
      %1722 = vmatpush1.bf16.msra.mxu0 0
      %1723 = vmatprep.subr.bf16.mxu0 0
      %1724 = vmatpush1.bf16.msra.mxu0 0
      %1725 = vmatprep.subr.bf16.mxu0 0
      %1726 = vmatpush1.bf16.msra.mxu0 0
      %1727 = vmatprep.subr.bf16.mxu0 0
      %1728 = vmatpush1.bf16.msra.mxu0 0
      %1729 = vmatprep.subr.bf16.mxu0 0
      %1730 = vmatpush1.bf16.msra.mxu0 0
      %1731 = vmatprep.subr.bf16.mxu0 0
      %1732 = vmatpush1.bf16.msra.mxu0 0
      %1733 = vmatprep.subr.bf16.mxu0 0
      %1734 = vmatpush1.bf16.msra.mxu0 0
      %1735 = vmatprep.subr.bf16.mxu0 0
      %1736 = vmatpush1.bf16.msra.mxu0 0
      %1737 = vmatprep.subr.bf16.mxu0 0
      %1738 = vmatpush1.bf16.msra.mxu0 0
      %1739 = vmatprep.subr.bf16.mxu0 0
      %1740 = vmatpush1.bf16.msra.mxu0 0
      %1741 = vmatprep.subr.bf16.mxu0 0
      %1742 = vmatpush1.bf16.msra.mxu0 0
      %1743 = vmatprep.mubr.bf16.mxu0 0
      %1744 = vmatmul.mubr.bf16.gmra.mrb[0].mxu0 %v1706
      %v1745 = vpop.f32.mrb[0].mxu0
      %v1746 = vadd.f32 0.0, %v1745
      %v1747 = vpop.f32.mrb[0].mxu0
      %v1748 = vpop.f32.mrb[0].mxu0
      %v1749 = vpop.f32.mrb[0].mxu0
      %1750 = vdwg.mxu0
      %v1751 = vpack.c.bf16 %v1746, %v1746
      %v1752 = vld [vmem:[%s9 + $0x10] sm:$0xf]
      %v1753 = vld [vmem:[%s9 + $0x14] sm:$0xf]
      %v1754 = vld [vmem:[%s9 + $0x18] sm:$0xf]
      %v1755 = vld [vmem:[%s9 + $0x1c] sm:$0xf]
      %v1760 = vunpack.c.l.b16 %v1752
      %v1761 = vunpack.c.l.b16 %v1753
      %v1762 = vunpack.c.l.b16 %v1754
      %v1763 = vunpack.c.l.b16 %v1755
      %v1764 = vpack.c.b16 %v1761, %v1760
      %v1765 = vpack.c.b16 %v1763, %v1762
      %v1769 = vsel %vm1470, %v1751, 0
      %1771 = vmatprep.subr.bf16.mxu0 0
      %1772 = vmatpush1.bf16.msra.mxu0 %v1764
      %1773 = vmatprep.subr.bf16.mxu0 0
      %1774 = vmatpush1.bf16.msra.mxu0 %v1765
      %1775 = vmatprep.subr.bf16.mxu0 0
      %1776 = vmatpush1.bf16.msra.mxu0 0
      %1777 = vmatprep.subr.bf16.mxu0 0
      %1778 = vmatpush1.bf16.msra.mxu0 0
      %1779 = vmatprep.subr.bf16.mxu0 0
      %1780 = vmatpush1.bf16.msra.mxu0 0
      %1781 = vmatprep.subr.bf16.mxu0 0
      %1782 = vmatpush1.bf16.msra.mxu0 0
      %1783 = vmatprep.subr.bf16.mxu0 0
      %1784 = vmatpush1.bf16.msra.mxu0 0
      %1785 = vmatprep.subr.bf16.mxu0 0
      %1786 = vmatpush1.bf16.msra.mxu0 0
      %1787 = vmatprep.subr.bf16.mxu0 0
      %1788 = vmatpush1.bf16.msra.mxu0 0
      %1789 = vmatprep.subr.bf16.mxu0 0
      %1790 = vmatpush1.bf16.msra.mxu0 0
      %1791 = vmatprep.subr.bf16.mxu0 0
      %1792 = vmatpush1.bf16.msra.mxu0 0
      %1793 = vmatprep.subr.bf16.mxu0 0
      %1794 = vmatpush1.bf16.msra.mxu0 0
      %1795 = vmatprep.subr.bf16.mxu0 0
      %1796 = vmatpush1.bf16.msra.mxu0 0
      %1797 = vmatprep.subr.bf16.mxu0 0
      %1798 = vmatpush1.bf16.msra.mxu0 0
      %1799 = vmatprep.subr.bf16.mxu0 0
      %1800 = vmatpush1.bf16.msra.mxu0 0
      %1801 = vmatprep.subr.bf16.mxu0 0
      %1802 = vmatpush1.bf16.msra.mxu0 0
      %1803 = vmatprep.mubr.bf16.mxu0 0
      %1804 = vmatmul.mubr.bf16.gmra.mrb[0].mxu0 %v1769
      %v1805 = vpop.f32.mrb[0].mxu0
      %v1806 = vadd.f32 0.0, %v1805
      %v1807 = vpop.f32.mrb[0].mxu0
      %v1808 = vpop.f32.mrb[0].mxu0
      %v1809 = vpop.f32.mrb[0].mxu0
      %1810 = vdwg.mxu0
      %v1811 = vadd.f32 %v1637, %v1806
      %1812 = vrot.lane.b32.xlu0 %v1467, 64
      %v1813 = vpop.permute.xlu0 %1812
      %1814 = vrot.lane.b32.xlu0 %v1468, 64
      %v1815 = vpop.permute.xlu0 %1814
      %v1817 = vsel %vm1470, %v1813, 0
      %v1820 = vsel %vm1470, %v1815, 0
      %1822 = vmatprep.subr.bf16.mxu0 0
      %1823 = vmatpush1.bf16.xpose.msra.mxu0 %v1820
      %1824 = vmatprep.subr.bf16.mxu0 0
      %1825 = vmatpush1.bf16.xpose.msra.mxu0 0
      %1826 = vmatprep.subr.bf16.mxu0 0
      %1827 = vmatpush1.bf16.xpose.msra.mxu0 0
      %1828 = vmatprep.subr.bf16.mxu0 0
      %1829 = vmatpush1.bf16.xpose.msra.mxu0 0
      %1830 = vmatprep.subr.bf16.mxu0 0
      %1831 = vmatpush1.bf16.xpose.msra.mxu0 0
      %1832 = vmatprep.subr.bf16.mxu0 0
      %1833 = vmatpush1.bf16.xpose.msra.mxu0 0
      %1834 = vmatprep.subr.bf16.mxu0 0
      %1835 = vmatpush1.bf16.xpose.msra.mxu0 0
      %1836 = vmatprep.subr.bf16.mxu0 0
      %1837 = vmatpush1.bf16.xpose.msra.mxu0 0
      %1838 = vmatprep.subr.bf16.mxu0 0
      %1839 = vmatpush1.bf16.xpose.msra.mxu0 0
      %1840 = vmatprep.subr.bf16.mxu0 0
      %1841 = vmatpush1.bf16.xpose.msra.mxu0 0
      %1842 = vmatprep.subr.bf16.mxu0 0
      %1843 = vmatpush1.bf16.xpose.msra.mxu0 0
      %1844 = vmatprep.subr.bf16.mxu0 0
      %1845 = vmatpush1.bf16.xpose.msra.mxu0 0
      %1846 = vmatprep.subr.bf16.mxu0 0
      %1847 = vmatpush1.bf16.xpose.msra.mxu0 0
      %1848 = vmatprep.subr.bf16.mxu0 0
      %1849 = vmatpush1.bf16.xpose.msra.mxu0 0
      %1850 = vmatprep.subr.bf16.mxu0 0
      %1851 = vmatpush1.bf16.xpose.msra.mxu0 0
      %1852 = vmatprep.subr.bf16.mxu0 0
      %1853 = vmatpush1.bf16.xpose.msra.mxu0 0
      %1854 = vmatprep.mubr.bf16.mxu0 0
      %1855 = vmatmul.mubr.bf16.gmra.mrb[0].mxu0 %v1817
      %v1856 = vpop.f32.mrb[0].mxu0
      %v1857 = vadd.f32 %v1459, %v1856
      %v1858 = vpop.f32.mrb[0].mxu0
      %v1859 = vpop.f32.mrb[0].mxu0
      %v1860 = vpop.f32.mrb[0].mxu0
      %1861 = vdwg.mxu0
      %v1862 = vsel %vm1517, %v1857, -inf
      %1863 = vmax.xlane.f32.xlu0 %v1862
      %v1864 = vpop.xlane.xlu0 %1863
      %v1865 = vsub.f32 %v1857, %v1864
      %v1866 = vmul.f32 %v1865, 1.442695
      %v1867 = vpow.pop %v1866
      %v1868 = vsel %vm1517, %v1867, 0.0
      %1869 = vadd.xlane.f32.xlu0 %v1868
      %v1870 = vpop.xlane.xlu0 %1869
      %v1871 = vrcp.pop %v1870
      %v1872 = vmul.f32 %v1867, %v1871
      %v1873 = vpack.c.bf16 %v1872, %v1872
      %1874 = vrot.lane.b32.xlu0 %v1469, 64
      %v1875 = vpop.permute.xlu0 %1874
      %v1877 = vsel %vm1517, %v1873, 0
      %v1880 = vsel %vm1533, %v1875, 0
      %1882 = vmatprep.subr.bf16.mxu0 0
      %1883 = vmatpush1.bf16.msra.mxu0 %v1880
      %1884 = vmatprep.subr.bf16.mxu0 0
      %1885 = vmatpush1.bf16.msra.mxu0 0
      %1886 = vmatprep.subr.bf16.mxu0 0
      %1887 = vmatpush1.bf16.msra.mxu0 0
      %1888 = vmatprep.subr.bf16.mxu0 0
      %1889 = vmatpush1.bf16.msra.mxu0 0
      %1890 = vmatprep.subr.bf16.mxu0 0
      %1891 = vmatpush1.bf16.msra.mxu0 0
      %1892 = vmatprep.subr.bf16.mxu0 0
      %1893 = vmatpush1.bf16.msra.mxu0 0
      %1894 = vmatprep.subr.bf16.mxu0 0
      %1895 = vmatpush1.bf16.msra.mxu0 0
      %1896 = vmatprep.subr.bf16.mxu0 0
      %1897 = vmatpush1.bf16.msra.mxu0 0
      %1898 = vmatprep.subr.bf16.mxu0 0
      %1899 = vmatpush1.bf16.msra.mxu0 0
      %1900 = vmatprep.subr.bf16.mxu0 0
      %1901 = vmatpush1.bf16.msra.mxu0 0
      %1902 = vmatprep.subr.bf16.mxu0 0
      %1903 = vmatpush1.bf16.msra.mxu0 0
      %1904 = vmatprep.subr.bf16.mxu0 0
      %1905 = vmatpush1.bf16.msra.mxu0 0
      %1906 = vmatprep.subr.bf16.mxu0 0
      %1907 = vmatpush1.bf16.msra.mxu0 0
      %1908 = vmatprep.subr.bf16.mxu0 0
      %1909 = vmatpush1.bf16.msra.mxu0 0
      %1910 = vmatprep.subr.bf16.mxu0 0
      %1911 = vmatpush1.bf16.msra.mxu0 0
      %1912 = vmatprep.subr.bf16.mxu0 0
      %1913 = vmatpush1.bf16.msra.mxu0 0
      %1914 = vmatprep.mubr.bf16.mxu0 0
      %1915 = vmatmul.mubr.bf16.gmra.mrb[0].mxu0 %v1877
      %v1916 = vpop.f32.mrb[0].mxu0
      %v1917 = vadd.f32 0.0, %v1916
      %v1918 = vpop.f32.mrb[0].mxu0
      %v1919 = vpop.f32.mrb[0].mxu0
      %v1920 = vpop.f32.mrb[0].mxu0
      %1921 = vdwg.mxu0
      %v1922 = vpack.c.bf16 %v1917, %v1917
      %v1923 = vld [vmem:[%s9 + $0x20] sm:$0xf]
      %v1924 = vld [vmem:[%s9 + $0x24] sm:$0xf]
      %v1925 = vld [vmem:[%s9 + $0x28] sm:$0xf]
      %v1926 = vld [vmem:[%s9 + $0x2c] sm:$0xf]
      %v1931 = vunpack.c.l.b16 %v1923
      %v1932 = vunpack.c.l.b16 %v1924
      %v1933 = vunpack.c.l.b16 %v1925
      %v1934 = vunpack.c.l.b16 %v1926
      %v1935 = vpack.c.b16 %v1932, %v1931
      %v1936 = vpack.c.b16 %v1934, %v1933
      %v1940 = vsel %vm1470, %v1922, 0
      %1942 = vmatprep.subr.bf16.mxu0 0
      %1943 = vmatpush1.bf16.msra.mxu0 %v1935
      %1944 = vmatprep.subr.bf16.mxu0 0
      %1945 = vmatpush1.bf16.msra.mxu0 %v1936
      %1946 = vmatprep.subr.bf16.mxu0 0
      %1947 = vmatpush1.bf16.msra.mxu0 0
      %1948 = vmatprep.subr.bf16.mxu0 0
      %1949 = vmatpush1.bf16.msra.mxu0 0
      %1950 = vmatprep.subr.bf16.mxu0 0
      %1951 = vmatpush1.bf16.msra.mxu0 0
      %1952 = vmatprep.subr.bf16.mxu0 0
      %1953 = vmatpush1.bf16.msra.mxu0 0
      %1954 = vmatprep.subr.bf16.mxu0 0
      %1955 = vmatpush1.bf16.msra.mxu0 0
      %1956 = vmatprep.subr.bf16.mxu0 0
      %1957 = vmatpush1.bf16.msra.mxu0 0
      %1958 = vmatprep.subr.bf16.mxu0 0
      %1959 = vmatpush1.bf16.msra.mxu0 0
      %1960 = vmatprep.subr.bf16.mxu0 0
      %1961 = vmatpush1.bf16.msra.mxu0 0
      %1962 = vmatprep.subr.bf16.mxu0 0
      %1963 = vmatpush1.bf16.msra.mxu0 0
      %1964 = vmatprep.subr.bf16.mxu0 0
      %1965 = vmatpush1.bf16.msra.mxu0 0
      %1966 = vmatprep.subr.bf16.mxu0 0
      %1967 = vmatpush1.bf16.msra.mxu0 0
      %1968 = vmatprep.subr.bf16.mxu0 0
      %1969 = vmatpush1.bf16.msra.mxu0 0
      %1970 = vmatprep.subr.bf16.mxu0 0
      %1971 = vmatpush1.bf16.msra.mxu0 0
      %1972 = vmatprep.subr.bf16.mxu0 0
      %1973 = vmatpush1.bf16.msra.mxu0 0
      %1974 = vmatprep.mubr.bf16.mxu0 0
      %1975 = vmatmul.mubr.bf16.gmra.mrb[0].mxu0 %v1940
      %v1976 = vpop.f32.mrb[0].mxu0
      %v1977 = vadd.f32 0.0, %v1976
      %v1978 = vpop.f32.mrb[0].mxu0
      %v1979 = vpop.f32.mrb[0].mxu0
      %v1980 = vpop.f32.mrb[0].mxu0
      %1981 = vdwg.mxu0
      %v1982 = vadd.f32 %v1811, %v1977
      %1983 = vrot.lane.b32.xlu0 %v1467, 32
      %v1984 = vpop.permute.xlu0 %1983
      %1985 = vrot.lane.b32.xlu0 %v1468, 32
      %v1986 = vpop.permute.xlu0 %1985
      %v1988 = vsel %vm1470, %v1984, 0
      %v1991 = vsel %vm1470, %v1986, 0
      %1993 = vmatprep.subr.bf16.mxu0 0
      %1994 = vmatpush1.bf16.xpose.msra.mxu0 %v1991
      %1995 = vmatprep.subr.bf16.mxu0 0
      %1996 = vmatpush1.bf16.xpose.msra.mxu0 0
      %1997 = vmatprep.subr.bf16.mxu0 0
      %1998 = vmatpush1.bf16.xpose.msra.mxu0 0
      %1999 = vmatprep.subr.bf16.mxu0 0
      %2000 = vmatpush1.bf16.xpose.msra.mxu0 0
      %2001 = vmatprep.subr.bf16.mxu0 0
      %2002 = vmatpush1.bf16.xpose.msra.mxu0 0
      %2003 = vmatprep.subr.bf16.mxu0 0
      %2004 = vmatpush1.bf16.xpose.msra.mxu0 0
      %2005 = vmatprep.subr.bf16.mxu0 0
      %2006 = vmatpush1.bf16.xpose.msra.mxu0 0
      %2007 = vmatprep.subr.bf16.mxu0 0
      %2008 = vmatpush1.bf16.xpose.msra.mxu0 0
      %2009 = vmatprep.subr.bf16.mxu0 0
      %2010 = vmatpush1.bf16.xpose.msra.mxu0 0
      %2011 = vmatprep.subr.bf16.mxu0 0
      %2012 = vmatpush1.bf16.xpose.msra.mxu0 0
      %2013 = vmatprep.subr.bf16.mxu0 0
      %2014 = vmatpush1.bf16.xpose.msra.mxu0 0
      %2015 = vmatprep.subr.bf16.mxu0 0
      %2016 = vmatpush1.bf16.xpose.msra.mxu0 0
      %2017 = vmatprep.subr.bf16.mxu0 0
      %2018 = vmatpush1.bf16.xpose.msra.mxu0 0
      %2019 = vmatprep.subr.bf16.mxu0 0
      %2020 = vmatpush1.bf16.xpose.msra.mxu0 0
      %2021 = vmatprep.subr.bf16.mxu0 0
      %2022 = vmatpush1.bf16.xpose.msra.mxu0 0
      %2023 = vmatprep.subr.bf16.mxu0 0
      %2024 = vmatpush1.bf16.xpose.msra.mxu0 0
      %2025 = vmatprep.mubr.bf16.mxu0 0
      %2026 = vmatmul.mubr.bf16.gmra.mrb[0].mxu0 %v1988
      %v2027 = vpop.f32.mrb[0].mxu0
      %v2028 = vadd.f32 %v1459, %v2027
      %v2029 = vpop.f32.mrb[0].mxu0
      %v2030 = vpop.f32.mrb[0].mxu0
      %v2031 = vpop.f32.mrb[0].mxu0
      %2032 = vdwg.mxu0
      %v2033 = vsel %vm1517, %v2028, -inf
      %2034 = vmax.xlane.f32.xlu0 %v2033
      %v2035 = vpop.xlane.xlu0 %2034
      %v2036 = vsub.f32 %v2028, %v2035
      %v2037 = vmul.f32 %v2036, 1.442695
      %v2038 = vpow.pop %v2037
      %v2039 = vsel %vm1517, %v2038, 0.0
      %2040 = vadd.xlane.f32.xlu0 %v2039
      %v2041 = vpop.xlane.xlu0 %2040
      %v2042 = vrcp.pop %v2041
      %v2043 = vmul.f32 %v2038, %v2042
      %v2044 = vpack.c.bf16 %v2043, %v2043
      %2045 = vrot.lane.b32.xlu0 %v1469, 32
      %v2046 = vpop.permute.xlu0 %2045
      %v2048 = vsel %vm1517, %v2044, 0
      %v2051 = vsel %vm1533, %v2046, 0
      %2053 = vmatprep.subr.bf16.mxu0 0
      %2054 = vmatpush1.bf16.msra.mxu0 %v2051
      %2055 = vmatprep.subr.bf16.mxu0 0
      %2056 = vmatpush1.bf16.msra.mxu0 0
      %2057 = vmatprep.subr.bf16.mxu0 0
      %2058 = vmatpush1.bf16.msra.mxu0 0
      %2059 = vmatprep.subr.bf16.mxu0 0
      %2060 = vmatpush1.bf16.msra.mxu0 0
      %2061 = vmatprep.subr.bf16.mxu0 0
      %2062 = vmatpush1.bf16.msra.mxu0 0
      %2063 = vmatprep.subr.bf16.mxu0 0
      %2064 = vmatpush1.bf16.msra.mxu0 0
      %2065 = vmatprep.subr.bf16.mxu0 0
      %2066 = vmatpush1.bf16.msra.mxu0 0
      %2067 = vmatprep.subr.bf16.mxu0 0
      %2068 = vmatpush1.bf16.msra.mxu0 0
      %2069 = vmatprep.subr.bf16.mxu0 0
      %2070 = vmatpush1.bf16.msra.mxu0 0
      %2071 = vmatprep.subr.bf16.mxu0 0
      %2072 = vmatpush1.bf16.msra.mxu0 0
      %2073 = vmatprep.subr.bf16.mxu0 0
      %2074 = vmatpush1.bf16.msra.mxu0 0
      %2075 = vmatprep.subr.bf16.mxu0 0
      %2076 = vmatpush1.bf16.msra.mxu0 0
      %2077 = vmatprep.subr.bf16.mxu0 0
      %2078 = vmatpush1.bf16.msra.mxu0 0
      %2079 = vmatprep.subr.bf16.mxu0 0
      %2080 = vmatpush1.bf16.msra.mxu0 0
      %2081 = vmatprep.subr.bf16.mxu0 0
      %2082 = vmatpush1.bf16.msra.mxu0 0
      %2083 = vmatprep.subr.bf16.mxu0 0
      %2084 = vmatpush1.bf16.msra.mxu0 0
      %2085 = vmatprep.mubr.bf16.mxu0 0
      %2086 = vmatmul.mubr.bf16.gmra.mrb[0].mxu0 %v2048
      %v2087 = vpop.f32.mrb[0].mxu0
      %v2088 = vadd.f32 0.0, %v2087
      %v2089 = vpop.f32.mrb[0].mxu0
      %v2090 = vpop.f32.mrb[0].mxu0
      %v2091 = vpop.f32.mrb[0].mxu0
      %2092 = vdwg.mxu0
      %v2093 = vpack.c.bf16 %v2088, %v2088
      %v2094 = vld [vmem:[%s9 + $0x30] sm:$0xf]
      %v2095 = vld [vmem:[%s9 + $0x34] sm:$0xf]
      %v2096 = vld [vmem:[%s9 + $0x38] sm:$0xf]
      %v2097 = vld [vmem:[%s9 + $0x3c] sm:$0xf]
      %v2102 = vunpack.c.l.b16 %v2094
      %v2103 = vunpack.c.l.b16 %v2095
      %v2104 = vunpack.c.l.b16 %v2096
      %v2105 = vunpack.c.l.b16 %v2097
      %v2106 = vpack.c.b16 %v2103, %v2102
      %v2107 = vpack.c.b16 %v2105, %v2104
      %v2111 = vsel %vm1470, %v2093, 0
      %2113 = vmatprep.subr.bf16.mxu0 0
      %2114 = vmatpush1.bf16.msra.mxu0 %v2106
      %2115 = vmatprep.subr.bf16.mxu0 0
      %2116 = vmatpush1.bf16.msra.mxu0 %v2107
      %2117 = vmatprep.subr.bf16.mxu0 0
      %2118 = vmatpush1.bf16.msra.mxu0 0
      %2119 = vmatprep.subr.bf16.mxu0 0
      %2120 = vmatpush1.bf16.msra.mxu0 0
      %2121 = vmatprep.subr.bf16.mxu0 0
      %2122 = vmatpush1.bf16.msra.mxu0 0
      %2123 = vmatprep.subr.bf16.mxu0 0
      %2124 = vmatpush1.bf16.msra.mxu0 0
      %2125 = vmatprep.subr.bf16.mxu0 0
      %2126 = vmatpush1.bf16.msra.mxu0 0
      %2127 = vmatprep.subr.bf16.mxu0 0
      %2128 = vmatpush1.bf16.msra.mxu0 0
      %2129 = vmatprep.subr.bf16.mxu0 0
      %2130 = vmatpush1.bf16.msra.mxu0 0
      %2131 = vmatprep.subr.bf16.mxu0 0
      %2132 = vmatpush1.bf16.msra.mxu0 0
      %2133 = vmatprep.subr.bf16.mxu0 0
      %2134 = vmatpush1.bf16.msra.mxu0 0
      %2135 = vmatprep.subr.bf16.mxu0 0
      %2136 = vmatpush1.bf16.msra.mxu0 0
      %2137 = vmatprep.subr.bf16.mxu0 0
      %2138 = vmatpush1.bf16.msra.mxu0 0
      %2139 = vmatprep.subr.bf16.mxu0 0
      %2140 = vmatpush1.bf16.msra.mxu0 0
      %2141 = vmatprep.subr.bf16.mxu0 0
      %2142 = vmatpush1.bf16.msra.mxu0 0
      %2143 = vmatprep.subr.bf16.mxu0 0
      %2144 = vmatpush1.bf16.msra.mxu0 0
      %2145 = vmatprep.mubr.bf16.mxu0 0
      %2146 = vmatmul.mubr.bf16.gmra.mrb[0].mxu0 %v2111
      %v2147 = vpop.f32.mrb[0].mxu0
      %v2148 = vadd.f32 0.0, %v2147
      %v2149 = vpop.f32.mrb[0].mxu0
      %v2150 = vpop.f32.mrb[0].mxu0
      %v2151 = vpop.f32.mrb[0].mxu0
      %2152 = vdwg.mxu0
      %v2153 = vadd.f32 %v1982, %v2148
      %v2154 = vadd.f32 %v2153, %v1170
      %v2155 = vld [vmem:[%s2 + $0x11] sm:$0x1]
      %v2156 = vld [vmem:[%s2 + $0x12] sm:$0x1]
      %2157 = vadd.xlane.f32.xlu0 %v2154
      %v2158 = vpop.xlane.xlu0 %2157
      %v2159 = vmul.f32 %v2158, %v395
      %v2160 = vsub.f32 %v2154, %v2159
      %v2161 = vmul.f32 %v2160, %v2160
      %2162 = vadd.xlane.f32.xlu0 %v2161
      %v2163 = vpop.xlane.xlu0 %2162
      %v2164 = vmul.f32 %v2163, %v395
      %v2165 = vadd.f32 %v2164, 1e-05
      %v2166 = vrsqrt.pop %v2165
      %v2167 = vmul.f32 %v2160, %v2166
      %v2168 = vlaneseq
      %v2169 = vshrl.u32 %v2168, 7
      %v2170 = vsub.s32 0, %v2169
      %v2171 = vrot.slane %v2155, %v2170
      %v2172 = vmul.f32 %v2167, %v2171
      %v2173 = vlaneseq
      %v2174 = vshrl.u32 %v2173, 7
      %v2175 = vsub.s32 0, %v2174
      %v2176 = vrot.slane %v2156, %v2175
      %v2177 = vadd.f32 %v2172, %v2176
      %v2178 = vpack.c.bf16 %v2177, %v2177
      %v2179 = vld [vmem:[%s10] sm:$0xff]
      %v2180 = vld [vmem:[%s10 + $0x8] sm:$0xff]
      %v2181 = vld [vmem:[%s10 + $0x10] sm:$0xff]
      %v2182 = vld [vmem:[%s10 + $0x18] sm:$0xff]
      %v2183 = vld [vmem:[%s10 + $0x20] sm:$0xff]
      %v2184 = vld [vmem:[%s10 + $0x28] sm:$0xff]
      %v2185 = vld [vmem:[%s10 + $0x30] sm:$0xff]
      %v2186 = vld [vmem:[%s10 + $0x38] sm:$0xff]
      %v2187 = vld [vmem:[%s10 + $0x40] sm:$0xff]
      %v2188 = vld [vmem:[%s10 + $0x48] sm:$0xff]
      %v2189 = vld [vmem:[%s10 + $0x50] sm:$0xff]
      %v2190 = vld [vmem:[%s10 + $0x58] sm:$0xff]
      %v2191 = vld [vmem:[%s10 + $0x60] sm:$0xff]
      %v2192 = vld [vmem:[%s10 + $0x68] sm:$0xff]
      %v2193 = vld [vmem:[%s10 + $0x70] sm:$0xff]
      %v2194 = vld [vmem:[%s10 + $0x78] sm:$0xff]
      %s2195 = scalar_lea.vmem %s3, 1
      %v2196 = vld [vmem:[%s2195] ss:$2 sm:$0x3]
      %v2198 = vlaneseq
      %v2199 = vshrl.u32 %v2198, 7
      %v2200 = vsub.s32 0, %v2199
      %v2201 = vrot.slane %v2196, %v2200
      %v2202 = vlaneseq
      %v2203 = vshrl.u32 %v2202, 7
      %v2204 = vsub.s32 1, %v2203
      %v2205 = vrot.slane %v2196, %v2204
      %v2224 = vunpack.c.l.b16 %v2179
      %v2225 = vunpack.c.h.b16 %v2179
      %v2226 = vunpack.c.l.b16 %v2180
      %v2227 = vunpack.c.h.b16 %v2180
      %v2228 = vunpack.c.l.b16 %v2181
      %v2229 = vunpack.c.h.b16 %v2181
      %v2230 = vunpack.c.l.b16 %v2182
      %v2231 = vunpack.c.h.b16 %v2182
      %v2232 = vunpack.c.l.b16 %v2183
      %v2233 = vunpack.c.h.b16 %v2183
      %v2234 = vunpack.c.l.b16 %v2184
      %v2235 = vunpack.c.h.b16 %v2184
      %v2236 = vunpack.c.l.b16 %v2185
      %v2237 = vunpack.c.h.b16 %v2185
      %v2238 = vunpack.c.l.b16 %v2186
      %v2239 = vunpack.c.h.b16 %v2186
      %v2240 = vunpack.c.l.b16 %v2187
      %v2241 = vunpack.c.h.b16 %v2187
      %v2242 = vunpack.c.l.b16 %v2188
      %v2243 = vunpack.c.h.b16 %v2188
      %v2244 = vunpack.c.l.b16 %v2189
      %v2245 = vunpack.c.h.b16 %v2189
      %v2246 = vunpack.c.l.b16 %v2190
      %v2247 = vunpack.c.h.b16 %v2190
      %v2248 = vunpack.c.l.b16 %v2191
      %v2249 = vunpack.c.h.b16 %v2191
      %v2250 = vunpack.c.l.b16 %v2192
      %v2251 = vunpack.c.h.b16 %v2192
      %v2252 = vunpack.c.l.b16 %v2193
      %v2253 = vunpack.c.h.b16 %v2193
      %v2254 = vunpack.c.l.b16 %v2194
      %v2255 = vunpack.c.h.b16 %v2194
      %v2256 = vpack.c.b16 %v2226, %v2224
      %v2257 = vpack.c.b16 %v2227, %v2225
      %v2258 = vpack.c.b16 %v2230, %v2228
      %v2259 = vpack.c.b16 %v2231, %v2229
      %v2260 = vpack.c.b16 %v2234, %v2232
      %v2261 = vpack.c.b16 %v2235, %v2233
      %v2262 = vpack.c.b16 %v2238, %v2236
      %v2263 = vpack.c.b16 %v2239, %v2237
      %v2264 = vpack.c.b16 %v2242, %v2240
      %v2265 = vpack.c.b16 %v2243, %v2241
      %v2266 = vpack.c.b16 %v2246, %v2244
      %v2267 = vpack.c.b16 %v2247, %v2245
      %v2268 = vpack.c.b16 %v2250, %v2248
      %v2269 = vpack.c.b16 %v2251, %v2249
      %v2270 = vpack.c.b16 %v2254, %v2252
      %v2271 = vpack.c.b16 %v2255, %v2253
      %2288 = vmatprep.subr.bf16.mxu0 %v2257
      %2289 = vmatpush1.bf16.msra.mxu0 %v2256
      %2290 = vmatprep.subr.bf16.mxu0 %v2259
      %2291 = vmatpush1.bf16.msra.mxu0 %v2258
      %2292 = vmatprep.subr.bf16.mxu0 %v2261
      %2293 = vmatpush1.bf16.msra.mxu0 %v2260
      %2294 = vmatprep.subr.bf16.mxu0 %v2263
      %2295 = vmatpush1.bf16.msra.mxu0 %v2262
      %2296 = vmatprep.subr.bf16.mxu0 %v2265
      %2297 = vmatpush1.bf16.msra.mxu0 %v2264
      %2298 = vmatprep.subr.bf16.mxu0 %v2267
      %2299 = vmatpush1.bf16.msra.mxu0 %v2266
      %2300 = vmatprep.subr.bf16.mxu0 %v2269
      %2301 = vmatpush1.bf16.msra.mxu0 %v2268
      %2302 = vmatprep.subr.bf16.mxu0 %v2271
      %2303 = vmatpush1.bf16.msra.mxu0 %v2270
      %2304 = vmatprep.subr.bf16.mxu0 0
      %2305 = vmatpush1.bf16.msra.mxu0 0
      %2306 = vmatprep.subr.bf16.mxu0 0
      %2307 = vmatpush1.bf16.msra.mxu0 0
      %2308 = vmatprep.subr.bf16.mxu0 0
      %2309 = vmatpush1.bf16.msra.mxu0 0
      %2310 = vmatprep.subr.bf16.mxu0 0
      %2311 = vmatpush1.bf16.msra.mxu0 0
      %2312 = vmatprep.subr.bf16.mxu0 0
      %2313 = vmatpush1.bf16.msra.mxu0 0
      %2314 = vmatprep.subr.bf16.mxu0 0
      %2315 = vmatpush1.bf16.msra.mxu0 0
      %2316 = vmatprep.subr.bf16.mxu0 0
      %2317 = vmatpush1.bf16.msra.mxu0 0
      %2318 = vmatprep.subr.bf16.mxu0 0
      %2319 = vmatpush1.bf16.msra.mxu0 0
      %2320 = vmatprep.mubr.bf16.mxu0 0
      %2321 = vmatmul.mubr.bf16.gmra.mrb[0].mxu0 %v2178
      %v2322 = vpop.f32.mrb[0].mxu0
      %v2323 = vadd.f32 %v2201, %v2322
      %v2324 = vpop.f32.mrb[0].mxu0
      %v2325 = vadd.f32 %v2205, %v2324
      %v2326 = vpop.f32.mrb[0].mxu0
      %v2327 = vpop.f32.mrb[0].mxu0
      %2328 = vdwg.mxu0
      %v2329 = vxor.u32 %v2323, 2147483648
      %v2330 = vxor.u32 %v2325, 2147483648
      %v2331 = vmul.f32 %v2329, 1.442695
      %v2332 = vpow.pop %v2331
      %v2333 = vmul.f32 %v2330, 1.442695
      %v2334 = vpow.pop %v2333
      %v2335 = vadd.f32 %v2332, 1.0
      %v2336 = vadd.f32 %v2334, 1.0
      %v2337 = vrcp.pop %v2335
      %v2338 = vmul.f32 1.0, %v2337
      %v2339 = vrcp.pop %v2336
      %v2340 = vmul.f32 1.0, %v2339
      %v2341 = vmul.f32 %v2323, %v2338
      %v2342 = vmul.f32 %v2325, %v2340
      %v2343 = vpack.c.bf16 %v2341, %v2341
      %v2344 = vpack.c.bf16 %v2342, %v2342
      %v2345 = vld [vmem:[%s11] sm:$0xf]
      %v2346 = vld [vmem:[%s11 + $0x4] sm:$0xf]
      %v2347 = vld [vmem:[%s11 + $0x8] sm:$0xf]
      %v2348 = vld [vmem:[%s11 + $0xc] sm:$0xf]
      %v2349 = vld [vmem:[%s11 + $0x10] sm:$0xf]
      %v2350 = vld [vmem:[%s11 + $0x14] sm:$0xf]
      %v2351 = vld [vmem:[%s11 + $0x18] sm:$0xf]
      %v2352 = vld [vmem:[%s11 + $0x1c] sm:$0xf]
      %v2353 = vld [vmem:[%s11 + $0x20] sm:$0xf]
      %v2354 = vld [vmem:[%s11 + $0x24] sm:$0xf]
      %v2355 = vld [vmem:[%s11 + $0x28] sm:$0xf]
      %v2356 = vld [vmem:[%s11 + $0x2c] sm:$0xf]
      %v2357 = vld [vmem:[%s11 + $0x30] sm:$0xf]
      %v2358 = vld [vmem:[%s11 + $0x34] sm:$0xf]
      %v2359 = vld [vmem:[%s11 + $0x38] sm:$0xf]
      %v2360 = vld [vmem:[%s11 + $0x3c] sm:$0xf]
      %v2361 = vld [vmem:[%s11 + $0x40] sm:$0xf]
      %v2362 = vld [vmem:[%s11 + $0x44] sm:$0xf]
      %v2363 = vld [vmem:[%s11 + $0x48] sm:$0xf]
      %v2364 = vld [vmem:[%s11 + $0x4c] sm:$0xf]
      %v2365 = vld [vmem:[%s11 + $0x50] sm:$0xf]
      %v2366 = vld [vmem:[%s11 + $0x54] sm:$0xf]
      %v2367 = vld [vmem:[%s11 + $0x58] sm:$0xf]
      %v2368 = vld [vmem:[%s11 + $0x5c] sm:$0xf]
      %v2369 = vld [vmem:[%s11 + $0x60] sm:$0xf]
      %v2370 = vld [vmem:[%s11 + $0x64] sm:$0xf]
      %v2371 = vld [vmem:[%s11 + $0x68] sm:$0xf]
      %v2372 = vld [vmem:[%s11 + $0x6c] sm:$0xf]
      %v2373 = vld [vmem:[%s11 + $0x70] sm:$0xf]
      %v2374 = vld [vmem:[%s11 + $0x74] sm:$0xf]
      %v2375 = vld [vmem:[%s11 + $0x78] sm:$0xf]
      %v2376 = vld [vmem:[%s11 + $0x7c] sm:$0xf]
      %v2377 = vld [vmem:[%s2 + $0x13] sm:$0x1]
      %v2378 = vlaneseq
      %v2379 = vshrl.u32 %v2378, 7
      %v2380 = vsub.s32 0, %v2379
      %v2381 = vrot.slane %v2377, %v2380
      %v2414 = vunpack.c.l.b16 %v2345
      %v2415 = vunpack.c.l.b16 %v2346
      %v2416 = vunpack.c.l.b16 %v2347
      %v2417 = vunpack.c.l.b16 %v2348
      %v2418 = vunpack.c.l.b16 %v2349
      %v2419 = vunpack.c.l.b16 %v2350
      %v2420 = vunpack.c.l.b16 %v2351
      %v2421 = vunpack.c.l.b16 %v2352
      %v2422 = vunpack.c.l.b16 %v2353
      %v2423 = vunpack.c.l.b16 %v2354
      %v2424 = vunpack.c.l.b16 %v2355
      %v2425 = vunpack.c.l.b16 %v2356
      %v2426 = vunpack.c.l.b16 %v2357
      %v2427 = vunpack.c.l.b16 %v2358
      %v2428 = vunpack.c.l.b16 %v2359
      %v2429 = vunpack.c.l.b16 %v2360
      %v2430 = vunpack.c.l.b16 %v2361
      %v2431 = vunpack.c.l.b16 %v2362
      %v2432 = vunpack.c.l.b16 %v2363
      %v2433 = vunpack.c.l.b16 %v2364
      %v2434 = vunpack.c.l.b16 %v2365
      %v2435 = vunpack.c.l.b16 %v2366
      %v2436 = vunpack.c.l.b16 %v2367
      %v2437 = vunpack.c.l.b16 %v2368
      %v2438 = vunpack.c.l.b16 %v2369
      %v2439 = vunpack.c.l.b16 %v2370
      %v2440 = vunpack.c.l.b16 %v2371
      %v2441 = vunpack.c.l.b16 %v2372
      %v2442 = vunpack.c.l.b16 %v2373
      %v2443 = vunpack.c.l.b16 %v2374
      %v2444 = vunpack.c.l.b16 %v2375
      %v2445 = vunpack.c.l.b16 %v2376
      %v2446 = vpack.c.b16 %v2415, %v2414
      %v2447 = vpack.c.b16 %v2417, %v2416
      %v2448 = vpack.c.b16 %v2419, %v2418
      %v2449 = vpack.c.b16 %v2421, %v2420
      %v2450 = vpack.c.b16 %v2423, %v2422
      %v2451 = vpack.c.b16 %v2425, %v2424
      %v2452 = vpack.c.b16 %v2427, %v2426
      %v2453 = vpack.c.b16 %v2429, %v2428
      %v2454 = vpack.c.b16 %v2431, %v2430
      %v2455 = vpack.c.b16 %v2433, %v2432
      %v2456 = vpack.c.b16 %v2435, %v2434
      %v2457 = vpack.c.b16 %v2437, %v2436
      %v2458 = vpack.c.b16 %v2439, %v2438
      %v2459 = vpack.c.b16 %v2441, %v2440
      %v2460 = vpack.c.b16 %v2443, %v2442
      %v2461 = vpack.c.b16 %v2445, %v2444
      %2478 = vmatprep.subr.bf16.mxu0 0
      %2479 = vmatpush1.bf16.msra.mxu0 %v2446
      %2480 = vmatprep.subr.bf16.mxu0 0
      %2481 = vmatpush1.bf16.msra.mxu0 %v2447
      %2482 = vmatprep.subr.bf16.mxu0 0
      %2483 = vmatpush1.bf16.msra.mxu0 %v2448
      %2484 = vmatprep.subr.bf16.mxu0 0
      %2485 = vmatpush1.bf16.msra.mxu0 %v2449
      %2486 = vmatprep.subr.bf16.mxu0 0
      %2487 = vmatpush1.bf16.msra.mxu0 %v2450
      %2488 = vmatprep.subr.bf16.mxu0 0
      %2489 = vmatpush1.bf16.msra.mxu0 %v2451
      %2490 = vmatprep.subr.bf16.mxu0 0
      %2491 = vmatpush1.bf16.msra.mxu0 %v2452
      %2492 = vmatprep.subr.bf16.mxu0 0
      %2493 = vmatpush1.bf16.msra.mxu0 %v2453
      %2494 = vmatprep.subr.bf16.mxu0 0
      %2495 = vmatpush1.bf16.msra.mxu0 %v2454
      %2496 = vmatprep.subr.bf16.mxu0 0
      %2497 = vmatpush1.bf16.msra.mxu0 %v2455
      %2498 = vmatprep.subr.bf16.mxu0 0
      %2499 = vmatpush1.bf16.msra.mxu0 %v2456
      %2500 = vmatprep.subr.bf16.mxu0 0
      %2501 = vmatpush1.bf16.msra.mxu0 %v2457
      %2502 = vmatprep.subr.bf16.mxu0 0
      %2503 = vmatpush1.bf16.msra.mxu0 %v2458
      %2504 = vmatprep.subr.bf16.mxu0 0
      %2505 = vmatpush1.bf16.msra.mxu0 %v2459
      %2506 = vmatprep.subr.bf16.mxu0 0
      %2507 = vmatpush1.bf16.msra.mxu0 %v2460
      %2508 = vmatprep.subr.bf16.mxu0 0
      %2509 = vmatpush1.bf16.msra.mxu0 %v2461
      %2510 = vmatprep.mubr.bf16.mxu0 %v2344
      %2511 = vmatmul.mubr.bf16.gmra.mrb[0].mxu0 %v2343
      %v2512 = vpop.f32.mrb[0].mxu0
      %v2513 = vadd.f32 %v2381, %v2512
      %v2514 = vpop.f32.mrb[0].mxu0
      %v2515 = vpop.f32.mrb[0].mxu0
      %v2516 = vpop.f32.mrb[0].mxu0
      %2517 = vdwg.mxu0
      %v2518 = vmul.f32 %v2513, 0.5
      %v2519 = vadd.f32 %v2518, %v2154
      %v2520 = vld [vmem:[%s2 + $0x14] sm:$0x1]
      %v2521 = vld [vmem:[%s2 + $0x15] sm:$0x1]
      %2522 = vadd.xlane.f32.xlu0 %v2519
      %v2523 = vpop.xlane.xlu0 %2522
      %v2524 = vmul.f32 %v2523, %v395
      %v2525 = vsub.f32 %v2519, %v2524
      %v2526 = vmul.f32 %v2525, %v2525
      %2527 = vadd.xlane.f32.xlu0 %v2526
      %v2528 = vpop.xlane.xlu0 %2527
      %v2529 = vmul.f32 %v2528, %v395
      %v2530 = vadd.f32 %v2529, 1e-05
      %v2531 = vrsqrt.pop %v2530
      %v2532 = vmul.f32 %v2525, %v2531
      %v2533 = vlaneseq
      %v2534 = vshrl.u32 %v2533, 7
      %v2535 = vsub.s32 0, %v2534
      %v2536 = vrot.slane %v2520, %v2535
      %v2537 = vmul.f32 %v2532, %v2536
      %v2538 = vlaneseq
      %v2539 = vshrl.u32 %v2538, 7
      %v2540 = vsub.s32 0, %v2539
      %v2541 = vrot.slane %v2521, %v2540
      %v2542 = vadd.f32 %v2537, %v2541
      %2543 = vst [vmem:[%s388] sm:$0xff] %v2542
      %p2544 = scmp.lt.s32.totalorder %s29, 1
      %s2545 = scalar_select %p2544, %s29, 1
      %s2546 = smul.addr %s2545, 8
      %s2547 = scalar_lea.vmem %s12, %s2546
      // Predicated region
      $region65: #{fwd.13} parent=63 // pred_check
        %p2548 = pneg %p283
      $region66: #{fwd.13} parent=63 // pred_check_branch
        %2550 = sbr.rel (%p2548) target = $region68
      $region67: #{fwd.13} parent=63 // pred_region
        _
      $region68: #{fwd.13} parent=63 // pred_fallthru
        _
    $region64: #{fwd.13} parent=5 // pred_fallthru
      _
    %p2551 = scmp.le.s32.totalorder 2, %s24
    // Predicated region
    $region69: #{fwd.13} parent=5 // pred_check
      %p2552 = pneg %p2551
    $region70: #{fwd.13} parent=5 // pred_check_branch
      %2554 = sbr.rel (%p2552) target = $region72
    $region71: #{fwd.13} parent=5 // pred_region
      %s2555 = ssub.s32 %s24, 2
      // Predicated region
      $region73: #{fwd.13} parent=71 // pred_check
        %p2556 = pneg %p289
      $region74: #{fwd.13} parent=71 // pred_check_branch
        %2558 = sbr.rel (%p2556) target = $region76
      $region75: #{fwd.13} parent=71 // pred_region
        %p2559 = scmp.lt.s32.totalorder %s30, 1
        %s2560 = scalar_select %p2559, %s30, 1
        %s2561 = smul.addr %s2560, 8
        %s2562 = scalar_lea.vmem %s12, %s2561
      $region76: #{fwd.13} parent=71 // pred_fallthru
        _
    $region72: #{fwd.13} parent=5 // pred_fallthru
      _
  $region6: #{fwd.13} parent=0 // loop_footer
    %s28 = sadd.s32 1, %s24
  $region7: #{fwd.13} parent=0 // loop_footer_branch
    %23 = sbr.rel target = $region3
  $region8: #{fwd.13} parent=0 // loop_exit
    _

</llo_original>
